<compile_context>
chip_gen: v7x
topology: tpu7x:2x2x1
jax: 0.10.0
libtpu: 0.0.40
codegen_flags: <defaults>
</compile_context>

<pallas_src>
import jax
import jax.numpy as jnp
from jax import lax
from jax.experimental import pallas as pl
from jax.experimental.pallas import tpu as pltpu


# ----------------------------------------------------------------------------
# Fused forward kernel builder
# ----------------------------------------------------------------------------
def _build_fused_kernel(B, conv_cfgs, n_fc):
    """conv_cfgs: tuple of (Cin, Cout, KH, KW, H, W) per conv layer (static)."""
    n_conv = len(conv_cfgs)

    def kernel(*refs):
        it = iter(refs)
        x_ref = next(it)
        conv_refs = [(next(it), next(it)) for _ in range(n_conv)]
        fc_refs = [(next(it), next(it)) for _ in range(n_fc)]
        out_w_ref, out_b_ref = next(it), next(it)
        o_ref = next(it)

        # Per-channel activations are kept as VALUES (no VMEM scratch).
        chans = [x_ref[...]]                     # list of (B, H, W) f32
        flat = None

        for li, (Cin, Cout, KH, KW, H, W) in enumerate(conv_cfgs):
            Ho, Wo = H - KH + 1, W - KW + 1
            Hp, Wp = Ho // 2, Wo // 2
            w_ref, b_ref = conv_refs[li]
            last = li == n_conv - 1

            # ---- direct conv on the VPU, ci-outer to cap vreg pressure ----
            # Live set: KW lane-shifted copies of ONE input channel + Cout
            # accumulators (instead of hoisting all Cin*KH*KW slabs).
            accs = [jnp.zeros((B, Ho, Wo), jnp.float32) for _ in range(Cout)]
            for ci in range(Cin):
                xc = chans[ci]                                   # (B, H, W)
                lane_sh = [xc[:, :, dj:dj + Wo] for dj in range(KW)]
                for di in range(KH):
                    for dj in range(KW):
                        slab = lane_sh[dj][:, di:di + Ho, :]     # (B, Ho, Wo)
                        for co in range(Cout):
                            wv = w_ref[((co * Cin + ci) * KH + di) * KW + dj]
                            accs[co] = accs[co] + slab * wv

            # ---- bias + ReLU, row pair-max, even-row pick (per channel) ----
            # Row compaction happens BEFORE the column stage, halving the data
            # entering the column pair-max + selection matmul.
            row_pieces = []
            for co in range(Cout):
                a = jnp.maximum(accs[co] + b_ref[co], 0.0)       # (B, Ho, Wo)
                v = jnp.maximum(a[:, :Ho - 1, :], a[:, 1:Ho, :])  # (B, Ho-1, Wo)
                row_pieces.extend(v[:, 2 * i:2 * i + 1, :] for i in range(Hp))
            vr = (jnp.concatenate(row_pieces, axis=1)
                  if len(row_pieces) > 1 else row_pieces[0])     # (B, Cout*Hp, Wo)

            # ---- column pair-max + even-column compaction ----
            # ONE batched 0/1-selection matmul per LAYER (all channels at
            # once) instead of Cout per-channel dispatches.
            hm = jnp.maximum(vr[:, :, :Wo - 1], vr[:, :, 1:Wo])  # (B, Cout*Hp, Wo-1)
            iw = lax.broadcasted_iota(jnp.int32, (Wo - 1, Wp), 0)
            iq = lax.broadcasted_iota(jnp.int32, (Wo - 1, Wp), 1)
            sel = (iw == 2 * iq).astype(jnp.float32)             # (Wo-1, Wp), 0/1
            sel_b = jnp.broadcast_to(sel, (B, Wo - 1, Wp))
            pooled = jnp.einsum("bhw,bwq->bhq", hm, sel_b,
                                preferred_element_type=jnp.float32)  # (B, Cout*Hp, Wp)

            if last:
                # Flatten in PyTorch (C, H, W) order into a lane-dense slab.
                pieces = [pooled[:, co * Hp + i, :]
                          for co in range(Cout) for i in range(Hp)]
                flat = (jnp.concatenate(pieces, axis=-1)
                        if len(pieces) > 1 else pieces[0])       # (B, Cout*Hp*Wp)
            else:
                # Next layer's input channels: contiguous row slices, no store.
                chans = [pooled[:, co * Hp:(co + 1) * Hp, :] for co in range(Cout)]

        # ---- FC stack (+ ReLU) and output Linear, weights pre-transposed ----
        y = flat
        for w_ref, b_ref in fc_refs:
            y = jnp.dot(y, w_ref[...], preferred_element_type=jnp.float32)
            y = jnp.maximum(y + b_ref[...], 0.0)
        y = jnp.dot(y, out_w_ref[...], preferred_element_type=jnp.float32)
        o_ref[...] = (y + out_b_ref[...]).astype(o_ref.dtype)

    return kernel


# ----------------------------------------------------------------------------
# Parameter preparation (done once) + fused forward wrapper
# ----------------------------------------------------------------------------
def prepare_params(params):
    """One-time host-side prep: FC weights transposed to (in, out), biases as
    (1, N), so the kernel reads everything in its natural layout."""
    prep = {
        "conv": [(w, b) for (w, b) in params["conv"]],
        "fc": [(jnp.transpose(w), b.reshape(1, -1)) for (w, b) in params["fc"]],
    }
    w, b = params["out"]
    prep["out"] = (jnp.transpose(w), b.reshape(1, -1))
    return prep


def popphy_cnn_forward(x, prep):
    """Fused PopPhyCNN inference forward: one pallas_call, VMEM-resident."""
    B, rows, cols = x.shape

    conv_cfgs = []
    H, W, Cin = rows, cols, 1
    for w, _ in prep["conv"]:
        Cout, cin_w, KH, KW = w.shape
        assert cin_w == Cin, (cin_w, Cin)
        Ho, Wo = H - KH + 1, W - KW + 1
        # Guard degenerate shapes: pooling/shifted-slice logic needs >= 2x2.
        assert Ho >= 2 and Wo >= 2, f"conv output too small: ({Ho}, {Wo})"
        conv_cfgs.append((Cin, Cout, KH, KW, H, W))
        H, W, Cin = Ho // 2, Wo // 2, Cout

    n_fc = len(prep["fc"])
    n_feat = Cin * H * W
    if n_fc:
        assert prep["fc"][0][0].shape[0] == n_feat, (prep["fc"][0][0].shape, n_feat)
    n_out = prep["out"][0].shape[1]

    smem = pl.BlockSpec(memory_space=pltpu.MemorySpace.SMEM)
    vmem = pl.BlockSpec(memory_space=pltpu.MemorySpace.VMEM)

    operands, in_specs = [x], [vmem]
    for w, b in prep["conv"]:
        operands += [w.reshape(-1), b]      # flat OIHW taps + bias, scalar (SMEM)
        in_specs += [smem, smem]
    for w, b in prep["fc"]:
        operands += [w, b]
        in_specs += [vmem, vmem]
    operands += [prep["out"][0], prep["out"][1]]
    in_specs += [vmem, vmem]

    # Gridless single invocation: at these sizes one TensorCore is plenty.
    # TODO(synk): add a "parallel" batch grid axis (and mind the 64 MiB VMEM
    # on v7x) once B grows beyond a handful.
    return pl.pallas_call(
        _build_fused_kernel(B, tuple(conv_cfgs), n_fc),
        out_shape=jax.ShapeDtypeStruct((B, n_out), jnp.float32),
        in_specs=in_specs,
        out_specs=vmem,
    )(*operands)


# ----------------------------------------------------------------------------
# Pure-JAX reference (for correctness check)
# ----------------------------------------------------------------------------
def ref_forward(x, params):
    y = x[:, None, :, :]
    for w, b in params["conv"]:
        y = lax.conv_general_dilated(
            y, w, window_strides=(1, 1), padding="VALID",
            dimension_numbers=("NCHW", "OIHW", "NCHW"),
            precision=lax.Precision.HIGHEST,
        ) + b[None, :, None, None]
        y = jnp.maximum(y, 0.0)
        y = lax.reduce_window(y, -jnp.inf, lax.max,
                              (1, 1, 2, 2), (1, 1, 2, 2), "VALID")
    y = y.reshape(y.shape[0], -1)
    for w, b in params["fc"]:
        y = jnp.maximum(jnp.dot(y, w.T, precision="highest") + b, 0.0)
    w, b = params["out"]
    return jnp.dot(y, w.T, precision="highest") + b


# ----------------------------------------------------------------------------
# Deterministic parameter init (shapes follow the PyTorch module __init__)
# ----------------------------------------------------------------------------
def init_params(key, rows, cols, num_kernel, kh, kw, num_fc_nodes,
                num_cnn_layers, num_fc_layers, out_features):
    n_keys = 2 * (num_cnn_layers + num_fc_layers + 1)
    keys = jax.random.split(key, n_keys)
    ki = 0
    params = {"conv": [], "fc": []}
    h, w = rows, cols
    for i in range(num_cnn_layers):
        cin = 1 if i == 0 else num_kernel
        wt = 0.1 * jax.random.normal(keys[ki], (num_kernel, cin, kh, kw), jnp.float32); ki += 1
        bs = 0.1 * jax.random.normal(keys[ki], (num_kernel,), jnp.float32); ki += 1
        params["conv"].append((wt, bs))
        h, w = (h - kh + 1) // 2, (w - kw + 1) // 2
    fc_in = num_kernel * h * w
    for i in range(num_fc_layers):
        fin = fc_in if i == 0 else num_fc_nodes
        wt = 0.1 * jax.random.normal(keys[ki], (num_fc_nodes, fin), jnp.float32); ki += 1
        bs = 0.1 * jax.random.normal(keys[ki], (num_fc_nodes,), jnp.float32); ki += 1
        params["fc"].append((wt, bs))
    wt = 0.1 * jax.random.normal(keys[ki], (out_features, num_fc_nodes), jnp.float32); ki += 1
    bs = 0.1 * jax.random.normal(keys[ki], (out_features,), jnp.float32)
    params["out"] = (wt, bs)
    return params


if __name__ == "__main__":
    # Small, module-consistent config:
    # tree.max_depth+1 = 16 rows, 32 leaf columns.
    B, ROWS, COLS = 2, 16, 32
    NUM_KERNEL, KH, KW = 4, 3, 3
    NUM_FC_NODES, NUM_CNN_LAYERS, NUM_FC_LAYERS = 32, 2, 2
    OUT_FEATURES = 3

    key = jax.random.PRNGKey(0)
    kx, kp = jax.random.split(key)
    x = jax.random.normal(kx, (B, ROWS, COLS), jnp.float32)
    params = init_params(kp, ROWS, COLS, NUM_KERNEL, KH, KW, NUM_FC_NODES,
                         NUM_CNN_LAYERS, NUM_FC_LAYERS, OUT_FEATURES)
    prep = prepare_params(params)

    fwd = jax.jit(popphy_cnn_forward)
    out = jax.block_until_ready(fwd(x, prep))
    assert out.shape == (B, OUT_FEATURES), out.shape

    ref = jax.block_until_ready(ref_forward(x, params))
    assert jnp.allclose(out, ref, rtol=2e-5, atol=2e-5), (
        float(jnp.max(jnp.abs(out - ref))))

    print("KERNEL_OK")
</pallas_src>

<mosaic_0001>
module attributes {stable_mosaic.version = 11 : i64} {
  func.func @kernel(%arg0: memref<2x16x32xf32, #tpu.memory_space<vmem>>, %arg1: memref<36xf32, #tpu.memory_space<smem>>, %arg2: memref<4xf32, #tpu.memory_space<smem>>, %arg3: memref<144xf32, #tpu.memory_space<smem>>, %arg4: memref<4xf32, #tpu.memory_space<smem>>, %arg5: memref<48x32xf32, #tpu.memory_space<vmem>>, %arg6: memref<1x32xf32, #tpu.memory_space<vmem>>, %arg7: memref<32x32xf32, #tpu.memory_space<vmem>>, %arg8: memref<1x32xf32, #tpu.memory_space<vmem>>, %arg9: memref<32x3xf32, #tpu.memory_space<vmem>>, %arg10: memref<1x3xf32, #tpu.memory_space<vmem>>, %arg11: memref<2x3xf32, #tpu.memory_space<vmem>>) attributes {dimension_semantics = [], scalar_prefetch = 0 : i64, scratch_operands = 0 : i64, tpu.core_type = #tpu.core_type<tc>} {
    %c0 = arith.constant 0 : index
    %c0_0 = arith.constant 0 : index
    %c0_1 = arith.constant 0 : index
    %0 = vector.load %arg0[%c0, %c0_0, %c0_1] : memref<2x16x32xf32, #tpu.memory_space<vmem>>, vector<2x16x32xf32>
    %cst = arith.constant 0.000000e+00 : f32
    %1 = vector.broadcast %cst : f32 to vector<2x14x30xf32>
    %cst_2 = arith.constant 0.000000e+00 : f32
    %2 = vector.broadcast %cst_2 : f32 to vector<2x14x30xf32>
    %cst_3 = arith.constant 0.000000e+00 : f32
    %3 = vector.broadcast %cst_3 : f32 to vector<2x14x30xf32>
    %cst_4 = arith.constant 0.000000e+00 : f32
    %4 = vector.broadcast %cst_4 : f32 to vector<2x14x30xf32>
    %5 = vector.extract_strided_slice %0 {offsets = [0, 0, 0], sizes = [2, 16, 30], strides = [1, 1, 1]} : vector<2x16x32xf32> to vector<2x16x30xf32>
    %6 = vector.extract_strided_slice %0 {offsets = [0, 0, 1], sizes = [2, 16, 30], strides = [1, 1, 1]} : vector<2x16x32xf32> to vector<2x16x30xf32>
    %7 = vector.extract_strided_slice %0 {offsets = [0, 0, 2], sizes = [2, 16, 30], strides = [1, 1, 1]} : vector<2x16x32xf32> to vector<2x16x30xf32>
    %8 = vector.extract_strided_slice %5 {offsets = [0, 0, 0], sizes = [2, 14, 30], strides = [1, 1, 1]} : vector<2x16x30xf32> to vector<2x14x30xf32>
    %c0_5 = arith.constant 0 : index
    %9 = memref.load %arg1[%c0_5] : memref<36xf32, #tpu.memory_space<smem>>
    %10 = vector.broadcast %9 : f32 to vector<2x14x30xf32>
    %11 = arith.mulf %8, %10 : vector<2x14x30xf32>
    %12 = arith.addf %1, %11 : vector<2x14x30xf32>
    %c9 = arith.constant 9 : index
    %13 = memref.load %arg1[%c9] : memref<36xf32, #tpu.memory_space<smem>>
    %14 = vector.broadcast %13 : f32 to vector<2x14x30xf32>
    %15 = arith.mulf %8, %14 : vector<2x14x30xf32>
    %16 = arith.addf %2, %15 : vector<2x14x30xf32>
    %c18 = arith.constant 18 : index
    %17 = memref.load %arg1[%c18] : memref<36xf32, #tpu.memory_space<smem>>
    %18 = vector.broadcast %17 : f32 to vector<2x14x30xf32>
    %19 = arith.mulf %8, %18 : vector<2x14x30xf32>
    %20 = arith.addf %3, %19 : vector<2x14x30xf32>
    %c27 = arith.constant 27 : index
    %21 = memref.load %arg1[%c27] : memref<36xf32, #tpu.memory_space<smem>>
    %22 = vector.broadcast %21 : f32 to vector<2x14x30xf32>
    %23 = arith.mulf %8, %22 : vector<2x14x30xf32>
    %24 = arith.addf %4, %23 : vector<2x14x30xf32>
    %25 = vector.extract_strided_slice %6 {offsets = [0, 0, 0], sizes = [2, 14, 30], strides = [1, 1, 1]} : vector<2x16x30xf32> to vector<2x14x30xf32>
    %c1 = arith.constant 1 : index
    %26 = memref.load %arg1[%c1] : memref<36xf32, #tpu.memory_space<smem>>
    %27 = vector.broadcast %26 : f32 to vector<2x14x30xf32>
    %28 = arith.mulf %25, %27 : vector<2x14x30xf32>
    %29 = arith.addf %12, %28 : vector<2x14x30xf32>
    %c10 = arith.constant 10 : index
    %30 = memref.load %arg1[%c10] : memref<36xf32, #tpu.memory_space<smem>>
    %31 = vector.broadcast %30 : f32 to vector<2x14x30xf32>
    %32 = arith.mulf %25, %31 : vector<2x14x30xf32>
    %33 = arith.addf %16, %32 : vector<2x14x30xf32>
    %c19 = arith.constant 19 : index
    %34 = memref.load %arg1[%c19] : memref<36xf32, #tpu.memory_space<smem>>
    %35 = vector.broadcast %34 : f32 to vector<2x14x30xf32>
    %36 = arith.mulf %25, %35 : vector<2x14x30xf32>
    %37 = arith.addf %20, %36 : vector<2x14x30xf32>
    %c28 = arith.constant 28 : index
    %38 = memref.load %arg1[%c28] : memref<36xf32, #tpu.memory_space<smem>>
    %39 = vector.broadcast %38 : f32 to vector<2x14x30xf32>
    %40 = arith.mulf %25, %39 : vector<2x14x30xf32>
    %41 = arith.addf %24, %40 : vector<2x14x30xf32>
    %42 = vector.extract_strided_slice %7 {offsets = [0, 0, 0], sizes = [2, 14, 30], strides = [1, 1, 1]} : vector<2x16x30xf32> to vector<2x14x30xf32>
    %c2 = arith.constant 2 : index
    %43 = memref.load %arg1[%c2] : memref<36xf32, #tpu.memory_space<smem>>
    %44 = vector.broadcast %43 : f32 to vector<2x14x30xf32>
    %45 = arith.mulf %42, %44 : vector<2x14x30xf32>
    %46 = arith.addf %29, %45 : vector<2x14x30xf32>
    %c11 = arith.constant 11 : index
    %47 = memref.load %arg1[%c11] : memref<36xf32, #tpu.memory_space<smem>>
    %48 = vector.broadcast %47 : f32 to vector<2x14x30xf32>
    %49 = arith.mulf %42, %48 : vector<2x14x30xf32>
    %50 = arith.addf %33, %49 : vector<2x14x30xf32>
    %c20 = arith.constant 20 : index
    %51 = memref.load %arg1[%c20] : memref<36xf32, #tpu.memory_space<smem>>
    %52 = vector.broadcast %51 : f32 to vector<2x14x30xf32>
    %53 = arith.mulf %42, %52 : vector<2x14x30xf32>
    %54 = arith.addf %37, %53 : vector<2x14x30xf32>
    %c29 = arith.constant 29 : index
    %55 = memref.load %arg1[%c29] : memref<36xf32, #tpu.memory_space<smem>>
    %56 = vector.broadcast %55 : f32 to vector<2x14x30xf32>
    %57 = arith.mulf %42, %56 : vector<2x14x30xf32>
    %58 = arith.addf %41, %57 : vector<2x14x30xf32>
    %59 = vector.extract_strided_slice %5 {offsets = [0, 1, 0], sizes = [2, 14, 30], strides = [1, 1, 1]} : vector<2x16x30xf32> to vector<2x14x30xf32>
    %c3 = arith.constant 3 : index
    %60 = memref.load %arg1[%c3] : memref<36xf32, #tpu.memory_space<smem>>
    %61 = vector.broadcast %60 : f32 to vector<2x14x30xf32>
    %62 = arith.mulf %59, %61 : vector<2x14x30xf32>
    %63 = arith.addf %46, %62 : vector<2x14x30xf32>
    %c12 = arith.constant 12 : index
    %64 = memref.load %arg1[%c12] : memref<36xf32, #tpu.memory_space<smem>>
    %65 = vector.broadcast %64 : f32 to vector<2x14x30xf32>
    %66 = arith.mulf %59, %65 : vector<2x14x30xf32>
    %67 = arith.addf %50, %66 : vector<2x14x30xf32>
    %c21 = arith.constant 21 : index
    %68 = memref.load %arg1[%c21] : memref<36xf32, #tpu.memory_space<smem>>
    %69 = vector.broadcast %68 : f32 to vector<2x14x30xf32>
    %70 = arith.mulf %59, %69 : vector<2x14x30xf32>
    %71 = arith.addf %54, %70 : vector<2x14x30xf32>
    %c30 = arith.constant 30 : index
    %72 = memref.load %arg1[%c30] : memref<36xf32, #tpu.memory_space<smem>>
    %73 = vector.broadcast %72 : f32 to vector<2x14x30xf32>
    %74 = arith.mulf %59, %73 : vector<2x14x30xf32>
    %75 = arith.addf %58, %74 : vector<2x14x30xf32>
    %76 = vector.extract_strided_slice %6 {offsets = [0, 1, 0], sizes = [2, 14, 30], strides = [1, 1, 1]} : vector<2x16x30xf32> to vector<2x14x30xf32>
    %c4 = arith.constant 4 : index
    %77 = memref.load %arg1[%c4] : memref<36xf32, #tpu.memory_space<smem>>
    %78 = vector.broadcast %77 : f32 to vector<2x14x30xf32>
    %79 = arith.mulf %76, %78 : vector<2x14x30xf32>
    %80 = arith.addf %63, %79 : vector<2x14x30xf32>
    %c13 = arith.constant 13 : index
    %81 = memref.load %arg1[%c13] : memref<36xf32, #tpu.memory_space<smem>>
    %82 = vector.broadcast %81 : f32 to vector<2x14x30xf32>
    %83 = arith.mulf %76, %82 : vector<2x14x30xf32>
    %84 = arith.addf %67, %83 : vector<2x14x30xf32>
    %c22 = arith.constant 22 : index
    %85 = memref.load %arg1[%c22] : memref<36xf32, #tpu.memory_space<smem>>
    %86 = vector.broadcast %85 : f32 to vector<2x14x30xf32>
    %87 = arith.mulf %76, %86 : vector<2x14x30xf32>
    %88 = arith.addf %71, %87 : vector<2x14x30xf32>
    %c31 = arith.constant 31 : index
    %89 = memref.load %arg1[%c31] : memref<36xf32, #tpu.memory_space<smem>>
    %90 = vector.broadcast %89 : f32 to vector<2x14x30xf32>
    %91 = arith.mulf %76, %90 : vector<2x14x30xf32>
    %92 = arith.addf %75, %91 : vector<2x14x30xf32>
    %93 = vector.extract_strided_slice %7 {offsets = [0, 1, 0], sizes = [2, 14, 30], strides = [1, 1, 1]} : vector<2x16x30xf32> to vector<2x14x30xf32>
    %c5 = arith.constant 5 : index
    %94 = memref.load %arg1[%c5] : memref<36xf32, #tpu.memory_space<smem>>
    %95 = vector.broadcast %94 : f32 to vector<2x14x30xf32>
    %96 = arith.mulf %93, %95 : vector<2x14x30xf32>
    %97 = arith.addf %80, %96 : vector<2x14x30xf32>
    %c14 = arith.constant 14 : index
    %98 = memref.load %arg1[%c14] : memref<36xf32, #tpu.memory_space<smem>>
    %99 = vector.broadcast %98 : f32 to vector<2x14x30xf32>
    %100 = arith.mulf %93, %99 : vector<2x14x30xf32>
    %101 = arith.addf %84, %100 : vector<2x14x30xf32>
    %c23 = arith.constant 23 : index
    %102 = memref.load %arg1[%c23] : memref<36xf32, #tpu.memory_space<smem>>
    %103 = vector.broadcast %102 : f32 to vector<2x14x30xf32>
    %104 = arith.mulf %93, %103 : vector<2x14x30xf32>
    %105 = arith.addf %88, %104 : vector<2x14x30xf32>
    %c32 = arith.constant 32 : index
    %106 = memref.load %arg1[%c32] : memref<36xf32, #tpu.memory_space<smem>>
    %107 = vector.broadcast %106 : f32 to vector<2x14x30xf32>
    %108 = arith.mulf %93, %107 : vector<2x14x30xf32>
    %109 = arith.addf %92, %108 : vector<2x14x30xf32>
    %110 = vector.extract_strided_slice %5 {offsets = [0, 2, 0], sizes = [2, 14, 30], strides = [1, 1, 1]} : vector<2x16x30xf32> to vector<2x14x30xf32>
    %c6 = arith.constant 6 : index
    %111 = memref.load %arg1[%c6] : memref<36xf32, #tpu.memory_space<smem>>
    %112 = vector.broadcast %111 : f32 to vector<2x14x30xf32>
    %113 = arith.mulf %110, %112 : vector<2x14x30xf32>
    %114 = arith.addf %97, %113 : vector<2x14x30xf32>
    %c15 = arith.constant 15 : index
    %115 = memref.load %arg1[%c15] : memref<36xf32, #tpu.memory_space<smem>>
    %116 = vector.broadcast %115 : f32 to vector<2x14x30xf32>
    %117 = arith.mulf %110, %116 : vector<2x14x30xf32>
    %118 = arith.addf %101, %117 : vector<2x14x30xf32>
    %c24 = arith.constant 24 : index
    %119 = memref.load %arg1[%c24] : memref<36xf32, #tpu.memory_space<smem>>
    %120 = vector.broadcast %119 : f32 to vector<2x14x30xf32>
    %121 = arith.mulf %110, %120 : vector<2x14x30xf32>
    %122 = arith.addf %105, %121 : vector<2x14x30xf32>
    %c33 = arith.constant 33 : index
    %123 = memref.load %arg1[%c33] : memref<36xf32, #tpu.memory_space<smem>>
    %124 = vector.broadcast %123 : f32 to vector<2x14x30xf32>
    %125 = arith.mulf %110, %124 : vector<2x14x30xf32>
    %126 = arith.addf %109, %125 : vector<2x14x30xf32>
    %127 = vector.extract_strided_slice %6 {offsets = [0, 2, 0], sizes = [2, 14, 30], strides = [1, 1, 1]} : vector<2x16x30xf32> to vector<2x14x30xf32>
    %c7 = arith.constant 7 : index
    %128 = memref.load %arg1[%c7] : memref<36xf32, #tpu.memory_space<smem>>
    %129 = vector.broadcast %128 : f32 to vector<2x14x30xf32>
    %130 = arith.mulf %127, %129 : vector<2x14x30xf32>
    %131 = arith.addf %114, %130 : vector<2x14x30xf32>
    %c16 = arith.constant 16 : index
    %132 = memref.load %arg1[%c16] : memref<36xf32, #tpu.memory_space<smem>>
    %133 = vector.broadcast %132 : f32 to vector<2x14x30xf32>
    %134 = arith.mulf %127, %133 : vector<2x14x30xf32>
    %135 = arith.addf %118, %134 : vector<2x14x30xf32>
    %c25 = arith.constant 25 : index
    %136 = memref.load %arg1[%c25] : memref<36xf32, #tpu.memory_space<smem>>
    %137 = vector.broadcast %136 : f32 to vector<2x14x30xf32>
    %138 = arith.mulf %127, %137 : vector<2x14x30xf32>
    %139 = arith.addf %122, %138 : vector<2x14x30xf32>
    %c34 = arith.constant 34 : index
    %140 = memref.load %arg1[%c34] : memref<36xf32, #tpu.memory_space<smem>>
    %141 = vector.broadcast %140 : f32 to vector<2x14x30xf32>
    %142 = arith.mulf %127, %141 : vector<2x14x30xf32>
    %143 = arith.addf %126, %142 : vector<2x14x30xf32>
    %144 = vector.extract_strided_slice %7 {offsets = [0, 2, 0], sizes = [2, 14, 30], strides = [1, 1, 1]} : vector<2x16x30xf32> to vector<2x14x30xf32>
    %c8 = arith.constant 8 : index
    %145 = memref.load %arg1[%c8] : memref<36xf32, #tpu.memory_space<smem>>
    %146 = vector.broadcast %145 : f32 to vector<2x14x30xf32>
    %147 = arith.mulf %144, %146 : vector<2x14x30xf32>
    %148 = arith.addf %131, %147 : vector<2x14x30xf32>
    %c17 = arith.constant 17 : index
    %149 = memref.load %arg1[%c17] : memref<36xf32, #tpu.memory_space<smem>>
    %150 = vector.broadcast %149 : f32 to vector<2x14x30xf32>
    %151 = arith.mulf %144, %150 : vector<2x14x30xf32>
    %152 = arith.addf %135, %151 : vector<2x14x30xf32>
    %c26 = arith.constant 26 : index
    %153 = memref.load %arg1[%c26] : memref<36xf32, #tpu.memory_space<smem>>
    %154 = vector.broadcast %153 : f32 to vector<2x14x30xf32>
    %155 = arith.mulf %144, %154 : vector<2x14x30xf32>
    %156 = arith.addf %139, %155 : vector<2x14x30xf32>
    %c35 = arith.constant 35 : index
    %157 = memref.load %arg1[%c35] : memref<36xf32, #tpu.memory_space<smem>>
    %158 = vector.broadcast %157 : f32 to vector<2x14x30xf32>
    %159 = arith.mulf %144, %158 : vector<2x14x30xf32>
    %160 = arith.addf %143, %159 : vector<2x14x30xf32>
    %c0_6 = arith.constant 0 : index
    %161 = memref.load %arg2[%c0_6] : memref<4xf32, #tpu.memory_space<smem>>
    %162 = vector.broadcast %161 : f32 to vector<2x14x30xf32>
    %163 = arith.addf %148, %162 : vector<2x14x30xf32>
    %cst_7 = arith.constant 0.000000e+00 : f32
    %164 = vector.broadcast %cst_7 : f32 to vector<2x14x30xf32>
    %165 = arith.maximumf %163, %164 : vector<2x14x30xf32>
    %166 = vector.extract_strided_slice %165 {offsets = [0, 0, 0], sizes = [2, 13, 30], strides = [1, 1, 1]} : vector<2x14x30xf32> to vector<2x13x30xf32>
    %167 = vector.extract_strided_slice %165 {offsets = [0, 1, 0], sizes = [2, 13, 30], strides = [1, 1, 1]} : vector<2x14x30xf32> to vector<2x13x30xf32>
    %168 = arith.maximumf %166, %167 : vector<2x13x30xf32>
    %169 = vector.extract_strided_slice %168 {offsets = [0, 0, 0], sizes = [2, 1, 30], strides = [1, 1, 1]} : vector<2x13x30xf32> to vector<2x1x30xf32>
    %170 = vector.extract_strided_slice %168 {offsets = [0, 2, 0], sizes = [2, 1, 30], strides = [1, 1, 1]} : vector<2x13x30xf32> to vector<2x1x30xf32>
    %171 = vector.extract_strided_slice %168 {offsets = [0, 4, 0], sizes = [2, 1, 30], strides = [1, 1, 1]} : vector<2x13x30xf32> to vector<2x1x30xf32>
    %172 = vector.extract_strided_slice %168 {offsets = [0, 6, 0], sizes = [2, 1, 30], strides = [1, 1, 1]} : vector<2x13x30xf32> to vector<2x1x30xf32>
    %173 = vector.extract_strided_slice %168 {offsets = [0, 8, 0], sizes = [2, 1, 30], strides = [1, 1, 1]} : vector<2x13x30xf32> to vector<2x1x30xf32>
    %174 = vector.extract_strided_slice %168 {offsets = [0, 10, 0], sizes = [2, 1, 30], strides = [1, 1, 1]} : vector<2x13x30xf32> to vector<2x1x30xf32>
    %175 = vector.extract_strided_slice %168 {offsets = [0, 12, 0], sizes = [2, 1, 30], strides = [1, 1, 1]} : vector<2x13x30xf32> to vector<2x1x30xf32>
    %c1_8 = arith.constant 1 : index
    %176 = memref.load %arg2[%c1_8] : memref<4xf32, #tpu.memory_space<smem>>
    %177 = vector.broadcast %176 : f32 to vector<2x14x30xf32>
    %178 = arith.addf %152, %177 : vector<2x14x30xf32>
    %cst_9 = arith.constant 0.000000e+00 : f32
    %179 = vector.broadcast %cst_9 : f32 to vector<2x14x30xf32>
    %180 = arith.maximumf %178, %179 : vector<2x14x30xf32>
    %181 = vector.extract_strided_slice %180 {offsets = [0, 0, 0], sizes = [2, 13, 30], strides = [1, 1, 1]} : vector<2x14x30xf32> to vector<2x13x30xf32>
    %182 = vector.extract_strided_slice %180 {offsets = [0, 1, 0], sizes = [2, 13, 30], strides = [1, 1, 1]} : vector<2x14x30xf32> to vector<2x13x30xf32>
    %183 = arith.maximumf %181, %182 : vector<2x13x30xf32>
    %184 = vector.extract_strided_slice %183 {offsets = [0, 0, 0], sizes = [2, 1, 30], strides = [1, 1, 1]} : vector<2x13x30xf32> to vector<2x1x30xf32>
    %185 = vector.extract_strided_slice %183 {offsets = [0, 2, 0], sizes = [2, 1, 30], strides = [1, 1, 1]} : vector<2x13x30xf32> to vector<2x1x30xf32>
    %186 = vector.extract_strided_slice %183 {offsets = [0, 4, 0], sizes = [2, 1, 30], strides = [1, 1, 1]} : vector<2x13x30xf32> to vector<2x1x30xf32>
    %187 = vector.extract_strided_slice %183 {offsets = [0, 6, 0], sizes = [2, 1, 30], strides = [1, 1, 1]} : vector<2x13x30xf32> to vector<2x1x30xf32>
    %188 = vector.extract_strided_slice %183 {offsets = [0, 8, 0], sizes = [2, 1, 30], strides = [1, 1, 1]} : vector<2x13x30xf32> to vector<2x1x30xf32>
    %189 = vector.extract_strided_slice %183 {offsets = [0, 10, 0], sizes = [2, 1, 30], strides = [1, 1, 1]} : vector<2x13x30xf32> to vector<2x1x30xf32>
    %190 = vector.extract_strided_slice %183 {offsets = [0, 12, 0], sizes = [2, 1, 30], strides = [1, 1, 1]} : vector<2x13x30xf32> to vector<2x1x30xf32>
    %c2_10 = arith.constant 2 : index
    %191 = memref.load %arg2[%c2_10] : memref<4xf32, #tpu.memory_space<smem>>
    %192 = vector.broadcast %191 : f32 to vector<2x14x30xf32>
    %193 = arith.addf %156, %192 : vector<2x14x30xf32>
    %cst_11 = arith.constant 0.000000e+00 : f32
    %194 = vector.broadcast %cst_11 : f32 to vector<2x14x30xf32>
    %195 = arith.maximumf %193, %194 : vector<2x14x30xf32>
    %196 = vector.extract_strided_slice %195 {offsets = [0, 0, 0], sizes = [2, 13, 30], strides = [1, 1, 1]} : vector<2x14x30xf32> to vector<2x13x30xf32>
    %197 = vector.extract_strided_slice %195 {offsets = [0, 1, 0], sizes = [2, 13, 30], strides = [1, 1, 1]} : vector<2x14x30xf32> to vector<2x13x30xf32>
    %198 = arith.maximumf %196, %197 : vector<2x13x30xf32>
    %199 = vector.extract_strided_slice %198 {offsets = [0, 0, 0], sizes = [2, 1, 30], strides = [1, 1, 1]} : vector<2x13x30xf32> to vector<2x1x30xf32>
    %200 = vector.extract_strided_slice %198 {offsets = [0, 2, 0], sizes = [2, 1, 30], strides = [1, 1, 1]} : vector<2x13x30xf32> to vector<2x1x30xf32>
    %201 = vector.extract_strided_slice %198 {offsets = [0, 4, 0], sizes = [2, 1, 30], strides = [1, 1, 1]} : vector<2x13x30xf32> to vector<2x1x30xf32>
    %202 = vector.extract_strided_slice %198 {offsets = [0, 6, 0], sizes = [2, 1, 30], strides = [1, 1, 1]} : vector<2x13x30xf32> to vector<2x1x30xf32>
    %203 = vector.extract_strided_slice %198 {offsets = [0, 8, 0], sizes = [2, 1, 30], strides = [1, 1, 1]} : vector<2x13x30xf32> to vector<2x1x30xf32>
    %204 = vector.extract_strided_slice %198 {offsets = [0, 10, 0], sizes = [2, 1, 30], strides = [1, 1, 1]} : vector<2x13x30xf32> to vector<2x1x30xf32>
    %205 = vector.extract_strided_slice %198 {offsets = [0, 12, 0], sizes = [2, 1, 30], strides = [1, 1, 1]} : vector<2x13x30xf32> to vector<2x1x30xf32>
    %c3_12 = arith.constant 3 : index
    %206 = memref.load %arg2[%c3_12] : memref<4xf32, #tpu.memory_space<smem>>
    %207 = vector.broadcast %206 : f32 to vector<2x14x30xf32>
    %208 = arith.addf %160, %207 : vector<2x14x30xf32>
    %cst_13 = arith.constant 0.000000e+00 : f32
    %209 = vector.broadcast %cst_13 : f32 to vector<2x14x30xf32>
    %210 = arith.maximumf %208, %209 : vector<2x14x30xf32>
    %211 = vector.extract_strided_slice %210 {offsets = [0, 0, 0], sizes = [2, 13, 30], strides = [1, 1, 1]} : vector<2x14x30xf32> to vector<2x13x30xf32>
    %212 = vector.extract_strided_slice %210 {offsets = [0, 1, 0], sizes = [2, 13, 30], strides = [1, 1, 1]} : vector<2x14x30xf32> to vector<2x13x30xf32>
    %213 = arith.maximumf %211, %212 : vector<2x13x30xf32>
    %214 = vector.extract_strided_slice %213 {offsets = [0, 0, 0], sizes = [2, 1, 30], strides = [1, 1, 1]} : vector<2x13x30xf32> to vector<2x1x30xf32>
    %215 = vector.extract_strided_slice %213 {offsets = [0, 2, 0], sizes = [2, 1, 30], strides = [1, 1, 1]} : vector<2x13x30xf32> to vector<2x1x30xf32>
    %216 = vector.extract_strided_slice %213 {offsets = [0, 4, 0], sizes = [2, 1, 30], strides = [1, 1, 1]} : vector<2x13x30xf32> to vector<2x1x30xf32>
    %217 = vector.extract_strided_slice %213 {offsets = [0, 6, 0], sizes = [2, 1, 30], strides = [1, 1, 1]} : vector<2x13x30xf32> to vector<2x1x30xf32>
    %218 = vector.extract_strided_slice %213 {offsets = [0, 8, 0], sizes = [2, 1, 30], strides = [1, 1, 1]} : vector<2x13x30xf32> to vector<2x1x30xf32>
    %219 = vector.extract_strided_slice %213 {offsets = [0, 10, 0], sizes = [2, 1, 30], strides = [1, 1, 1]} : vector<2x13x30xf32> to vector<2x1x30xf32>
    %220 = vector.extract_strided_slice %213 {offsets = [0, 12, 0], sizes = [2, 1, 30], strides = [1, 1, 1]} : vector<2x13x30xf32> to vector<2x1x30xf32>
    %221 = tpu.concatenate %169, %170, %171, %172, %173, %174, %175, %184, %185, %186, %187, %188, %189, %190, %199, %200 in 1 : vector<2x1x30xf32>, vector<2x1x30xf32>, vector<2x1x30xf32>, vector<2x1x30xf32>, vector<2x1x30xf32>, vector<2x1x30xf32>, vector<2x1x30xf32>, vector<2x1x30xf32>, vector<2x1x30xf32>, vector<2x1x30xf32>, vector<2x1x30xf32>, vector<2x1x30xf32>, vector<2x1x30xf32>, vector<2x1x30xf32>, vector<2x1x30xf32>, vector<2x1x30xf32> -> vector<2x16x30xf32>
    %222 = tpu.concatenate %201, %202, %203, %204, %205, %214, %215, %216, %217, %218, %219, %220 in 1 : vector<2x1x30xf32>, vector<2x1x30xf32>, vector<2x1x30xf32>, vector<2x1x30xf32>, vector<2x1x30xf32>, vector<2x1x30xf32>, vector<2x1x30xf32>, vector<2x1x30xf32>, vector<2x1x30xf32>, vector<2x1x30xf32>, vector<2x1x30xf32>, vector<2x1x30xf32> -> vector<2x12x30xf32>
    %223 = tpu.concatenate %221, %222 in 1 : vector<2x16x30xf32>, vector<2x12x30xf32> -> vector<2x28x30xf32>
    %224 = vector.extract_strided_slice %223 {offsets = [0, 0, 0], sizes = [2, 28, 29], strides = [1, 1, 1]} : vector<2x28x30xf32> to vector<2x28x29xf32>
    %225 = vector.extract_strided_slice %223 {offsets = [0, 0, 1], sizes = [2, 28, 29], strides = [1, 1, 1]} : vector<2x28x30xf32> to vector<2x28x29xf32>
    %226 = arith.maximumf %224, %225 : vector<2x28x29xf32>
    %227 = tpu.iota {dimensions = array<i32: 0>} : vector<29x15xi32>
    %228 = tpu.iota {dimensions = array<i32: 1>} : vector<29x15xi32>
    %c2_i32 = arith.constant 2 : i32
    %229 = vector.broadcast %c2_i32 : i32 to vector<29x15xi32>
    %230 = arith.muli %229, %228 : vector<29x15xi32>
    %231 = arith.cmpi eq, %227, %230 : vector<29x15xi32>
    %232 = arith.extui %231 : vector<29x15xi1> to vector<29x15xi32>
    %233 = arith.sitofp %232 : vector<29x15xi32> to vector<29x15xf32>
    %234 = vector.shape_cast %233 : vector<29x15xf32> to vector<1x29x15xf32>
    %235 = vector.broadcast %234 : vector<1x29x15xf32> to vector<2x29x15xf32>
    "tpu.trace_start"() <{level = 10 : i32, message = "bhw,bwq->bhq"}> : () -> ()
    %cst_14 = arith.constant dense<0.000000e+00> : vector<2x28x15xf32>
    %236 = tpu.matmul %226, %235, %cst_14 {dimension_numbers = #tpu.dot_dimension_numbers<[2], [1], [1], [2], [0, 0, 0, 1, 1, 2], [0], [0]>} : vector<2x28x29xf32>, vector<2x29x15xf32>, vector<2x28x15xf32> -> vector<2x28x15xf32>
    "tpu.trace_stop"() : () -> ()
    %237 = vector.extract_strided_slice %236 {offsets = [0, 0, 0], sizes = [2, 7, 15], strides = [1, 1, 1]} : vector<2x28x15xf32> to vector<2x7x15xf32>
    %238 = vector.extract_strided_slice %236 {offsets = [0, 7, 0], sizes = [2, 7, 15], strides = [1, 1, 1]} : vector<2x28x15xf32> to vector<2x7x15xf32>
    %239 = vector.extract_strided_slice %236 {offsets = [0, 14, 0], sizes = [2, 7, 15], strides = [1, 1, 1]} : vector<2x28x15xf32> to vector<2x7x15xf32>
    %240 = vector.extract_strided_slice %236 {offsets = [0, 21, 0], sizes = [2, 7, 15], strides = [1, 1, 1]} : vector<2x28x15xf32> to vector<2x7x15xf32>
    %cst_15 = arith.constant 0.000000e+00 : f32
    %241 = vector.broadcast %cst_15 : f32 to vector<2x5x13xf32>
    %cst_16 = arith.constant 0.000000e+00 : f32
    %242 = vector.broadcast %cst_16 : f32 to vector<2x5x13xf32>
    %cst_17 = arith.constant 0.000000e+00 : f32
    %243 = vector.broadcast %cst_17 : f32 to vector<2x5x13xf32>
    %cst_18 = arith.constant 0.000000e+00 : f32
    %244 = vector.broadcast %cst_18 : f32 to vector<2x5x13xf32>
    %245 = vector.extract_strided_slice %237 {offsets = [0, 0, 0], sizes = [2, 7, 13], strides = [1, 1, 1]} : vector<2x7x15xf32> to vector<2x7x13xf32>
    %246 = vector.extract_strided_slice %237 {offsets = [0, 0, 1], sizes = [2, 7, 13], strides = [1, 1, 1]} : vector<2x7x15xf32> to vector<2x7x13xf32>
    %247 = vector.extract_strided_slice %237 {offsets = [0, 0, 2], sizes = [2, 7, 13], strides = [1, 1, 1]} : vector<2x7x15xf32> to vector<2x7x13xf32>
    %248 = vector.extract_strided_slice %245 {offsets = [0, 0, 0], sizes = [2, 5, 13], strides = [1, 1, 1]} : vector<2x7x13xf32> to vector<2x5x13xf32>
    %c0_19 = arith.constant 0 : index
    %249 = memref.load %arg3[%c0_19] : memref<144xf32, #tpu.memory_space<smem>>
    %250 = vector.broadcast %249 : f32 to vector<2x5x13xf32>
    %251 = arith.mulf %248, %250 : vector<2x5x13xf32>
    %252 = arith.addf %241, %251 : vector<2x5x13xf32>
    %c36 = arith.constant 36 : index
    %253 = memref.load %arg3[%c36] : memref<144xf32, #tpu.memory_space<smem>>
    %254 = vector.broadcast %253 : f32 to vector<2x5x13xf32>
    %255 = arith.mulf %248, %254 : vector<2x5x13xf32>
    %256 = arith.addf %242, %255 : vector<2x5x13xf32>
    %c72 = arith.constant 72 : index
    %257 = memref.load %arg3[%c72] : memref<144xf32, #tpu.memory_space<smem>>
    %258 = vector.broadcast %257 : f32 to vector<2x5x13xf32>
    %259 = arith.mulf %248, %258 : vector<2x5x13xf32>
    %260 = arith.addf %243, %259 : vector<2x5x13xf32>
    %c108 = arith.constant 108 : index
    %261 = memref.load %arg3[%c108] : memref<144xf32, #tpu.memory_space<smem>>
    %262 = vector.broadcast %261 : f32 to vector<2x5x13xf32>
    %263 = arith.mulf %248, %262 : vector<2x5x13xf32>
    %264 = arith.addf %244, %263 : vector<2x5x13xf32>
    %265 = vector.extract_strided_slice %246 {offsets = [0, 0, 0], sizes = [2, 5, 13], strides = [1, 1, 1]} : vector<2x7x13xf32> to vector<2x5x13xf32>
    %c1_20 = arith.constant 1 : index
    %266 = memref.load %arg3[%c1_20] : memref<144xf32, #tpu.memory_space<smem>>
    %267 = vector.broadcast %266 : f32 to vector<2x5x13xf32>
    %268 = arith.mulf %265, %267 : vector<2x5x13xf32>
    %269 = arith.addf %252, %268 : vector<2x5x13xf32>
    %c37 = arith.constant 37 : index
    %270 = memref.load %arg3[%c37] : memref<144xf32, #tpu.memory_space<smem>>
    %271 = vector.broadcast %270 : f32 to vector<2x5x13xf32>
    %272 = arith.mulf %265, %271 : vector<2x5x13xf32>
    %273 = arith.addf %256, %272 : vector<2x5x13xf32>
    %c73 = arith.constant 73 : index
    %274 = memref.load %arg3[%c73] : memref<144xf32, #tpu.memory_space<smem>>
    %275 = vector.broadcast %274 : f32 to vector<2x5x13xf32>
    %276 = arith.mulf %265, %275 : vector<2x5x13xf32>
    %277 = arith.addf %260, %276 : vector<2x5x13xf32>
    %c109 = arith.constant 109 : index
    %278 = memref.load %arg3[%c109] : memref<144xf32, #tpu.memory_space<smem>>
    %279 = vector.broadcast %278 : f32 to vector<2x5x13xf32>
    %280 = arith.mulf %265, %279 : vector<2x5x13xf32>
    %281 = arith.addf %264, %280 : vector<2x5x13xf32>
    %282 = vector.extract_strided_slice %247 {offsets = [0, 0, 0], sizes = [2, 5, 13], strides = [1, 1, 1]} : vector<2x7x13xf32> to vector<2x5x13xf32>
    %c2_21 = arith.constant 2 : index
    %283 = memref.load %arg3[%c2_21] : memref<144xf32, #tpu.memory_space<smem>>
    %284 = vector.broadcast %283 : f32 to vector<2x5x13xf32>
    %285 = arith.mulf %282, %284 : vector<2x5x13xf32>
    %286 = arith.addf %269, %285 : vector<2x5x13xf32>
    %c38 = arith.constant 38 : index
    %287 = memref.load %arg3[%c38] : memref<144xf32, #tpu.memory_space<smem>>
    %288 = vector.broadcast %287 : f32 to vector<2x5x13xf32>
    %289 = arith.mulf %282, %288 : vector<2x5x13xf32>
    %290 = arith.addf %273, %289 : vector<2x5x13xf32>
    %c74 = arith.constant 74 : index
    %291 = memref.load %arg3[%c74] : memref<144xf32, #tpu.memory_space<smem>>
    %292 = vector.broadcast %291 : f32 to vector<2x5x13xf32>
    %293 = arith.mulf %282, %292 : vector<2x5x13xf32>
    %294 = arith.addf %277, %293 : vector<2x5x13xf32>
    %c110 = arith.constant 110 : index
    %295 = memref.load %arg3[%c110] : memref<144xf32, #tpu.memory_space<smem>>
    %296 = vector.broadcast %295 : f32 to vector<2x5x13xf32>
    %297 = arith.mulf %282, %296 : vector<2x5x13xf32>
    %298 = arith.addf %281, %297 : vector<2x5x13xf32>
    %299 = vector.extract_strided_slice %245 {offsets = [0, 1, 0], sizes = [2, 5, 13], strides = [1, 1, 1]} : vector<2x7x13xf32> to vector<2x5x13xf32>
    %c3_22 = arith.constant 3 : index
    %300 = memref.load %arg3[%c3_22] : memref<144xf32, #tpu.memory_space<smem>>
    %301 = vector.broadcast %300 : f32 to vector<2x5x13xf32>
    %302 = arith.mulf %299, %301 : vector<2x5x13xf32>
    %303 = arith.addf %286, %302 : vector<2x5x13xf32>
    %c39 = arith.constant 39 : index
    %304 = memref.load %arg3[%c39] : memref<144xf32, #tpu.memory_space<smem>>
    %305 = vector.broadcast %304 : f32 to vector<2x5x13xf32>
    %306 = arith.mulf %299, %305 : vector<2x5x13xf32>
    %307 = arith.addf %290, %306 : vector<2x5x13xf32>
    %c75 = arith.constant 75 : index
    %308 = memref.load %arg3[%c75] : memref<144xf32, #tpu.memory_space<smem>>
    %309 = vector.broadcast %308 : f32 to vector<2x5x13xf32>
    %310 = arith.mulf %299, %309 : vector<2x5x13xf32>
    %311 = arith.addf %294, %310 : vector<2x5x13xf32>
    %c111 = arith.constant 111 : index
    %312 = memref.load %arg3[%c111] : memref<144xf32, #tpu.memory_space<smem>>
    %313 = vector.broadcast %312 : f32 to vector<2x5x13xf32>
    %314 = arith.mulf %299, %313 : vector<2x5x13xf32>
    %315 = arith.addf %298, %314 : vector<2x5x13xf32>
    %316 = vector.extract_strided_slice %246 {offsets = [0, 1, 0], sizes = [2, 5, 13], strides = [1, 1, 1]} : vector<2x7x13xf32> to vector<2x5x13xf32>
    %c4_23 = arith.constant 4 : index
    %317 = memref.load %arg3[%c4_23] : memref<144xf32, #tpu.memory_space<smem>>
    %318 = vector.broadcast %317 : f32 to vector<2x5x13xf32>
    %319 = arith.mulf %316, %318 : vector<2x5x13xf32>
    %320 = arith.addf %303, %319 : vector<2x5x13xf32>
    %c40 = arith.constant 40 : index
    %321 = memref.load %arg3[%c40] : memref<144xf32, #tpu.memory_space<smem>>
    %322 = vector.broadcast %321 : f32 to vector<2x5x13xf32>
    %323 = arith.mulf %316, %322 : vector<2x5x13xf32>
    %324 = arith.addf %307, %323 : vector<2x5x13xf32>
    %c76 = arith.constant 76 : index
    %325 = memref.load %arg3[%c76] : memref<144xf32, #tpu.memory_space<smem>>
    %326 = vector.broadcast %325 : f32 to vector<2x5x13xf32>
    %327 = arith.mulf %316, %326 : vector<2x5x13xf32>
    %328 = arith.addf %311, %327 : vector<2x5x13xf32>
    %c112 = arith.constant 112 : index
    %329 = memref.load %arg3[%c112] : memref<144xf32, #tpu.memory_space<smem>>
    %330 = vector.broadcast %329 : f32 to vector<2x5x13xf32>
    %331 = arith.mulf %316, %330 : vector<2x5x13xf32>
    %332 = arith.addf %315, %331 : vector<2x5x13xf32>
    %333 = vector.extract_strided_slice %247 {offsets = [0, 1, 0], sizes = [2, 5, 13], strides = [1, 1, 1]} : vector<2x7x13xf32> to vector<2x5x13xf32>
    %c5_24 = arith.constant 5 : index
    %334 = memref.load %arg3[%c5_24] : memref<144xf32, #tpu.memory_space<smem>>
    %335 = vector.broadcast %334 : f32 to vector<2x5x13xf32>
    %336 = arith.mulf %333, %335 : vector<2x5x13xf32>
    %337 = arith.addf %320, %336 : vector<2x5x13xf32>
    %c41 = arith.constant 41 : index
    %338 = memref.load %arg3[%c41] : memref<144xf32, #tpu.memory_space<smem>>
    %339 = vector.broadcast %338 : f32 to vector<2x5x13xf32>
    %340 = arith.mulf %333, %339 : vector<2x5x13xf32>
    %341 = arith.addf %324, %340 : vector<2x5x13xf32>
    %c77 = arith.constant 77 : index
    %342 = memref.load %arg3[%c77] : memref<144xf32, #tpu.memory_space<smem>>
    %343 = vector.broadcast %342 : f32 to vector<2x5x13xf32>
    %344 = arith.mulf %333, %343 : vector<2x5x13xf32>
    %345 = arith.addf %328, %344 : vector<2x5x13xf32>
    %c113 = arith.constant 113 : index
    %346 = memref.load %arg3[%c113] : memref<144xf32, #tpu.memory_space<smem>>
    %347 = vector.broadcast %346 : f32 to vector<2x5x13xf32>
    %348 = arith.mulf %333, %347 : vector<2x5x13xf32>
    %349 = arith.addf %332, %348 : vector<2x5x13xf32>
    %350 = vector.extract_strided_slice %245 {offsets = [0, 2, 0], sizes = [2, 5, 13], strides = [1, 1, 1]} : vector<2x7x13xf32> to vector<2x5x13xf32>
    %c6_25 = arith.constant 6 : index
    %351 = memref.load %arg3[%c6_25] : memref<144xf32, #tpu.memory_space<smem>>
    %352 = vector.broadcast %351 : f32 to vector<2x5x13xf32>
    %353 = arith.mulf %350, %352 : vector<2x5x13xf32>
    %354 = arith.addf %337, %353 : vector<2x5x13xf32>
    %c42 = arith.constant 42 : index
    %355 = memref.load %arg3[%c42] : memref<144xf32, #tpu.memory_space<smem>>
    %356 = vector.broadcast %355 : f32 to vector<2x5x13xf32>
    %357 = arith.mulf %350, %356 : vector<2x5x13xf32>
    %358 = arith.addf %341, %357 : vector<2x5x13xf32>
    %c78 = arith.constant 78 : index
    %359 = memref.load %arg3[%c78] : memref<144xf32, #tpu.memory_space<smem>>
    %360 = vector.broadcast %359 : f32 to vector<2x5x13xf32>
    %361 = arith.mulf %350, %360 : vector<2x5x13xf32>
    %362 = arith.addf %345, %361 : vector<2x5x13xf32>
    %c114 = arith.constant 114 : index
    %363 = memref.load %arg3[%c114] : memref<144xf32, #tpu.memory_space<smem>>
    %364 = vector.broadcast %363 : f32 to vector<2x5x13xf32>
    %365 = arith.mulf %350, %364 : vector<2x5x13xf32>
    %366 = arith.addf %349, %365 : vector<2x5x13xf32>
    %367 = vector.extract_strided_slice %246 {offsets = [0, 2, 0], sizes = [2, 5, 13], strides = [1, 1, 1]} : vector<2x7x13xf32> to vector<2x5x13xf32>
    %c7_26 = arith.constant 7 : index
    %368 = memref.load %arg3[%c7_26] : memref<144xf32, #tpu.memory_space<smem>>
    %369 = vector.broadcast %368 : f32 to vector<2x5x13xf32>
    %370 = arith.mulf %367, %369 : vector<2x5x13xf32>
    %371 = arith.addf %354, %370 : vector<2x5x13xf32>
    %c43 = arith.constant 43 : index
    %372 = memref.load %arg3[%c43] : memref<144xf32, #tpu.memory_space<smem>>
    %373 = vector.broadcast %372 : f32 to vector<2x5x13xf32>
    %374 = arith.mulf %367, %373 : vector<2x5x13xf32>
    %375 = arith.addf %358, %374 : vector<2x5x13xf32>
    %c79 = arith.constant 79 : index
    %376 = memref.load %arg3[%c79] : memref<144xf32, #tpu.memory_space<smem>>
    %377 = vector.broadcast %376 : f32 to vector<2x5x13xf32>
    %378 = arith.mulf %367, %377 : vector<2x5x13xf32>
    %379 = arith.addf %362, %378 : vector<2x5x13xf32>
    %c115 = arith.constant 115 : index
    %380 = memref.load %arg3[%c115] : memref<144xf32, #tpu.memory_space<smem>>
    %381 = vector.broadcast %380 : f32 to vector<2x5x13xf32>
    %382 = arith.mulf %367, %381 : vector<2x5x13xf32>
    %383 = arith.addf %366, %382 : vector<2x5x13xf32>
    %384 = vector.extract_strided_slice %247 {offsets = [0, 2, 0], sizes = [2, 5, 13], strides = [1, 1, 1]} : vector<2x7x13xf32> to vector<2x5x13xf32>
    %c8_27 = arith.constant 8 : index
    %385 = memref.load %arg3[%c8_27] : memref<144xf32, #tpu.memory_space<smem>>
    %386 = vector.broadcast %385 : f32 to vector<2x5x13xf32>
    %387 = arith.mulf %384, %386 : vector<2x5x13xf32>
    %388 = arith.addf %371, %387 : vector<2x5x13xf32>
    %c44 = arith.constant 44 : index
    %389 = memref.load %arg3[%c44] : memref<144xf32, #tpu.memory_space<smem>>
    %390 = vector.broadcast %389 : f32 to vector<2x5x13xf32>
    %391 = arith.mulf %384, %390 : vector<2x5x13xf32>
    %392 = arith.addf %375, %391 : vector<2x5x13xf32>
    %c80 = arith.constant 80 : index
    %393 = memref.load %arg3[%c80] : memref<144xf32, #tpu.memory_space<smem>>
    %394 = vector.broadcast %393 : f32 to vector<2x5x13xf32>
    %395 = arith.mulf %384, %394 : vector<2x5x13xf32>
    %396 = arith.addf %379, %395 : vector<2x5x13xf32>
    %c116 = arith.constant 116 : index
    %397 = memref.load %arg3[%c116] : memref<144xf32, #tpu.memory_space<smem>>
    %398 = vector.broadcast %397 : f32 to vector<2x5x13xf32>
    %399 = arith.mulf %384, %398 : vector<2x5x13xf32>
    %400 = arith.addf %383, %399 : vector<2x5x13xf32>
    %401 = vector.extract_strided_slice %238 {offsets = [0, 0, 0], sizes = [2, 7, 13], strides = [1, 1, 1]} : vector<2x7x15xf32> to vector<2x7x13xf32>
    %402 = vector.extract_strided_slice %238 {offsets = [0, 0, 1], sizes = [2, 7, 13], strides = [1, 1, 1]} : vector<2x7x15xf32> to vector<2x7x13xf32>
    %403 = vector.extract_strided_slice %238 {offsets = [0, 0, 2], sizes = [2, 7, 13], strides = [1, 1, 1]} : vector<2x7x15xf32> to vector<2x7x13xf32>
    %404 = vector.extract_strided_slice %401 {offsets = [0, 0, 0], sizes = [2, 5, 13], strides = [1, 1, 1]} : vector<2x7x13xf32> to vector<2x5x13xf32>
    %c9_28 = arith.constant 9 : index
    %405 = memref.load %arg3[%c9_28] : memref<144xf32, #tpu.memory_space<smem>>
    %406 = vector.broadcast %405 : f32 to vector<2x5x13xf32>
    %407 = arith.mulf %404, %406 : vector<2x5x13xf32>
    %408 = arith.addf %388, %407 : vector<2x5x13xf32>
    %c45 = arith.constant 45 : index
    %409 = memref.load %arg3[%c45] : memref<144xf32, #tpu.memory_space<smem>>
    %410 = vector.broadcast %409 : f32 to vector<2x5x13xf32>
    %411 = arith.mulf %404, %410 : vector<2x5x13xf32>
    %412 = arith.addf %392, %411 : vector<2x5x13xf32>
    %c81 = arith.constant 81 : index
    %413 = memref.load %arg3[%c81] : memref<144xf32, #tpu.memory_space<smem>>
    %414 = vector.broadcast %413 : f32 to vector<2x5x13xf32>
    %415 = arith.mulf %404, %414 : vector<2x5x13xf32>
    %416 = arith.addf %396, %415 : vector<2x5x13xf32>
    %c117 = arith.constant 117 : index
    %417 = memref.load %arg3[%c117] : memref<144xf32, #tpu.memory_space<smem>>
    %418 = vector.broadcast %417 : f32 to vector<2x5x13xf32>
    %419 = arith.mulf %404, %418 : vector<2x5x13xf32>
    %420 = arith.addf %400, %419 : vector<2x5x13xf32>
    %421 = vector.extract_strided_slice %402 {offsets = [0, 0, 0], sizes = [2, 5, 13], strides = [1, 1, 1]} : vector<2x7x13xf32> to vector<2x5x13xf32>
    %c10_29 = arith.constant 10 : index
    %422 = memref.load %arg3[%c10_29] : memref<144xf32, #tpu.memory_space<smem>>
    %423 = vector.broadcast %422 : f32 to vector<2x5x13xf32>
    %424 = arith.mulf %421, %423 : vector<2x5x13xf32>
    %425 = arith.addf %408, %424 : vector<2x5x13xf32>
    %c46 = arith.constant 46 : index
    %426 = memref.load %arg3[%c46] : memref<144xf32, #tpu.memory_space<smem>>
    %427 = vector.broadcast %426 : f32 to vector<2x5x13xf32>
    %428 = arith.mulf %421, %427 : vector<2x5x13xf32>
    %429 = arith.addf %412, %428 : vector<2x5x13xf32>
    %c82 = arith.constant 82 : index
    %430 = memref.load %arg3[%c82] : memref<144xf32, #tpu.memory_space<smem>>
    %431 = vector.broadcast %430 : f32 to vector<2x5x13xf32>
    %432 = arith.mulf %421, %431 : vector<2x5x13xf32>
    %433 = arith.addf %416, %432 : vector<2x5x13xf32>
    %c118 = arith.constant 118 : index
    %434 = memref.load %arg3[%c118] : memref<144xf32, #tpu.memory_space<smem>>
    %435 = vector.broadcast %434 : f32 to vector<2x5x13xf32>
    %436 = arith.mulf %421, %435 : vector<2x5x13xf32>
    %437 = arith.addf %420, %436 : vector<2x5x13xf32>
    %438 = vector.extract_strided_slice %403 {offsets = [0, 0, 0], sizes = [2, 5, 13], strides = [1, 1, 1]} : vector<2x7x13xf32> to vector<2x5x13xf32>
    %c11_30 = arith.constant 11 : index
    %439 = memref.load %arg3[%c11_30] : memref<144xf32, #tpu.memory_space<smem>>
    %440 = vector.broadcast %439 : f32 to vector<2x5x13xf32>
    %441 = arith.mulf %438, %440 : vector<2x5x13xf32>
    %442 = arith.addf %425, %441 : vector<2x5x13xf32>
    %c47 = arith.constant 47 : index
    %443 = memref.load %arg3[%c47] : memref<144xf32, #tpu.memory_space<smem>>
    %444 = vector.broadcast %443 : f32 to vector<2x5x13xf32>
    %445 = arith.mulf %438, %444 : vector<2x5x13xf32>
    %446 = arith.addf %429, %445 : vector<2x5x13xf32>
    %c83 = arith.constant 83 : index
    %447 = memref.load %arg3[%c83] : memref<144xf32, #tpu.memory_space<smem>>
    %448 = vector.broadcast %447 : f32 to vector<2x5x13xf32>
    %449 = arith.mulf %438, %448 : vector<2x5x13xf32>
    %450 = arith.addf %433, %449 : vector<2x5x13xf32>
    %c119 = arith.constant 119 : index
    %451 = memref.load %arg3[%c119] : memref<144xf32, #tpu.memory_space<smem>>
    %452 = vector.broadcast %451 : f32 to vector<2x5x13xf32>
    %453 = arith.mulf %438, %452 : vector<2x5x13xf32>
    %454 = arith.addf %437, %453 : vector<2x5x13xf32>
    %455 = vector.extract_strided_slice %401 {offsets = [0, 1, 0], sizes = [2, 5, 13], strides = [1, 1, 1]} : vector<2x7x13xf32> to vector<2x5x13xf32>
    %c12_31 = arith.constant 12 : index
    %456 = memref.load %arg3[%c12_31] : memref<144xf32, #tpu.memory_space<smem>>
    %457 = vector.broadcast %456 : f32 to vector<2x5x13xf32>
    %458 = arith.mulf %455, %457 : vector<2x5x13xf32>
    %459 = arith.addf %442, %458 : vector<2x5x13xf32>
    %c48 = arith.constant 48 : index
    %460 = memref.load %arg3[%c48] : memref<144xf32, #tpu.memory_space<smem>>
    %461 = vector.broadcast %460 : f32 to vector<2x5x13xf32>
    %462 = arith.mulf %455, %461 : vector<2x5x13xf32>
    %463 = arith.addf %446, %462 : vector<2x5x13xf32>
    %c84 = arith.constant 84 : index
    %464 = memref.load %arg3[%c84] : memref<144xf32, #tpu.memory_space<smem>>
    %465 = vector.broadcast %464 : f32 to vector<2x5x13xf32>
    %466 = arith.mulf %455, %465 : vector<2x5x13xf32>
    %467 = arith.addf %450, %466 : vector<2x5x13xf32>
    %c120 = arith.constant 120 : index
    %468 = memref.load %arg3[%c120] : memref<144xf32, #tpu.memory_space<smem>>
    %469 = vector.broadcast %468 : f32 to vector<2x5x13xf32>
    %470 = arith.mulf %455, %469 : vector<2x5x13xf32>
    %471 = arith.addf %454, %470 : vector<2x5x13xf32>
    %472 = vector.extract_strided_slice %402 {offsets = [0, 1, 0], sizes = [2, 5, 13], strides = [1, 1, 1]} : vector<2x7x13xf32> to vector<2x5x13xf32>
    %c13_32 = arith.constant 13 : index
    %473 = memref.load %arg3[%c13_32] : memref<144xf32, #tpu.memory_space<smem>>
    %474 = vector.broadcast %473 : f32 to vector<2x5x13xf32>
    %475 = arith.mulf %472, %474 : vector<2x5x13xf32>
    %476 = arith.addf %459, %475 : vector<2x5x13xf32>
    %c49 = arith.constant 49 : index
    %477 = memref.load %arg3[%c49] : memref<144xf32, #tpu.memory_space<smem>>
    %478 = vector.broadcast %477 : f32 to vector<2x5x13xf32>
    %479 = arith.mulf %472, %478 : vector<2x5x13xf32>
    %480 = arith.addf %463, %479 : vector<2x5x13xf32>
    %c85 = arith.constant 85 : index
    %481 = memref.load %arg3[%c85] : memref<144xf32, #tpu.memory_space<smem>>
    %482 = vector.broadcast %481 : f32 to vector<2x5x13xf32>
    %483 = arith.mulf %472, %482 : vector<2x5x13xf32>
    %484 = arith.addf %467, %483 : vector<2x5x13xf32>
    %c121 = arith.constant 121 : index
    %485 = memref.load %arg3[%c121] : memref<144xf32, #tpu.memory_space<smem>>
    %486 = vector.broadcast %485 : f32 to vector<2x5x13xf32>
    %487 = arith.mulf %472, %486 : vector<2x5x13xf32>
    %488 = arith.addf %471, %487 : vector<2x5x13xf32>
    %489 = vector.extract_strided_slice %403 {offsets = [0, 1, 0], sizes = [2, 5, 13], strides = [1, 1, 1]} : vector<2x7x13xf32> to vector<2x5x13xf32>
    %c14_33 = arith.constant 14 : index
    %490 = memref.load %arg3[%c14_33] : memref<144xf32, #tpu.memory_space<smem>>
    %491 = vector.broadcast %490 : f32 to vector<2x5x13xf32>
    %492 = arith.mulf %489, %491 : vector<2x5x13xf32>
    %493 = arith.addf %476, %492 : vector<2x5x13xf32>
    %c50 = arith.constant 50 : index
    %494 = memref.load %arg3[%c50] : memref<144xf32, #tpu.memory_space<smem>>
    %495 = vector.broadcast %494 : f32 to vector<2x5x13xf32>
    %496 = arith.mulf %489, %495 : vector<2x5x13xf32>
    %497 = arith.addf %480, %496 : vector<2x5x13xf32>
    %c86 = arith.constant 86 : index
    %498 = memref.load %arg3[%c86] : memref<144xf32, #tpu.memory_space<smem>>
    %499 = vector.broadcast %498 : f32 to vector<2x5x13xf32>
    %500 = arith.mulf %489, %499 : vector<2x5x13xf32>
    %501 = arith.addf %484, %500 : vector<2x5x13xf32>
    %c122 = arith.constant 122 : index
    %502 = memref.load %arg3[%c122] : memref<144xf32, #tpu.memory_space<smem>>
    %503 = vector.broadcast %502 : f32 to vector<2x5x13xf32>
    %504 = arith.mulf %489, %503 : vector<2x5x13xf32>
    %505 = arith.addf %488, %504 : vector<2x5x13xf32>
    %506 = vector.extract_strided_slice %401 {offsets = [0, 2, 0], sizes = [2, 5, 13], strides = [1, 1, 1]} : vector<2x7x13xf32> to vector<2x5x13xf32>
    %c15_34 = arith.constant 15 : index
    %507 = memref.load %arg3[%c15_34] : memref<144xf32, #tpu.memory_space<smem>>
    %508 = vector.broadcast %507 : f32 to vector<2x5x13xf32>
    %509 = arith.mulf %506, %508 : vector<2x5x13xf32>
    %510 = arith.addf %493, %509 : vector<2x5x13xf32>
    %c51 = arith.constant 51 : index
    %511 = memref.load %arg3[%c51] : memref<144xf32, #tpu.memory_space<smem>>
    %512 = vector.broadcast %511 : f32 to vector<2x5x13xf32>
    %513 = arith.mulf %506, %512 : vector<2x5x13xf32>
    %514 = arith.addf %497, %513 : vector<2x5x13xf32>
    %c87 = arith.constant 87 : index
    %515 = memref.load %arg3[%c87] : memref<144xf32, #tpu.memory_space<smem>>
    %516 = vector.broadcast %515 : f32 to vector<2x5x13xf32>
    %517 = arith.mulf %506, %516 : vector<2x5x13xf32>
    %518 = arith.addf %501, %517 : vector<2x5x13xf32>
    %c123 = arith.constant 123 : index
    %519 = memref.load %arg3[%c123] : memref<144xf32, #tpu.memory_space<smem>>
    %520 = vector.broadcast %519 : f32 to vector<2x5x13xf32>
    %521 = arith.mulf %506, %520 : vector<2x5x13xf32>
    %522 = arith.addf %505, %521 : vector<2x5x13xf32>
    %523 = vector.extract_strided_slice %402 {offsets = [0, 2, 0], sizes = [2, 5, 13], strides = [1, 1, 1]} : vector<2x7x13xf32> to vector<2x5x13xf32>
    %c16_35 = arith.constant 16 : index
    %524 = memref.load %arg3[%c16_35] : memref<144xf32, #tpu.memory_space<smem>>
    %525 = vector.broadcast %524 : f32 to vector<2x5x13xf32>
    %526 = arith.mulf %523, %525 : vector<2x5x13xf32>
    %527 = arith.addf %510, %526 : vector<2x5x13xf32>
    %c52 = arith.constant 52 : index
    %528 = memref.load %arg3[%c52] : memref<144xf32, #tpu.memory_space<smem>>
    %529 = vector.broadcast %528 : f32 to vector<2x5x13xf32>
    %530 = arith.mulf %523, %529 : vector<2x5x13xf32>
    %531 = arith.addf %514, %530 : vector<2x5x13xf32>
    %c88 = arith.constant 88 : index
    %532 = memref.load %arg3[%c88] : memref<144xf32, #tpu.memory_space<smem>>
    %533 = vector.broadcast %532 : f32 to vector<2x5x13xf32>
    %534 = arith.mulf %523, %533 : vector<2x5x13xf32>
    %535 = arith.addf %518, %534 : vector<2x5x13xf32>
    %c124 = arith.constant 124 : index
    %536 = memref.load %arg3[%c124] : memref<144xf32, #tpu.memory_space<smem>>
    %537 = vector.broadcast %536 : f32 to vector<2x5x13xf32>
    %538 = arith.mulf %523, %537 : vector<2x5x13xf32>
    %539 = arith.addf %522, %538 : vector<2x5x13xf32>
    %540 = vector.extract_strided_slice %403 {offsets = [0, 2, 0], sizes = [2, 5, 13], strides = [1, 1, 1]} : vector<2x7x13xf32> to vector<2x5x13xf32>
    %c17_36 = arith.constant 17 : index
    %541 = memref.load %arg3[%c17_36] : memref<144xf32, #tpu.memory_space<smem>>
    %542 = vector.broadcast %541 : f32 to vector<2x5x13xf32>
    %543 = arith.mulf %540, %542 : vector<2x5x13xf32>
    %544 = arith.addf %527, %543 : vector<2x5x13xf32>
    %c53 = arith.constant 53 : index
    %545 = memref.load %arg3[%c53] : memref<144xf32, #tpu.memory_space<smem>>
    %546 = vector.broadcast %545 : f32 to vector<2x5x13xf32>
    %547 = arith.mulf %540, %546 : vector<2x5x13xf32>
    %548 = arith.addf %531, %547 : vector<2x5x13xf32>
    %c89 = arith.constant 89 : index
    %549 = memref.load %arg3[%c89] : memref<144xf32, #tpu.memory_space<smem>>
    %550 = vector.broadcast %549 : f32 to vector<2x5x13xf32>
    %551 = arith.mulf %540, %550 : vector<2x5x13xf32>
    %552 = arith.addf %535, %551 : vector<2x5x13xf32>
    %c125 = arith.constant 125 : index
    %553 = memref.load %arg3[%c125] : memref<144xf32, #tpu.memory_space<smem>>
    %554 = vector.broadcast %553 : f32 to vector<2x5x13xf32>
    %555 = arith.mulf %540, %554 : vector<2x5x13xf32>
    %556 = arith.addf %539, %555 : vector<2x5x13xf32>
    %557 = vector.extract_strided_slice %239 {offsets = [0, 0, 0], sizes = [2, 7, 13], strides = [1, 1, 1]} : vector<2x7x15xf32> to vector<2x7x13xf32>
    %558 = vector.extract_strided_slice %239 {offsets = [0, 0, 1], sizes = [2, 7, 13], strides = [1, 1, 1]} : vector<2x7x15xf32> to vector<2x7x13xf32>
    %559 = vector.extract_strided_slice %239 {offsets = [0, 0, 2], sizes = [2, 7, 13], strides = [1, 1, 1]} : vector<2x7x15xf32> to vector<2x7x13xf32>
    %560 = vector.extract_strided_slice %557 {offsets = [0, 0, 0], sizes = [2, 5, 13], strides = [1, 1, 1]} : vector<2x7x13xf32> to vector<2x5x13xf32>
    %c18_37 = arith.constant 18 : index
    %561 = memref.load %arg3[%c18_37] : memref<144xf32, #tpu.memory_space<smem>>
    %562 = vector.broadcast %561 : f32 to vector<2x5x13xf32>
    %563 = arith.mulf %560, %562 : vector<2x5x13xf32>
    %564 = arith.addf %544, %563 : vector<2x5x13xf32>
    %c54 = arith.constant 54 : index
    %565 = memref.load %arg3[%c54] : memref<144xf32, #tpu.memory_space<smem>>
    %566 = vector.broadcast %565 : f32 to vector<2x5x13xf32>
    %567 = arith.mulf %560, %566 : vector<2x5x13xf32>
    %568 = arith.addf %548, %567 : vector<2x5x13xf32>
    %c90 = arith.constant 90 : index
    %569 = memref.load %arg3[%c90] : memref<144xf32, #tpu.memory_space<smem>>
    %570 = vector.broadcast %569 : f32 to vector<2x5x13xf32>
    %571 = arith.mulf %560, %570 : vector<2x5x13xf32>
    %572 = arith.addf %552, %571 : vector<2x5x13xf32>
    %c126 = arith.constant 126 : index
    %573 = memref.load %arg3[%c126] : memref<144xf32, #tpu.memory_space<smem>>
    %574 = vector.broadcast %573 : f32 to vector<2x5x13xf32>
    %575 = arith.mulf %560, %574 : vector<2x5x13xf32>
    %576 = arith.addf %556, %575 : vector<2x5x13xf32>
    %577 = vector.extract_strided_slice %558 {offsets = [0, 0, 0], sizes = [2, 5, 13], strides = [1, 1, 1]} : vector<2x7x13xf32> to vector<2x5x13xf32>
    %c19_38 = arith.constant 19 : index
    %578 = memref.load %arg3[%c19_38] : memref<144xf32, #tpu.memory_space<smem>>
    %579 = vector.broadcast %578 : f32 to vector<2x5x13xf32>
    %580 = arith.mulf %577, %579 : vector<2x5x13xf32>
    %581 = arith.addf %564, %580 : vector<2x5x13xf32>
    %c55 = arith.constant 55 : index
    %582 = memref.load %arg3[%c55] : memref<144xf32, #tpu.memory_space<smem>>
    %583 = vector.broadcast %582 : f32 to vector<2x5x13xf32>
    %584 = arith.mulf %577, %583 : vector<2x5x13xf32>
    %585 = arith.addf %568, %584 : vector<2x5x13xf32>
    %c91 = arith.constant 91 : index
    %586 = memref.load %arg3[%c91] : memref<144xf32, #tpu.memory_space<smem>>
    %587 = vector.broadcast %586 : f32 to vector<2x5x13xf32>
    %588 = arith.mulf %577, %587 : vector<2x5x13xf32>
    %589 = arith.addf %572, %588 : vector<2x5x13xf32>
    %c127 = arith.constant 127 : index
    %590 = memref.load %arg3[%c127] : memref<144xf32, #tpu.memory_space<smem>>
    %591 = vector.broadcast %590 : f32 to vector<2x5x13xf32>
    %592 = arith.mulf %577, %591 : vector<2x5x13xf32>
    %593 = arith.addf %576, %592 : vector<2x5x13xf32>
    %594 = vector.extract_strided_slice %559 {offsets = [0, 0, 0], sizes = [2, 5, 13], strides = [1, 1, 1]} : vector<2x7x13xf32> to vector<2x5x13xf32>
    %c20_39 = arith.constant 20 : index
    %595 = memref.load %arg3[%c20_39] : memref<144xf32, #tpu.memory_space<smem>>
    %596 = vector.broadcast %595 : f32 to vector<2x5x13xf32>
    %597 = arith.mulf %594, %596 : vector<2x5x13xf32>
    %598 = arith.addf %581, %597 : vector<2x5x13xf32>
    %c56 = arith.constant 56 : index
    %599 = memref.load %arg3[%c56] : memref<144xf32, #tpu.memory_space<smem>>
    %600 = vector.broadcast %599 : f32 to vector<2x5x13xf32>
    %601 = arith.mulf %594, %600 : vector<2x5x13xf32>
    %602 = arith.addf %585, %601 : vector<2x5x13xf32>
    %c92 = arith.constant 92 : index
    %603 = memref.load %arg3[%c92] : memref<144xf32, #tpu.memory_space<smem>>
    %604 = vector.broadcast %603 : f32 to vector<2x5x13xf32>
    %605 = arith.mulf %594, %604 : vector<2x5x13xf32>
    %606 = arith.addf %589, %605 : vector<2x5x13xf32>
    %c128 = arith.constant 128 : index
    %607 = memref.load %arg3[%c128] : memref<144xf32, #tpu.memory_space<smem>>
    %608 = vector.broadcast %607 : f32 to vector<2x5x13xf32>
    %609 = arith.mulf %594, %608 : vector<2x5x13xf32>
    %610 = arith.addf %593, %609 : vector<2x5x13xf32>
    %611 = vector.extract_strided_slice %557 {offsets = [0, 1, 0], sizes = [2, 5, 13], strides = [1, 1, 1]} : vector<2x7x13xf32> to vector<2x5x13xf32>
    %c21_40 = arith.constant 21 : index
    %612 = memref.load %arg3[%c21_40] : memref<144xf32, #tpu.memory_space<smem>>
    %613 = vector.broadcast %612 : f32 to vector<2x5x13xf32>
    %614 = arith.mulf %611, %613 : vector<2x5x13xf32>
    %615 = arith.addf %598, %614 : vector<2x5x13xf32>
    %c57 = arith.constant 57 : index
    %616 = memref.load %arg3[%c57] : memref<144xf32, #tpu.memory_space<smem>>
    %617 = vector.broadcast %616 : f32 to vector<2x5x13xf32>
    %618 = arith.mulf %611, %617 : vector<2x5x13xf32>
    %619 = arith.addf %602, %618 : vector<2x5x13xf32>
    %c93 = arith.constant 93 : index
    %620 = memref.load %arg3[%c93] : memref<144xf32, #tpu.memory_space<smem>>
    %621 = vector.broadcast %620 : f32 to vector<2x5x13xf32>
    %622 = arith.mulf %611, %621 : vector<2x5x13xf32>
    %623 = arith.addf %606, %622 : vector<2x5x13xf32>
    %c129 = arith.constant 129 : index
    %624 = memref.load %arg3[%c129] : memref<144xf32, #tpu.memory_space<smem>>
    %625 = vector.broadcast %624 : f32 to vector<2x5x13xf32>
    %626 = arith.mulf %611, %625 : vector<2x5x13xf32>
    %627 = arith.addf %610, %626 : vector<2x5x13xf32>
    %628 = vector.extract_strided_slice %558 {offsets = [0, 1, 0], sizes = [2, 5, 13], strides = [1, 1, 1]} : vector<2x7x13xf32> to vector<2x5x13xf32>
    %c22_41 = arith.constant 22 : index
    %629 = memref.load %arg3[%c22_41] : memref<144xf32, #tpu.memory_space<smem>>
    %630 = vector.broadcast %629 : f32 to vector<2x5x13xf32>
    %631 = arith.mulf %628, %630 : vector<2x5x13xf32>
    %632 = arith.addf %615, %631 : vector<2x5x13xf32>
    %c58 = arith.constant 58 : index
    %633 = memref.load %arg3[%c58] : memref<144xf32, #tpu.memory_space<smem>>
    %634 = vector.broadcast %633 : f32 to vector<2x5x13xf32>
    %635 = arith.mulf %628, %634 : vector<2x5x13xf32>
    %636 = arith.addf %619, %635 : vector<2x5x13xf32>
    %c94 = arith.constant 94 : index
    %637 = memref.load %arg3[%c94] : memref<144xf32, #tpu.memory_space<smem>>
    %638 = vector.broadcast %637 : f32 to vector<2x5x13xf32>
    %639 = arith.mulf %628, %638 : vector<2x5x13xf32>
    %640 = arith.addf %623, %639 : vector<2x5x13xf32>
    %c130 = arith.constant 130 : index
    %641 = memref.load %arg3[%c130] : memref<144xf32, #tpu.memory_space<smem>>
    %642 = vector.broadcast %641 : f32 to vector<2x5x13xf32>
    %643 = arith.mulf %628, %642 : vector<2x5x13xf32>
    %644 = arith.addf %627, %643 : vector<2x5x13xf32>
    %645 = vector.extract_strided_slice %559 {offsets = [0, 1, 0], sizes = [2, 5, 13], strides = [1, 1, 1]} : vector<2x7x13xf32> to vector<2x5x13xf32>
    %c23_42 = arith.constant 23 : index
    %646 = memref.load %arg3[%c23_42] : memref<144xf32, #tpu.memory_space<smem>>
    %647 = vector.broadcast %646 : f32 to vector<2x5x13xf32>
    %648 = arith.mulf %645, %647 : vector<2x5x13xf32>
    %649 = arith.addf %632, %648 : vector<2x5x13xf32>
    %c59 = arith.constant 59 : index
    %650 = memref.load %arg3[%c59] : memref<144xf32, #tpu.memory_space<smem>>
    %651 = vector.broadcast %650 : f32 to vector<2x5x13xf32>
    %652 = arith.mulf %645, %651 : vector<2x5x13xf32>
    %653 = arith.addf %636, %652 : vector<2x5x13xf32>
    %c95 = arith.constant 95 : index
    %654 = memref.load %arg3[%c95] : memref<144xf32, #tpu.memory_space<smem>>
    %655 = vector.broadcast %654 : f32 to vector<2x5x13xf32>
    %656 = arith.mulf %645, %655 : vector<2x5x13xf32>
    %657 = arith.addf %640, %656 : vector<2x5x13xf32>
    %c131 = arith.constant 131 : index
    %658 = memref.load %arg3[%c131] : memref<144xf32, #tpu.memory_space<smem>>
    %659 = vector.broadcast %658 : f32 to vector<2x5x13xf32>
    %660 = arith.mulf %645, %659 : vector<2x5x13xf32>
    %661 = arith.addf %644, %660 : vector<2x5x13xf32>
    %662 = vector.extract_strided_slice %557 {offsets = [0, 2, 0], sizes = [2, 5, 13], strides = [1, 1, 1]} : vector<2x7x13xf32> to vector<2x5x13xf32>
    %c24_43 = arith.constant 24 : index
    %663 = memref.load %arg3[%c24_43] : memref<144xf32, #tpu.memory_space<smem>>
    %664 = vector.broadcast %663 : f32 to vector<2x5x13xf32>
    %665 = arith.mulf %662, %664 : vector<2x5x13xf32>
    %666 = arith.addf %649, %665 : vector<2x5x13xf32>
    %c60 = arith.constant 60 : index
    %667 = memref.load %arg3[%c60] : memref<144xf32, #tpu.memory_space<smem>>
    %668 = vector.broadcast %667 : f32 to vector<2x5x13xf32>
    %669 = arith.mulf %662, %668 : vector<2x5x13xf32>
    %670 = arith.addf %653, %669 : vector<2x5x13xf32>
    %c96 = arith.constant 96 : index
    %671 = memref.load %arg3[%c96] : memref<144xf32, #tpu.memory_space<smem>>
    %672 = vector.broadcast %671 : f32 to vector<2x5x13xf32>
    %673 = arith.mulf %662, %672 : vector<2x5x13xf32>
    %674 = arith.addf %657, %673 : vector<2x5x13xf32>
    %c132 = arith.constant 132 : index
    %675 = memref.load %arg3[%c132] : memref<144xf32, #tpu.memory_space<smem>>
    %676 = vector.broadcast %675 : f32 to vector<2x5x13xf32>
    %677 = arith.mulf %662, %676 : vector<2x5x13xf32>
    %678 = arith.addf %661, %677 : vector<2x5x13xf32>
    %679 = vector.extract_strided_slice %558 {offsets = [0, 2, 0], sizes = [2, 5, 13], strides = [1, 1, 1]} : vector<2x7x13xf32> to vector<2x5x13xf32>
    %c25_44 = arith.constant 25 : index
    %680 = memref.load %arg3[%c25_44] : memref<144xf32, #tpu.memory_space<smem>>
    %681 = vector.broadcast %680 : f32 to vector<2x5x13xf32>
    %682 = arith.mulf %679, %681 : vector<2x5x13xf32>
    %683 = arith.addf %666, %682 : vector<2x5x13xf32>
    %c61 = arith.constant 61 : index
    %684 = memref.load %arg3[%c61] : memref<144xf32, #tpu.memory_space<smem>>
    %685 = vector.broadcast %684 : f32 to vector<2x5x13xf32>
    %686 = arith.mulf %679, %685 : vector<2x5x13xf32>
    %687 = arith.addf %670, %686 : vector<2x5x13xf32>
    %c97 = arith.constant 97 : index
    %688 = memref.load %arg3[%c97] : memref<144xf32, #tpu.memory_space<smem>>
    %689 = vector.broadcast %688 : f32 to vector<2x5x13xf32>
    %690 = arith.mulf %679, %689 : vector<2x5x13xf32>
    %691 = arith.addf %674, %690 : vector<2x5x13xf32>
    %c133 = arith.constant 133 : index
    %692 = memref.load %arg3[%c133] : memref<144xf32, #tpu.memory_space<smem>>
    %693 = vector.broadcast %692 : f32 to vector<2x5x13xf32>
    %694 = arith.mulf %679, %693 : vector<2x5x13xf32>
    %695 = arith.addf %678, %694 : vector<2x5x13xf32>
    %696 = vector.extract_strided_slice %559 {offsets = [0, 2, 0], sizes = [2, 5, 13], strides = [1, 1, 1]} : vector<2x7x13xf32> to vector<2x5x13xf32>
    %c26_45 = arith.constant 26 : index
    %697 = memref.load %arg3[%c26_45] : memref<144xf32, #tpu.memory_space<smem>>
    %698 = vector.broadcast %697 : f32 to vector<2x5x13xf32>
    %699 = arith.mulf %696, %698 : vector<2x5x13xf32>
    %700 = arith.addf %683, %699 : vector<2x5x13xf32>
    %c62 = arith.constant 62 : index
    %701 = memref.load %arg3[%c62] : memref<144xf32, #tpu.memory_space<smem>>
    %702 = vector.broadcast %701 : f32 to vector<2x5x13xf32>
    %703 = arith.mulf %696, %702 : vector<2x5x13xf32>
    %704 = arith.addf %687, %703 : vector<2x5x13xf32>
    %c98 = arith.constant 98 : index
    %705 = memref.load %arg3[%c98] : memref<144xf32, #tpu.memory_space<smem>>
    %706 = vector.broadcast %705 : f32 to vector<2x5x13xf32>
    %707 = arith.mulf %696, %706 : vector<2x5x13xf32>
    %708 = arith.addf %691, %707 : vector<2x5x13xf32>
    %c134 = arith.constant 134 : index
    %709 = memref.load %arg3[%c134] : memref<144xf32, #tpu.memory_space<smem>>
    %710 = vector.broadcast %709 : f32 to vector<2x5x13xf32>
    %711 = arith.mulf %696, %710 : vector<2x5x13xf32>
    %712 = arith.addf %695, %711 : vector<2x5x13xf32>
    %713 = vector.extract_strided_slice %240 {offsets = [0, 0, 0], sizes = [2, 7, 13], strides = [1, 1, 1]} : vector<2x7x15xf32> to vector<2x7x13xf32>
    %714 = vector.extract_strided_slice %240 {offsets = [0, 0, 1], sizes = [2, 7, 13], strides = [1, 1, 1]} : vector<2x7x15xf32> to vector<2x7x13xf32>
    %715 = vector.extract_strided_slice %240 {offsets = [0, 0, 2], sizes = [2, 7, 13], strides = [1, 1, 1]} : vector<2x7x15xf32> to vector<2x7x13xf32>
    %716 = vector.extract_strided_slice %713 {offsets = [0, 0, 0], sizes = [2, 5, 13], strides = [1, 1, 1]} : vector<2x7x13xf32> to vector<2x5x13xf32>
    %c27_46 = arith.constant 27 : index
    %717 = memref.load %arg3[%c27_46] : memref<144xf32, #tpu.memory_space<smem>>
    %718 = vector.broadcast %717 : f32 to vector<2x5x13xf32>
    %719 = arith.mulf %716, %718 : vector<2x5x13xf32>
    %720 = arith.addf %700, %719 : vector<2x5x13xf32>
    %c63 = arith.constant 63 : index
    %721 = memref.load %arg3[%c63] : memref<144xf32, #tpu.memory_space<smem>>
    %722 = vector.broadcast %721 : f32 to vector<2x5x13xf32>
    %723 = arith.mulf %716, %722 : vector<2x5x13xf32>
    %724 = arith.addf %704, %723 : vector<2x5x13xf32>
    %c99 = arith.constant 99 : index
    %725 = memref.load %arg3[%c99] : memref<144xf32, #tpu.memory_space<smem>>
    %726 = vector.broadcast %725 : f32 to vector<2x5x13xf32>
    %727 = arith.mulf %716, %726 : vector<2x5x13xf32>
    %728 = arith.addf %708, %727 : vector<2x5x13xf32>
    %c135 = arith.constant 135 : index
    %729 = memref.load %arg3[%c135] : memref<144xf32, #tpu.memory_space<smem>>
    %730 = vector.broadcast %729 : f32 to vector<2x5x13xf32>
    %731 = arith.mulf %716, %730 : vector<2x5x13xf32>
    %732 = arith.addf %712, %731 : vector<2x5x13xf32>
    %733 = vector.extract_strided_slice %714 {offsets = [0, 0, 0], sizes = [2, 5, 13], strides = [1, 1, 1]} : vector<2x7x13xf32> to vector<2x5x13xf32>
    %c28_47 = arith.constant 28 : index
    %734 = memref.load %arg3[%c28_47] : memref<144xf32, #tpu.memory_space<smem>>
    %735 = vector.broadcast %734 : f32 to vector<2x5x13xf32>
    %736 = arith.mulf %733, %735 : vector<2x5x13xf32>
    %737 = arith.addf %720, %736 : vector<2x5x13xf32>
    %c64 = arith.constant 64 : index
    %738 = memref.load %arg3[%c64] : memref<144xf32, #tpu.memory_space<smem>>
    %739 = vector.broadcast %738 : f32 to vector<2x5x13xf32>
    %740 = arith.mulf %733, %739 : vector<2x5x13xf32>
    %741 = arith.addf %724, %740 : vector<2x5x13xf32>
    %c100 = arith.constant 100 : index
    %742 = memref.load %arg3[%c100] : memref<144xf32, #tpu.memory_space<smem>>
    %743 = vector.broadcast %742 : f32 to vector<2x5x13xf32>
    %744 = arith.mulf %733, %743 : vector<2x5x13xf32>
    %745 = arith.addf %728, %744 : vector<2x5x13xf32>
    %c136 = arith.constant 136 : index
    %746 = memref.load %arg3[%c136] : memref<144xf32, #tpu.memory_space<smem>>
    %747 = vector.broadcast %746 : f32 to vector<2x5x13xf32>
    %748 = arith.mulf %733, %747 : vector<2x5x13xf32>
    %749 = arith.addf %732, %748 : vector<2x5x13xf32>
    %750 = vector.extract_strided_slice %715 {offsets = [0, 0, 0], sizes = [2, 5, 13], strides = [1, 1, 1]} : vector<2x7x13xf32> to vector<2x5x13xf32>
    %c29_48 = arith.constant 29 : index
    %751 = memref.load %arg3[%c29_48] : memref<144xf32, #tpu.memory_space<smem>>
    %752 = vector.broadcast %751 : f32 to vector<2x5x13xf32>
    %753 = arith.mulf %750, %752 : vector<2x5x13xf32>
    %754 = arith.addf %737, %753 : vector<2x5x13xf32>
    %c65 = arith.constant 65 : index
    %755 = memref.load %arg3[%c65] : memref<144xf32, #tpu.memory_space<smem>>
    %756 = vector.broadcast %755 : f32 to vector<2x5x13xf32>
    %757 = arith.mulf %750, %756 : vector<2x5x13xf32>
    %758 = arith.addf %741, %757 : vector<2x5x13xf32>
    %c101 = arith.constant 101 : index
    %759 = memref.load %arg3[%c101] : memref<144xf32, #tpu.memory_space<smem>>
    %760 = vector.broadcast %759 : f32 to vector<2x5x13xf32>
    %761 = arith.mulf %750, %760 : vector<2x5x13xf32>
    %762 = arith.addf %745, %761 : vector<2x5x13xf32>
    %c137 = arith.constant 137 : index
    %763 = memref.load %arg3[%c137] : memref<144xf32, #tpu.memory_space<smem>>
    %764 = vector.broadcast %763 : f32 to vector<2x5x13xf32>
    %765 = arith.mulf %750, %764 : vector<2x5x13xf32>
    %766 = arith.addf %749, %765 : vector<2x5x13xf32>
    %767 = vector.extract_strided_slice %713 {offsets = [0, 1, 0], sizes = [2, 5, 13], strides = [1, 1, 1]} : vector<2x7x13xf32> to vector<2x5x13xf32>
    %c30_49 = arith.constant 30 : index
    %768 = memref.load %arg3[%c30_49] : memref<144xf32, #tpu.memory_space<smem>>
    %769 = vector.broadcast %768 : f32 to vector<2x5x13xf32>
    %770 = arith.mulf %767, %769 : vector<2x5x13xf32>
    %771 = arith.addf %754, %770 : vector<2x5x13xf32>
    %c66 = arith.constant 66 : index
    %772 = memref.load %arg3[%c66] : memref<144xf32, #tpu.memory_space<smem>>
    %773 = vector.broadcast %772 : f32 to vector<2x5x13xf32>
    %774 = arith.mulf %767, %773 : vector<2x5x13xf32>
    %775 = arith.addf %758, %774 : vector<2x5x13xf32>
    %c102 = arith.constant 102 : index
    %776 = memref.load %arg3[%c102] : memref<144xf32, #tpu.memory_space<smem>>
    %777 = vector.broadcast %776 : f32 to vector<2x5x13xf32>
    %778 = arith.mulf %767, %777 : vector<2x5x13xf32>
    %779 = arith.addf %762, %778 : vector<2x5x13xf32>
    %c138 = arith.constant 138 : index
    %780 = memref.load %arg3[%c138] : memref<144xf32, #tpu.memory_space<smem>>
    %781 = vector.broadcast %780 : f32 to vector<2x5x13xf32>
    %782 = arith.mulf %767, %781 : vector<2x5x13xf32>
    %783 = arith.addf %766, %782 : vector<2x5x13xf32>
    %784 = vector.extract_strided_slice %714 {offsets = [0, 1, 0], sizes = [2, 5, 13], strides = [1, 1, 1]} : vector<2x7x13xf32> to vector<2x5x13xf32>
    %c31_50 = arith.constant 31 : index
    %785 = memref.load %arg3[%c31_50] : memref<144xf32, #tpu.memory_space<smem>>
    %786 = vector.broadcast %785 : f32 to vector<2x5x13xf32>
    %787 = arith.mulf %784, %786 : vector<2x5x13xf32>
    %788 = arith.addf %771, %787 : vector<2x5x13xf32>
    %c67 = arith.constant 67 : index
    %789 = memref.load %arg3[%c67] : memref<144xf32, #tpu.memory_space<smem>>
    %790 = vector.broadcast %789 : f32 to vector<2x5x13xf32>
    %791 = arith.mulf %784, %790 : vector<2x5x13xf32>
    %792 = arith.addf %775, %791 : vector<2x5x13xf32>
    %c103 = arith.constant 103 : index
    %793 = memref.load %arg3[%c103] : memref<144xf32, #tpu.memory_space<smem>>
    %794 = vector.broadcast %793 : f32 to vector<2x5x13xf32>
    %795 = arith.mulf %784, %794 : vector<2x5x13xf32>
    %796 = arith.addf %779, %795 : vector<2x5x13xf32>
    %c139 = arith.constant 139 : index
    %797 = memref.load %arg3[%c139] : memref<144xf32, #tpu.memory_space<smem>>
    %798 = vector.broadcast %797 : f32 to vector<2x5x13xf32>
    %799 = arith.mulf %784, %798 : vector<2x5x13xf32>
    %800 = arith.addf %783, %799 : vector<2x5x13xf32>
    %801 = vector.extract_strided_slice %715 {offsets = [0, 1, 0], sizes = [2, 5, 13], strides = [1, 1, 1]} : vector<2x7x13xf32> to vector<2x5x13xf32>
    %c32_51 = arith.constant 32 : index
    %802 = memref.load %arg3[%c32_51] : memref<144xf32, #tpu.memory_space<smem>>
    %803 = vector.broadcast %802 : f32 to vector<2x5x13xf32>
    %804 = arith.mulf %801, %803 : vector<2x5x13xf32>
    %805 = arith.addf %788, %804 : vector<2x5x13xf32>
    %c68 = arith.constant 68 : index
    %806 = memref.load %arg3[%c68] : memref<144xf32, #tpu.memory_space<smem>>
    %807 = vector.broadcast %806 : f32 to vector<2x5x13xf32>
    %808 = arith.mulf %801, %807 : vector<2x5x13xf32>
    %809 = arith.addf %792, %808 : vector<2x5x13xf32>
    %c104 = arith.constant 104 : index
    %810 = memref.load %arg3[%c104] : memref<144xf32, #tpu.memory_space<smem>>
    %811 = vector.broadcast %810 : f32 to vector<2x5x13xf32>
    %812 = arith.mulf %801, %811 : vector<2x5x13xf32>
    %813 = arith.addf %796, %812 : vector<2x5x13xf32>
    %c140 = arith.constant 140 : index
    %814 = memref.load %arg3[%c140] : memref<144xf32, #tpu.memory_space<smem>>
    %815 = vector.broadcast %814 : f32 to vector<2x5x13xf32>
    %816 = arith.mulf %801, %815 : vector<2x5x13xf32>
    %817 = arith.addf %800, %816 : vector<2x5x13xf32>
    %818 = vector.extract_strided_slice %713 {offsets = [0, 2, 0], sizes = [2, 5, 13], strides = [1, 1, 1]} : vector<2x7x13xf32> to vector<2x5x13xf32>
    %c33_52 = arith.constant 33 : index
    %819 = memref.load %arg3[%c33_52] : memref<144xf32, #tpu.memory_space<smem>>
    %820 = vector.broadcast %819 : f32 to vector<2x5x13xf32>
    %821 = arith.mulf %818, %820 : vector<2x5x13xf32>
    %822 = arith.addf %805, %821 : vector<2x5x13xf32>
    %c69 = arith.constant 69 : index
    %823 = memref.load %arg3[%c69] : memref<144xf32, #tpu.memory_space<smem>>
    %824 = vector.broadcast %823 : f32 to vector<2x5x13xf32>
    %825 = arith.mulf %818, %824 : vector<2x5x13xf32>
    %826 = arith.addf %809, %825 : vector<2x5x13xf32>
    %c105 = arith.constant 105 : index
    %827 = memref.load %arg3[%c105] : memref<144xf32, #tpu.memory_space<smem>>
    %828 = vector.broadcast %827 : f32 to vector<2x5x13xf32>
    %829 = arith.mulf %818, %828 : vector<2x5x13xf32>
    %830 = arith.addf %813, %829 : vector<2x5x13xf32>
    %c141 = arith.constant 141 : index
    %831 = memref.load %arg3[%c141] : memref<144xf32, #tpu.memory_space<smem>>
    %832 = vector.broadcast %831 : f32 to vector<2x5x13xf32>
    %833 = arith.mulf %818, %832 : vector<2x5x13xf32>
    %834 = arith.addf %817, %833 : vector<2x5x13xf32>
    %835 = vector.extract_strided_slice %714 {offsets = [0, 2, 0], sizes = [2, 5, 13], strides = [1, 1, 1]} : vector<2x7x13xf32> to vector<2x5x13xf32>
    %c34_53 = arith.constant 34 : index
    %836 = memref.load %arg3[%c34_53] : memref<144xf32, #tpu.memory_space<smem>>
    %837 = vector.broadcast %836 : f32 to vector<2x5x13xf32>
    %838 = arith.mulf %835, %837 : vector<2x5x13xf32>
    %839 = arith.addf %822, %838 : vector<2x5x13xf32>
    %c70 = arith.constant 70 : index
    %840 = memref.load %arg3[%c70] : memref<144xf32, #tpu.memory_space<smem>>
    %841 = vector.broadcast %840 : f32 to vector<2x5x13xf32>
    %842 = arith.mulf %835, %841 : vector<2x5x13xf32>
    %843 = arith.addf %826, %842 : vector<2x5x13xf32>
    %c106 = arith.constant 106 : index
    %844 = memref.load %arg3[%c106] : memref<144xf32, #tpu.memory_space<smem>>
    %845 = vector.broadcast %844 : f32 to vector<2x5x13xf32>
    %846 = arith.mulf %835, %845 : vector<2x5x13xf32>
    %847 = arith.addf %830, %846 : vector<2x5x13xf32>
    %c142 = arith.constant 142 : index
    %848 = memref.load %arg3[%c142] : memref<144xf32, #tpu.memory_space<smem>>
    %849 = vector.broadcast %848 : f32 to vector<2x5x13xf32>
    %850 = arith.mulf %835, %849 : vector<2x5x13xf32>
    %851 = arith.addf %834, %850 : vector<2x5x13xf32>
    %852 = vector.extract_strided_slice %715 {offsets = [0, 2, 0], sizes = [2, 5, 13], strides = [1, 1, 1]} : vector<2x7x13xf32> to vector<2x5x13xf32>
    %c35_54 = arith.constant 35 : index
    %853 = memref.load %arg3[%c35_54] : memref<144xf32, #tpu.memory_space<smem>>
    %854 = vector.broadcast %853 : f32 to vector<2x5x13xf32>
    %855 = arith.mulf %852, %854 : vector<2x5x13xf32>
    %856 = arith.addf %839, %855 : vector<2x5x13xf32>
    %c71 = arith.constant 71 : index
    %857 = memref.load %arg3[%c71] : memref<144xf32, #tpu.memory_space<smem>>
    %858 = vector.broadcast %857 : f32 to vector<2x5x13xf32>
    %859 = arith.mulf %852, %858 : vector<2x5x13xf32>
    %860 = arith.addf %843, %859 : vector<2x5x13xf32>
    %c107 = arith.constant 107 : index
    %861 = memref.load %arg3[%c107] : memref<144xf32, #tpu.memory_space<smem>>
    %862 = vector.broadcast %861 : f32 to vector<2x5x13xf32>
    %863 = arith.mulf %852, %862 : vector<2x5x13xf32>
    %864 = arith.addf %847, %863 : vector<2x5x13xf32>
    %c143 = arith.constant 143 : index
    %865 = memref.load %arg3[%c143] : memref<144xf32, #tpu.memory_space<smem>>
    %866 = vector.broadcast %865 : f32 to vector<2x5x13xf32>
    %867 = arith.mulf %852, %866 : vector<2x5x13xf32>
    %868 = arith.addf %851, %867 : vector<2x5x13xf32>
    %c0_55 = arith.constant 0 : index
    %869 = memref.load %arg4[%c0_55] : memref<4xf32, #tpu.memory_space<smem>>
    %870 = vector.broadcast %869 : f32 to vector<2x5x13xf32>
    %871 = arith.addf %856, %870 : vector<2x5x13xf32>
    %cst_56 = arith.constant 0.000000e+00 : f32
    %872 = vector.broadcast %cst_56 : f32 to vector<2x5x13xf32>
    %873 = arith.maximumf %871, %872 : vector<2x5x13xf32>
    %874 = vector.extract_strided_slice %873 {offsets = [0, 0, 0], sizes = [2, 4, 13], strides = [1, 1, 1]} : vector<2x5x13xf32> to vector<2x4x13xf32>
    %875 = vector.extract_strided_slice %873 {offsets = [0, 1, 0], sizes = [2, 4, 13], strides = [1, 1, 1]} : vector<2x5x13xf32> to vector<2x4x13xf32>
    %876 = arith.maximumf %874, %875 : vector<2x4x13xf32>
    %877 = vector.extract_strided_slice %876 {offsets = [0, 0, 0], sizes = [2, 1, 13], strides = [1, 1, 1]} : vector<2x4x13xf32> to vector<2x1x13xf32>
    %878 = vector.extract_strided_slice %876 {offsets = [0, 2, 0], sizes = [2, 1, 13], strides = [1, 1, 1]} : vector<2x4x13xf32> to vector<2x1x13xf32>
    %c1_57 = arith.constant 1 : index
    %879 = memref.load %arg4[%c1_57] : memref<4xf32, #tpu.memory_space<smem>>
    %880 = vector.broadcast %879 : f32 to vector<2x5x13xf32>
    %881 = arith.addf %860, %880 : vector<2x5x13xf32>
    %cst_58 = arith.constant 0.000000e+00 : f32
    %882 = vector.broadcast %cst_58 : f32 to vector<2x5x13xf32>
    %883 = arith.maximumf %881, %882 : vector<2x5x13xf32>
    %884 = vector.extract_strided_slice %883 {offsets = [0, 0, 0], sizes = [2, 4, 13], strides = [1, 1, 1]} : vector<2x5x13xf32> to vector<2x4x13xf32>
    %885 = vector.extract_strided_slice %883 {offsets = [0, 1, 0], sizes = [2, 4, 13], strides = [1, 1, 1]} : vector<2x5x13xf32> to vector<2x4x13xf32>
    %886 = arith.maximumf %884, %885 : vector<2x4x13xf32>
    %887 = vector.extract_strided_slice %886 {offsets = [0, 0, 0], sizes = [2, 1, 13], strides = [1, 1, 1]} : vector<2x4x13xf32> to vector<2x1x13xf32>
    %888 = vector.extract_strided_slice %886 {offsets = [0, 2, 0], sizes = [2, 1, 13], strides = [1, 1, 1]} : vector<2x4x13xf32> to vector<2x1x13xf32>
    %c2_59 = arith.constant 2 : index
    %889 = memref.load %arg4[%c2_59] : memref<4xf32, #tpu.memory_space<smem>>
    %890 = vector.broadcast %889 : f32 to vector<2x5x13xf32>
    %891 = arith.addf %864, %890 : vector<2x5x13xf32>
    %cst_60 = arith.constant 0.000000e+00 : f32
    %892 = vector.broadcast %cst_60 : f32 to vector<2x5x13xf32>
    %893 = arith.maximumf %891, %892 : vector<2x5x13xf32>
    %894 = vector.extract_strided_slice %893 {offsets = [0, 0, 0], sizes = [2, 4, 13], strides = [1, 1, 1]} : vector<2x5x13xf32> to vector<2x4x13xf32>
    %895 = vector.extract_strided_slice %893 {offsets = [0, 1, 0], sizes = [2, 4, 13], strides = [1, 1, 1]} : vector<2x5x13xf32> to vector<2x4x13xf32>
    %896 = arith.maximumf %894, %895 : vector<2x4x13xf32>
    %897 = vector.extract_strided_slice %896 {offsets = [0, 0, 0], sizes = [2, 1, 13], strides = [1, 1, 1]} : vector<2x4x13xf32> to vector<2x1x13xf32>
    %898 = vector.extract_strided_slice %896 {offsets = [0, 2, 0], sizes = [2, 1, 13], strides = [1, 1, 1]} : vector<2x4x13xf32> to vector<2x1x13xf32>
    %c3_61 = arith.constant 3 : index
    %899 = memref.load %arg4[%c3_61] : memref<4xf32, #tpu.memory_space<smem>>
    %900 = vector.broadcast %899 : f32 to vector<2x5x13xf32>
    %901 = arith.addf %868, %900 : vector<2x5x13xf32>
    %cst_62 = arith.constant 0.000000e+00 : f32
    %902 = vector.broadcast %cst_62 : f32 to vector<2x5x13xf32>
    %903 = arith.maximumf %901, %902 : vector<2x5x13xf32>
    %904 = vector.extract_strided_slice %903 {offsets = [0, 0, 0], sizes = [2, 4, 13], strides = [1, 1, 1]} : vector<2x5x13xf32> to vector<2x4x13xf32>
    %905 = vector.extract_strided_slice %903 {offsets = [0, 1, 0], sizes = [2, 4, 13], strides = [1, 1, 1]} : vector<2x5x13xf32> to vector<2x4x13xf32>
    %906 = arith.maximumf %904, %905 : vector<2x4x13xf32>
    %907 = vector.extract_strided_slice %906 {offsets = [0, 0, 0], sizes = [2, 1, 13], strides = [1, 1, 1]} : vector<2x4x13xf32> to vector<2x1x13xf32>
    %908 = vector.extract_strided_slice %906 {offsets = [0, 2, 0], sizes = [2, 1, 13], strides = [1, 1, 1]} : vector<2x4x13xf32> to vector<2x1x13xf32>
    %909 = tpu.concatenate %877, %878, %887, %888, %897, %898, %907, %908 in 1 : vector<2x1x13xf32>, vector<2x1x13xf32>, vector<2x1x13xf32>, vector<2x1x13xf32>, vector<2x1x13xf32>, vector<2x1x13xf32>, vector<2x1x13xf32>, vector<2x1x13xf32> -> vector<2x8x13xf32>
    %910 = vector.extract_strided_slice %909 {offsets = [0, 0, 0], sizes = [2, 8, 12], strides = [1, 1, 1]} : vector<2x8x13xf32> to vector<2x8x12xf32>
    %911 = vector.extract_strided_slice %909 {offsets = [0, 0, 1], sizes = [2, 8, 12], strides = [1, 1, 1]} : vector<2x8x13xf32> to vector<2x8x12xf32>
    %912 = arith.maximumf %910, %911 : vector<2x8x12xf32>
    %913 = tpu.iota {dimensions = array<i32: 0>} : vector<12x6xi32>
    %914 = tpu.iota {dimensions = array<i32: 1>} : vector<12x6xi32>
    %c2_i32_63 = arith.constant 2 : i32
    %915 = vector.broadcast %c2_i32_63 : i32 to vector<12x6xi32>
    %916 = arith.muli %915, %914 : vector<12x6xi32>
    %917 = arith.cmpi eq, %913, %916 : vector<12x6xi32>
    %918 = arith.extui %917 : vector<12x6xi1> to vector<12x6xi32>
    %919 = arith.sitofp %918 : vector<12x6xi32> to vector<12x6xf32>
    %920 = vector.shape_cast %919 : vector<12x6xf32> to vector<1x12x6xf32>
    %921 = vector.broadcast %920 : vector<1x12x6xf32> to vector<2x12x6xf32>
    "tpu.trace_start"() <{level = 10 : i32, message = "bhw,bwq->bhq"}> : () -> ()
    %cst_64 = arith.constant dense<0.000000e+00> : vector<2x8x6xf32>
    %922 = tpu.matmul %912, %921, %cst_64 {dimension_numbers = #tpu.dot_dimension_numbers<[2], [1], [1], [2], [0, 0, 0, 1, 1, 2], [0], [0]>} : vector<2x8x12xf32>, vector<2x12x6xf32>, vector<2x8x6xf32> -> vector<2x8x6xf32>
    "tpu.trace_stop"() : () -> ()
    %923 = vector.extract_strided_slice %922 {offsets = [0, 0, 0], sizes = [2, 1, 6], strides = [1, 1, 1]} : vector<2x8x6xf32> to vector<2x1x6xf32>
    %924 = vector.shape_cast %923 : vector<2x1x6xf32> to vector<2x6xf32>
    %925 = vector.extract_strided_slice %922 {offsets = [0, 1, 0], sizes = [2, 1, 6], strides = [1, 1, 1]} : vector<2x8x6xf32> to vector<2x1x6xf32>
    %926 = vector.shape_cast %925 : vector<2x1x6xf32> to vector<2x6xf32>
    %927 = vector.extract_strided_slice %922 {offsets = [0, 2, 0], sizes = [2, 1, 6], strides = [1, 1, 1]} : vector<2x8x6xf32> to vector<2x1x6xf32>
    %928 = vector.shape_cast %927 : vector<2x1x6xf32> to vector<2x6xf32>
    %929 = vector.extract_strided_slice %922 {offsets = [0, 3, 0], sizes = [2, 1, 6], strides = [1, 1, 1]} : vector<2x8x6xf32> to vector<2x1x6xf32>
    %930 = vector.shape_cast %929 : vector<2x1x6xf32> to vector<2x6xf32>
    %931 = vector.extract_strided_slice %922 {offsets = [0, 4, 0], sizes = [2, 1, 6], strides = [1, 1, 1]} : vector<2x8x6xf32> to vector<2x1x6xf32>
    %932 = vector.shape_cast %931 : vector<2x1x6xf32> to vector<2x6xf32>
    %933 = vector.extract_strided_slice %922 {offsets = [0, 5, 0], sizes = [2, 1, 6], strides = [1, 1, 1]} : vector<2x8x6xf32> to vector<2x1x6xf32>
    %934 = vector.shape_cast %933 : vector<2x1x6xf32> to vector<2x6xf32>
    %935 = vector.extract_strided_slice %922 {offsets = [0, 6, 0], sizes = [2, 1, 6], strides = [1, 1, 1]} : vector<2x8x6xf32> to vector<2x1x6xf32>
    %936 = vector.shape_cast %935 : vector<2x1x6xf32> to vector<2x6xf32>
    %937 = vector.extract_strided_slice %922 {offsets = [0, 7, 0], sizes = [2, 1, 6], strides = [1, 1, 1]} : vector<2x8x6xf32> to vector<2x1x6xf32>
    %938 = vector.shape_cast %937 : vector<2x1x6xf32> to vector<2x6xf32>
    %939 = tpu.concatenate %924, %926, %928, %930, %932, %934, %936, %938 in 1 : vector<2x6xf32>, vector<2x6xf32>, vector<2x6xf32>, vector<2x6xf32>, vector<2x6xf32>, vector<2x6xf32>, vector<2x6xf32>, vector<2x6xf32> -> vector<2x48xf32>
    %c0_65 = arith.constant 0 : index
    %c0_66 = arith.constant 0 : index
    %940 = vector.load %arg5[%c0_65, %c0_66] : memref<48x32xf32, #tpu.memory_space<vmem>>, vector<48x32xf32>
    %cst_67 = arith.constant dense<0.000000e+00> : vector<2x32xf32>
    %941 = tpu.matmul %939, %940, %cst_67 {dimension_numbers = #tpu.dot_dimension_numbers<[1], [0], [0], [1], [0, 0, 1, 1], [], []>} : vector<2x48xf32>, vector<48x32xf32>, vector<2x32xf32> -> vector<2x32xf32>
    %c0_68 = arith.constant 0 : index
    %c0_69 = arith.constant 0 : index
    %942 = vector.load %arg6[%c0_68, %c0_69] : memref<1x32xf32, #tpu.memory_space<vmem>>, vector<1x32xf32>
    %943 = vector.broadcast %942 : vector<1x32xf32> to vector<2x32xf32>
    %944 = arith.addf %941, %943 : vector<2x32xf32>
    %cst_70 = arith.constant 0.000000e+00 : f32
    %945 = vector.broadcast %cst_70 : f32 to vector<2x32xf32>
    %946 = arith.maximumf %944, %945 : vector<2x32xf32>
    %c0_71 = arith.constant 0 : index
    %c0_72 = arith.constant 0 : index
    %947 = vector.load %arg7[%c0_71, %c0_72] : memref<32x32xf32, #tpu.memory_space<vmem>>, vector<32x32xf32>
    %cst_73 = arith.constant dense<0.000000e+00> : vector<2x32xf32>
    %948 = tpu.matmul %946, %947, %cst_73 {dimension_numbers = #tpu.dot_dimension_numbers<[1], [0], [0], [1], [0, 0, 1, 1], [], []>} : vector<2x32xf32>, vector<32x32xf32>, vector<2x32xf32> -> vector<2x32xf32>
    %c0_74 = arith.constant 0 : index
    %c0_75 = arith.constant 0 : index
    %949 = vector.load %arg8[%c0_74, %c0_75] : memref<1x32xf32, #tpu.memory_space<vmem>>, vector<1x32xf32>
    %950 = vector.broadcast %949 : vector<1x32xf32> to vector<2x32xf32>
    %951 = arith.addf %948, %950 : vector<2x32xf32>
    %cst_76 = arith.constant 0.000000e+00 : f32
    %952 = vector.broadcast %cst_76 : f32 to vector<2x32xf32>
    %953 = arith.maximumf %951, %952 : vector<2x32xf32>
    %c0_77 = arith.constant 0 : index
    %c0_78 = arith.constant 0 : index
    %954 = vector.load %arg9[%c0_77, %c0_78] : memref<32x3xf32, #tpu.memory_space<vmem>>, vector<32x3xf32>
    %cst_79 = arith.constant dense<0.000000e+00> : vector<2x3xf32>
    %955 = tpu.matmul %953, %954, %cst_79 {dimension_numbers = #tpu.dot_dimension_numbers<[1], [0], [0], [1], [0, 0, 1, 1], [], []>} : vector<2x32xf32>, vector<32x3xf32>, vector<2x3xf32> -> vector<2x3xf32>
    %c0_80 = arith.constant 0 : index
    %c0_81 = arith.constant 0 : index
    %956 = vector.load %arg10[%c0_80, %c0_81] : memref<1x3xf32, #tpu.memory_space<vmem>>, vector<1x3xf32>
    %957 = vector.broadcast %956 : vector<1x3xf32> to vector<2x3xf32>
    %958 = arith.addf %955, %957 : vector<2x3xf32>
    %c0_82 = arith.constant 0 : index
    %c0_83 = arith.constant 0 : index
    %959 = vector.load %arg11[%c0_82, %c0_83] : memref<2x3xf32, #tpu.memory_space<vmem>>, vector<2x3xf32>
    tpu.vector_store %arg11[%c0_82, %c0_83], %958 {strides = array<i32>} : memref<2x3xf32, #tpu.memory_space<vmem>>, vector<2x3xf32>,
    return
  }
}

</mosaic_0001>

<llo_original>
// kernel: popphy_cnn_forward.1
$region0: #{popphy_cnn_forward.1}
  #allocation0 [shape = 'u32[]', space=smem, size = 0x4, offset = 0x4, fixed_abs, tag = 'smem constant byte address 0x4 - core index']
  #allocation1 [shape = 'u32[144,128]{1,0:T(1,128)}', space=vmem, size = 0x12000, scoped, tag = 'internal scratch']
  %s0 = inlined_call_operand.vmem [shape: f32[2,16,32], index: 0, kind: input, shape index: {}]
  %s1 = inlined_call_operand.vmem [shape: f32[36], index: 1, kind: input, shape index: {}]
  %s2 = inlined_call_operand.vmem [shape: f32[4], index: 2, kind: input, shape index: {}]
  %s3 = inlined_call_operand.vmem [shape: f32[144], index: 3, kind: input, shape index: {}]
  %s4 = inlined_call_operand.vmem [shape: f32[4], index: 4, kind: input, shape index: {}]
  %s5 = inlined_call_operand.vmem [shape: f32[48,32], index: 5, kind: input, shape index: {}]
  %s6 = inlined_call_operand.vmem [shape: f32[1,32], index: 6, kind: input, shape index: {}]
  %s7 = inlined_call_operand.vmem [shape: f32[32,32], index: 7, kind: input, shape index: {}]
  %s8 = inlined_call_operand.vmem [shape: f32[1,32], index: 8, kind: input, shape index: {}]
  %s9 = inlined_call_operand.vmem [shape: f32[32,3], index: 9, kind: input, shape index: {}]
  %s10 = inlined_call_operand.vmem [shape: f32[1,3], index: 10, kind: input, shape index: {}]
  %s11 = inlined_call_operand.hbm [shape: f32[2,3], index: 11, kind: output, shape index: {}]
  %s12 = sld [smem:[#allocation0]]
  $region70: #{popphy_cnn_forward.1} parent=0
    _
  %s14 = ssub.s32 1, %s12
  %s15 = scalar_select 0, %s14, %s12
  $region1: #{popphy_cnn_forward.1} parent=0
    #allocation2 [shape = 'u8[512]{0}', space=smem, size = 0x200, scoped, tag = 'input window, operand 1, single buffered']
    #allocation3 [shape = 's32[1]{0}', space=sflag, size = 0x4, scoped, tag = 'scoped memory for popphy_cnn_forward.1']
    #allocation4 [shape = 's32[1]{0}', space=sflag, size = 0x4, scoped, tag = 'scoped memory for popphy_cnn_forward.1']
    #allocation5 [shape = 'u8[512]{0}', space=smem, size = 0x200, scoped, tag = 'input window, operand 2, single buffered']
    #allocation6 [shape = 's32[1]{0}', space=sflag, size = 0x4, scoped, tag = 'scoped memory for popphy_cnn_forward.1']
    #allocation7 [shape = 'u8[1024]{0}', space=smem, size = 0x400, scoped, tag = 'input window, operand 3, single buffered']
    #allocation8 [shape = 'u8[512]{0}', space=smem, size = 0x200, scoped, tag = 'input window, operand 4, single buffered']
    #allocation9 [shape = 's32[1]{0}', space=sflag, size = 0x4, scoped, tag = 'scoped memory for popphy_cnn_forward.1']
    #allocation10 [shape = 'u8[1024]{0}', space=vmem, size = 0x400, scoped, tag = 'output window, operand 0, single buffered']
    %16 = vsyncpa [#allocation4], 0
    %17 = vsyncpa [#allocation6], 0
    %18 = vsyncpa [#allocation9], 0
    %19 = vsyncpa [#allocation3], 0
    // Predicated region
    $region2: #{popphy_cnn_forward.1} parent=1 // pred_check
      _
    $region3: #{popphy_cnn_forward.1} parent=1 // pred_check_branch
      %21 = sbr.rel (0) target = $region5
    $region4: #{popphy_cnn_forward.1} parent=1 // pred_region
      _
    $region5: #{popphy_cnn_forward.1} parent=1 // pred_fallthru
      _
    // Predicated region
    $region6: #{popphy_cnn_forward.1} parent=1 // pred_check
      _
    $region7: #{popphy_cnn_forward.1} parent=1 // pred_check_branch
      %23 = sbr.rel (0) target = $region9
    $region8: #{popphy_cnn_forward.1} parent=1 // pred_region
      %s25 = ssub.s32 16, 16
      %26 = vsyncadd [#allocation4], %s25
      %s28 = sshll.u32 %s1, 4
      %s29 = int_to_ptr.vmem [resolvable:$true] %s28
      %31 = dma.vmem_to_smem %s29, 16, [#allocation2], [#allocation4]
    $region9: #{popphy_cnn_forward.1} parent=1 // pred_fallthru
      _
    // Predicated region
    $region10: #{popphy_cnn_forward.1} parent=1 // pred_check
      _
    $region11: #{popphy_cnn_forward.1} parent=1 // pred_check_branch
      %33 = sbr.rel (0) target = $region13
    $region12: #{popphy_cnn_forward.1} parent=1 // pred_region
      %s35 = ssub.s32 16, 16
      %36 = vsyncadd [#allocation6], %s35
      %s38 = sshll.u32 %s2, 4
      %s39 = int_to_ptr.vmem [resolvable:$true] %s38
      %41 = dma.vmem_to_smem %s39, 16, [#allocation5], [#allocation6]
    $region13: #{popphy_cnn_forward.1} parent=1 // pred_fallthru
      _
    // Predicated region
    $region14: #{popphy_cnn_forward.1} parent=1 // pred_check
      _
    $region15: #{popphy_cnn_forward.1} parent=1 // pred_check_branch
      %43 = sbr.rel (0) target = $region17
    $region16: #{popphy_cnn_forward.1} parent=1 // pred_region
      %s45 = ssub.s32 32, 32
      %46 = vsyncadd [#allocation6], %s45
      %s48 = sshll.u32 %s3, 4
      %s49 = int_to_ptr.vmem [resolvable:$true] %s48
      %51 = dma.vmem_to_smem %s49, 32, [#allocation7], [#allocation6]
    $region17: #{popphy_cnn_forward.1} parent=1 // pred_fallthru
      _
    // Predicated region
    $region18: #{popphy_cnn_forward.1} parent=1 // pred_check
      _
    $region19: #{popphy_cnn_forward.1} parent=1 // pred_check_branch
      %53 = sbr.rel (0) target = $region21
    $region20: #{popphy_cnn_forward.1} parent=1 // pred_region
      %s55 = ssub.s32 16, 16
      %56 = vsyncadd [#allocation9], %s55
      %s58 = sshll.u32 %s4, 4
      %s59 = int_to_ptr.vmem [resolvable:$true] %s58
      %61 = dma.vmem_to_smem %s59, 16, [#allocation8], [#allocation9]
    $region21: #{popphy_cnn_forward.1} parent=1 // pred_fallthru
      _
    // Predicated region
    $region22: #{popphy_cnn_forward.1} parent=1 // pred_check
      _
    $region23: #{popphy_cnn_forward.1} parent=1 // pred_check_branch
      %63 = sbr.rel (0) target = $region25
    $region24: #{popphy_cnn_forward.1} parent=1 // pred_region
      _
    $region25: #{popphy_cnn_forward.1} parent=1 // pred_fallthru
      _
    // Predicated region
    $region26: #{popphy_cnn_forward.1} parent=1 // pred_check
      _
    $region27: #{popphy_cnn_forward.1} parent=1 // pred_check_branch
      %65 = sbr.rel (0) target = $region29
    $region28: #{popphy_cnn_forward.1} parent=1 // pred_region
      _
    $region29: #{popphy_cnn_forward.1} parent=1 // pred_fallthru
      _
    // Predicated region
    $region30: #{popphy_cnn_forward.1} parent=1 // pred_check
      _
    $region31: #{popphy_cnn_forward.1} parent=1 // pred_check_branch
      %67 = sbr.rel (0) target = $region33
    $region32: #{popphy_cnn_forward.1} parent=1 // pred_region
      _
    $region33: #{popphy_cnn_forward.1} parent=1 // pred_fallthru
      _
    // Predicated region
    $region34: #{popphy_cnn_forward.1} parent=1 // pred_check
      _
    $region35: #{popphy_cnn_forward.1} parent=1 // pred_check_branch
      %69 = sbr.rel (0) target = $region37
    $region36: #{popphy_cnn_forward.1} parent=1 // pred_region
      _
    $region37: #{popphy_cnn_forward.1} parent=1 // pred_fallthru
      _
    // Predicated region
    $region38: #{popphy_cnn_forward.1} parent=1 // pred_check
      _
    $region39: #{popphy_cnn_forward.1} parent=1 // pred_check_branch
      %71 = sbr.rel (0) target = $region41
    $region40: #{popphy_cnn_forward.1} parent=1 // pred_region
      _
    $region41: #{popphy_cnn_forward.1} parent=1 // pred_fallthru
      _
    // Predicated region
    $region42: #{popphy_cnn_forward.1} parent=1 // pred_check
      _
    $region43: #{popphy_cnn_forward.1} parent=1 // pred_check_branch
      %73 = sbr.rel (0) target = $region45
    $region44: #{popphy_cnn_forward.1} parent=1 // pred_region
      _
    $region45: #{popphy_cnn_forward.1} parent=1 // pred_fallthru
      _
    // Predicated region
    $region46: #{popphy_cnn_forward.1} parent=1 // pred_check
      _
    $region47: #{popphy_cnn_forward.1} parent=1 // pred_check_branch
      %75 = sbr.rel (0) target = $region49
    $region48: #{popphy_cnn_forward.1} parent=1 // pred_region
      %76 = dma.done [#allocation4], 16
    $region49: #{popphy_cnn_forward.1} parent=1 // pred_fallthru
      _
    // Predicated region
    $region50: #{popphy_cnn_forward.1} parent=1 // pred_check
      _
    $region51: #{popphy_cnn_forward.1} parent=1 // pred_check_branch
      %78 = sbr.rel (0) target = $region53
    $region52: #{popphy_cnn_forward.1} parent=1 // pred_region
      %79 = dma.done [#allocation6], 16
    $region53: #{popphy_cnn_forward.1} parent=1 // pred_fallthru
      _
    // Predicated region
    $region54: #{popphy_cnn_forward.1} parent=1 // pred_check
      _
    $region55: #{popphy_cnn_forward.1} parent=1 // pred_check_branch
      %81 = sbr.rel (0) target = $region57
    $region56: #{popphy_cnn_forward.1} parent=1 // pred_region
      %82 = dma.done [#allocation6], 32
    $region57: #{popphy_cnn_forward.1} parent=1 // pred_fallthru
      _
    // Predicated region
    $region58: #{popphy_cnn_forward.1} parent=1 // pred_check
      _
    $region59: #{popphy_cnn_forward.1} parent=1 // pred_check_branch
      %84 = sbr.rel (0) target = $region61
    $region60: #{popphy_cnn_forward.1} parent=1 // pred_region
      %85 = dma.done [#allocation9], 16
    $region61: #{popphy_cnn_forward.1} parent=1 // pred_fallthru
      _
    %86 = sfence
    %v87 = vld [vmem:[%s0] sm:$0xff]
    %v88 = vld [vmem:[%s0 + $0x8] sm:$0xff]
    %v89 = vld [vmem:[%s0 + $0x10] sm:$0xff]
    %v90 = vld [vmem:[%s0 + $0x18] sm:$0xff]
    %s91 = sld [smem:[#allocation2]]
    %v92 = vstv %s91
    %v93 = vmul.f32 %v87, %v92
    %v94 = vmul.f32 %v88, %v92
    %v95 = vmul.f32 %v89, %v92
    %v96 = vmul.f32 %v90, %v92
    %v97 = vadd.f32 %v93, 0.0
    %v98 = vadd.f32 %v94, 0.0
    %v99 = vadd.f32 %v95, 0.0
    %v100 = vadd.f32 %v96, 0.0
    %s101 = sld [smem:[#allocation2 + $0x9]]
    %v102 = vstv %s101
    %v103 = vmul.f32 %v87, %v102
    %v104 = vmul.f32 %v88, %v102
    %v105 = vmul.f32 %v89, %v102
    %v106 = vmul.f32 %v90, %v102
    %v107 = vadd.f32 %v103, 0.0
    %v108 = vadd.f32 %v104, 0.0
    %v109 = vadd.f32 %v105, 0.0
    %v110 = vadd.f32 %v106, 0.0
    %s111 = sld [smem:[#allocation2 + $0x12]]
    %v112 = vstv %s111
    %v113 = vmul.f32 %v87, %v112
    %v114 = vmul.f32 %v88, %v112
    %v115 = vmul.f32 %v89, %v112
    %v116 = vmul.f32 %v90, %v112
    %v117 = vadd.f32 %v113, 0.0
    %v118 = vadd.f32 %v114, 0.0
    %v119 = vadd.f32 %v115, 0.0
    %v120 = vadd.f32 %v116, 0.0
    %s121 = sld [smem:[#allocation2 + $0x1b]]
    %v122 = vstv %s121
    %v123 = vmul.f32 %v87, %v122
    %v124 = vmul.f32 %v88, %v122
    %v125 = vmul.f32 %v89, %v122
    %v126 = vmul.f32 %v90, %v122
    %v127 = vadd.f32 %v123, 0.0
    %v128 = vadd.f32 %v124, 0.0
    %v129 = vadd.f32 %v125, 0.0
    %v130 = vadd.f32 %v126, 0.0
    %s131 = sld [smem:[#allocation2 + $0x1]]
    %v132 = vstv %s131
    %v133 = vmul.f32 %v87, %v132
    %v134 = vmul.f32 %v88, %v132
    %v135 = vmul.f32 %v89, %v132
    %v136 = vmul.f32 %v90, %v132
    %141 = vrot.lane.b32.xlu0 %v133, 127
    %v142 = vpop.permute.xlu0 %141
    %143 = vrot.lane.b32.xlu0 %v134, 127
    %v144 = vpop.permute.xlu0 %143
    %145 = vrot.lane.b32.xlu0 %v135, 127
    %v146 = vpop.permute.xlu0 %145
    %147 = vrot.lane.b32.xlu0 %v136, 127
    %v148 = vpop.permute.xlu0 %147
    %v153 = vadd.f32 %v97, %v142
    %v154 = vadd.f32 %v98, %v144
    %v155 = vadd.f32 %v99, %v146
    %v156 = vadd.f32 %v100, %v148
    %s157 = sld [smem:[#allocation2 + $0xa]]
    %v158 = vstv %s157
    %v159 = vmul.f32 %v87, %v158
    %v160 = vmul.f32 %v88, %v158
    %v161 = vmul.f32 %v89, %v158
    %v162 = vmul.f32 %v90, %v158
    %167 = vrot.lane.b32.xlu0 %v159, 127
    %v168 = vpop.permute.xlu0 %167
    %169 = vrot.lane.b32.xlu0 %v160, 127
    %v170 = vpop.permute.xlu0 %169
    %171 = vrot.lane.b32.xlu0 %v161, 127
    %v172 = vpop.permute.xlu0 %171
    %173 = vrot.lane.b32.xlu0 %v162, 127
    %v174 = vpop.permute.xlu0 %173
    %v179 = vadd.f32 %v107, %v168
    %v180 = vadd.f32 %v108, %v170
    %v181 = vadd.f32 %v109, %v172
    %v182 = vadd.f32 %v110, %v174
    %s183 = sld [smem:[#allocation2 + $0x13]]
    %v184 = vstv %s183
    %v185 = vmul.f32 %v87, %v184
    %v186 = vmul.f32 %v88, %v184
    %v187 = vmul.f32 %v89, %v184
    %v188 = vmul.f32 %v90, %v184
    %193 = vrot.lane.b32.xlu0 %v185, 127
    %v194 = vpop.permute.xlu0 %193
    %195 = vrot.lane.b32.xlu0 %v186, 127
    %v196 = vpop.permute.xlu0 %195
    %197 = vrot.lane.b32.xlu0 %v187, 127
    %v198 = vpop.permute.xlu0 %197
    %199 = vrot.lane.b32.xlu0 %v188, 127
    %v200 = vpop.permute.xlu0 %199
    %v205 = vadd.f32 %v117, %v194
    %v206 = vadd.f32 %v118, %v196
    %v207 = vadd.f32 %v119, %v198
    %v208 = vadd.f32 %v120, %v200
    %s209 = sld [smem:[#allocation2 + $0x1c]]
    %v210 = vstv %s209
    %v211 = vmul.f32 %v87, %v210
    %v212 = vmul.f32 %v88, %v210
    %v213 = vmul.f32 %v89, %v210
    %v214 = vmul.f32 %v90, %v210
    %219 = vrot.lane.b32.xlu0 %v211, 127
    %v220 = vpop.permute.xlu0 %219
    %221 = vrot.lane.b32.xlu0 %v212, 127
    %v222 = vpop.permute.xlu0 %221
    %223 = vrot.lane.b32.xlu0 %v213, 127
    %v224 = vpop.permute.xlu0 %223
    %225 = vrot.lane.b32.xlu0 %v214, 127
    %v226 = vpop.permute.xlu0 %225
    %v231 = vadd.f32 %v127, %v220
    %v232 = vadd.f32 %v128, %v222
    %v233 = vadd.f32 %v129, %v224
    %v234 = vadd.f32 %v130, %v226
    %s235 = sld [smem:[#allocation2 + $0x2]]
    %v236 = vstv %s235
    %v237 = vmul.f32 %v87, %v236
    %v238 = vmul.f32 %v88, %v236
    %v239 = vmul.f32 %v89, %v236
    %v240 = vmul.f32 %v90, %v236
    %245 = vrot.lane.b32.xlu0 %v237, 126
    %v246 = vpop.permute.xlu0 %245
    %247 = vrot.lane.b32.xlu0 %v238, 126
    %v248 = vpop.permute.xlu0 %247
    %249 = vrot.lane.b32.xlu0 %v239, 126
    %v250 = vpop.permute.xlu0 %249
    %251 = vrot.lane.b32.xlu0 %v240, 126
    %v252 = vpop.permute.xlu0 %251
    %v257 = vadd.f32 %v153, %v246
    %v258 = vadd.f32 %v154, %v248
    %v259 = vadd.f32 %v155, %v250
    %v260 = vadd.f32 %v156, %v252
    %s261 = sld [smem:[#allocation2 + $0xb]]
    %v262 = vstv %s261
    %v263 = vmul.f32 %v87, %v262
    %v264 = vmul.f32 %v88, %v262
    %v265 = vmul.f32 %v89, %v262
    %v266 = vmul.f32 %v90, %v262
    %271 = vrot.lane.b32.xlu0 %v263, 126
    %v272 = vpop.permute.xlu0 %271
    %273 = vrot.lane.b32.xlu0 %v264, 126
    %v274 = vpop.permute.xlu0 %273
    %275 = vrot.lane.b32.xlu0 %v265, 126
    %v276 = vpop.permute.xlu0 %275
    %277 = vrot.lane.b32.xlu0 %v266, 126
    %v278 = vpop.permute.xlu0 %277
    %v283 = vadd.f32 %v179, %v272
    %v284 = vadd.f32 %v180, %v274
    %v285 = vadd.f32 %v181, %v276
    %v286 = vadd.f32 %v182, %v278
    %s287 = sld [smem:[#allocation2 + $0x14]]
    %v288 = vstv %s287
    %v289 = vmul.f32 %v87, %v288
    %v290 = vmul.f32 %v88, %v288
    %v291 = vmul.f32 %v89, %v288
    %v292 = vmul.f32 %v90, %v288
    %297 = vrot.lane.b32.xlu0 %v289, 126
    %v298 = vpop.permute.xlu0 %297
    %299 = vrot.lane.b32.xlu0 %v290, 126
    %v300 = vpop.permute.xlu0 %299
    %301 = vrot.lane.b32.xlu0 %v291, 126
    %v302 = vpop.permute.xlu0 %301
    %303 = vrot.lane.b32.xlu0 %v292, 126
    %v304 = vpop.permute.xlu0 %303
    %v309 = vadd.f32 %v205, %v298
    %v310 = vadd.f32 %v206, %v300
    %v311 = vadd.f32 %v207, %v302
    %v312 = vadd.f32 %v208, %v304
    %s313 = sld [smem:[#allocation2 + $0x1d]]
    %v314 = vstv %s313
    %v315 = vmul.f32 %v87, %v314
    %v316 = vmul.f32 %v88, %v314
    %v317 = vmul.f32 %v89, %v314
    %v318 = vmul.f32 %v90, %v314
    %323 = vrot.lane.b32.xlu0 %v315, 126
    %v324 = vpop.permute.xlu0 %323
    %325 = vrot.lane.b32.xlu0 %v316, 126
    %v326 = vpop.permute.xlu0 %325
    %327 = vrot.lane.b32.xlu0 %v317, 126
    %v328 = vpop.permute.xlu0 %327
    %329 = vrot.lane.b32.xlu0 %v318, 126
    %v330 = vpop.permute.xlu0 %329
    %v335 = vadd.f32 %v231, %v324
    %v336 = vadd.f32 %v232, %v326
    %v337 = vadd.f32 %v233, %v328
    %v338 = vadd.f32 %v234, %v330
    %s339 = sld [smem:[#allocation2 + $0x3]]
    %v340 = vstv %s339
    %v341 = vmul.f32 %v87, %v340
    %v342 = vmul.f32 %v88, %v340
    %v343 = vmul.f32 %v89, %v340
    %v344 = vmul.f32 %v90, %v340
    %vm349 = vcmask 1046528
    %v350 = vrot.slane %v341, 1
    %v351 = vrot.slane %v342, 1
    %v352 = vsel %vm349, %v350, %v351
    %v353 = vrot.slane %v343, 1
    %v354 = vrot.slane %v344, 1
    %v355 = vsel %vm349, %v353, %v354
    %v360 = vadd.f32 %v257, %v352
    %v361 = vadd.f32 %v258, %v351
    %v362 = vadd.f32 %v259, %v355
    %v363 = vadd.f32 %v260, %v354
    %s364 = sld [smem:[#allocation2 + $0xc]]
    %v365 = vstv %s364
    %v366 = vmul.f32 %v87, %v365
    %v367 = vmul.f32 %v88, %v365
    %v368 = vmul.f32 %v89, %v365
    %v369 = vmul.f32 %v90, %v365
    %v374 = vrot.slane %v366, 1
    %v375 = vrot.slane %v367, 1
    %v376 = vsel %vm349, %v374, %v375
    %v377 = vrot.slane %v368, 1
    %v378 = vrot.slane %v369, 1
    %v379 = vsel %vm349, %v377, %v378
    %v384 = vadd.f32 %v283, %v376
    %v385 = vadd.f32 %v284, %v375
    %v386 = vadd.f32 %v285, %v379
    %v387 = vadd.f32 %v286, %v378
    %s388 = sld [smem:[#allocation2 + $0x15]]
    %v389 = vstv %s388
    %v390 = vmul.f32 %v87, %v389
    %v391 = vmul.f32 %v88, %v389
    %v392 = vmul.f32 %v89, %v389
    %v393 = vmul.f32 %v90, %v389
    %v398 = vrot.slane %v390, 1
    %v399 = vrot.slane %v391, 1
    %v400 = vsel %vm349, %v398, %v399
    %v401 = vrot.slane %v392, 1
    %v402 = vrot.slane %v393, 1
    %v403 = vsel %vm349, %v401, %v402
    %v408 = vadd.f32 %v309, %v400
    %v409 = vadd.f32 %v310, %v399
    %v410 = vadd.f32 %v311, %v403
    %v411 = vadd.f32 %v312, %v402
    %s412 = sld [smem:[#allocation2 + $0x1e]]
    %v413 = vstv %s412
    %v414 = vmul.f32 %v87, %v413
    %v415 = vmul.f32 %v88, %v413
    %v416 = vmul.f32 %v89, %v413
    %v417 = vmul.f32 %v90, %v413
    %v422 = vrot.slane %v414, 1
    %v423 = vrot.slane %v415, 1
    %v424 = vsel %vm349, %v422, %v423
    %v425 = vrot.slane %v416, 1
    %v426 = vrot.slane %v417, 1
    %v427 = vsel %vm349, %v425, %v426
    %v432 = vadd.f32 %v335, %v424
    %v433 = vadd.f32 %v336, %v423
    %v434 = vadd.f32 %v337, %v427
    %v435 = vadd.f32 %v338, %v426
    %s436 = sld [smem:[#allocation2 + $0x4]]
    %v437 = vstv %s436
    %v438 = vmul.f32 %v87, %v437
    %v439 = vmul.f32 %v88, %v437
    %v440 = vmul.f32 %v89, %v437
    %v441 = vmul.f32 %v90, %v437
    %v446 = vrot.slane %v438, 1
    %v447 = vrot.slane %v439, 1
    %v448 = vsel %vm349, %v446, %v447
    %v449 = vrot.slane %v440, 1
    %v450 = vrot.slane %v441, 1
    %v451 = vsel %vm349, %v449, %v450
    %452 = vrot.lane.b32.xlu0 %v448, 127
    %v453 = vpop.permute.xlu0 %452
    %454 = vrot.lane.b32.xlu0 %v447, 127
    %v455 = vpop.permute.xlu0 %454
    %456 = vrot.lane.b32.xlu0 %v451, 127
    %v457 = vpop.permute.xlu0 %456
    %458 = vrot.lane.b32.xlu0 %v450, 127
    %v459 = vpop.permute.xlu0 %458
    %v464 = vadd.f32 %v360, %v453
    %v465 = vadd.f32 %v361, %v455
    %v466 = vadd.f32 %v362, %v457
    %v467 = vadd.f32 %v363, %v459
    %s468 = sld [smem:[#allocation2 + $0xd]]
    %v469 = vstv %s468
    %v470 = vmul.f32 %v87, %v469
    %v471 = vmul.f32 %v88, %v469
    %v472 = vmul.f32 %v89, %v469
    %v473 = vmul.f32 %v90, %v469
    %v478 = vrot.slane %v470, 1
    %v479 = vrot.slane %v471, 1
    %v480 = vsel %vm349, %v478, %v479
    %v481 = vrot.slane %v472, 1
    %v482 = vrot.slane %v473, 1
    %v483 = vsel %vm349, %v481, %v482
    %484 = vrot.lane.b32.xlu0 %v480, 127
    %v485 = vpop.permute.xlu0 %484
    %486 = vrot.lane.b32.xlu0 %v479, 127
    %v487 = vpop.permute.xlu0 %486
    %488 = vrot.lane.b32.xlu0 %v483, 127
    %v489 = vpop.permute.xlu0 %488
    %490 = vrot.lane.b32.xlu0 %v482, 127
    %v491 = vpop.permute.xlu0 %490
    %v496 = vadd.f32 %v384, %v485
    %v497 = vadd.f32 %v385, %v487
    %v498 = vadd.f32 %v386, %v489
    %v499 = vadd.f32 %v387, %v491
    %s500 = sld [smem:[#allocation2 + $0x16]]
    %v501 = vstv %s500
    %v502 = vmul.f32 %v87, %v501
    %v503 = vmul.f32 %v88, %v501
    %v504 = vmul.f32 %v89, %v501
    %v505 = vmul.f32 %v90, %v501
    %v510 = vrot.slane %v502, 1
    %v511 = vrot.slane %v503, 1
    %v512 = vsel %vm349, %v510, %v511
    %v513 = vrot.slane %v504, 1
    %v514 = vrot.slane %v505, 1
    %v515 = vsel %vm349, %v513, %v514
    %516 = vrot.lane.b32.xlu0 %v512, 127
    %v517 = vpop.permute.xlu0 %516
    %518 = vrot.lane.b32.xlu0 %v511, 127
    %v519 = vpop.permute.xlu0 %518
    %520 = vrot.lane.b32.xlu0 %v515, 127
    %v521 = vpop.permute.xlu0 %520
    %522 = vrot.lane.b32.xlu0 %v514, 127
    %v523 = vpop.permute.xlu0 %522
    %v528 = vadd.f32 %v408, %v517
    %v529 = vadd.f32 %v409, %v519
    %v530 = vadd.f32 %v410, %v521
    %v531 = vadd.f32 %v411, %v523
    %s532 = sld [smem:[#allocation2 + $0x1f]]
    %v533 = vstv %s532
    %v534 = vmul.f32 %v87, %v533
    %v535 = vmul.f32 %v88, %v533
    %v536 = vmul.f32 %v89, %v533
    %v537 = vmul.f32 %v90, %v533
    %v542 = vrot.slane %v534, 1
    %v543 = vrot.slane %v535, 1
    %v544 = vsel %vm349, %v542, %v543
    %v545 = vrot.slane %v536, 1
    %v546 = vrot.slane %v537, 1
    %v547 = vsel %vm349, %v545, %v546
    %548 = vrot.lane.b32.xlu0 %v544, 127
    %v549 = vpop.permute.xlu0 %548
    %550 = vrot.lane.b32.xlu0 %v543, 127
    %v551 = vpop.permute.xlu0 %550
    %552 = vrot.lane.b32.xlu0 %v547, 127
    %v553 = vpop.permute.xlu0 %552
    %554 = vrot.lane.b32.xlu0 %v546, 127
    %v555 = vpop.permute.xlu0 %554
    %v560 = vadd.f32 %v432, %v549
    %v561 = vadd.f32 %v433, %v551
    %v562 = vadd.f32 %v434, %v553
    %v563 = vadd.f32 %v435, %v555
    %s564 = sld [smem:[#allocation2 + $0x5]]
    %v565 = vstv %s564
    %v566 = vmul.f32 %v87, %v565
    %v567 = vmul.f32 %v88, %v565
    %v568 = vmul.f32 %v89, %v565
    %v569 = vmul.f32 %v90, %v565
    %v574 = vrot.slane %v566, 1
    %v575 = vrot.slane %v567, 1
    %v576 = vsel %vm349, %v574, %v575
    %v577 = vrot.slane %v568, 1
    %v578 = vrot.slane %v569, 1
    %v579 = vsel %vm349, %v577, %v578
    %580 = vrot.lane.b32.xlu0 %v576, 126
    %v581 = vpop.permute.xlu0 %580
    %582 = vrot.lane.b32.xlu0 %v575, 126
    %v583 = vpop.permute.xlu0 %582
    %584 = vrot.lane.b32.xlu0 %v579, 126
    %v585 = vpop.permute.xlu0 %584
    %586 = vrot.lane.b32.xlu0 %v578, 126
    %v587 = vpop.permute.xlu0 %586
    %v592 = vadd.f32 %v464, %v581
    %v593 = vadd.f32 %v465, %v583
    %v594 = vadd.f32 %v466, %v585
    %v595 = vadd.f32 %v467, %v587
    %s596 = sld [smem:[#allocation2 + $0xe]]
    %v597 = vstv %s596
    %v598 = vmul.f32 %v87, %v597
    %v599 = vmul.f32 %v88, %v597
    %v600 = vmul.f32 %v89, %v597
    %v601 = vmul.f32 %v90, %v597
    %v606 = vrot.slane %v598, 1
    %v607 = vrot.slane %v599, 1
    %v608 = vsel %vm349, %v606, %v607
    %v609 = vrot.slane %v600, 1
    %v610 = vrot.slane %v601, 1
    %v611 = vsel %vm349, %v609, %v610
    %612 = vrot.lane.b32.xlu0 %v608, 126
    %v613 = vpop.permute.xlu0 %612
    %614 = vrot.lane.b32.xlu0 %v607, 126
    %v615 = vpop.permute.xlu0 %614
    %616 = vrot.lane.b32.xlu0 %v611, 126
    %v617 = vpop.permute.xlu0 %616
    %618 = vrot.lane.b32.xlu0 %v610, 126
    %v619 = vpop.permute.xlu0 %618
    %v624 = vadd.f32 %v496, %v613
    %v625 = vadd.f32 %v497, %v615
    %v626 = vadd.f32 %v498, %v617
    %v627 = vadd.f32 %v499, %v619
    %s628 = sld [smem:[#allocation2 + $0x17]]
    %v629 = vstv %s628
    %v630 = vmul.f32 %v87, %v629
    %v631 = vmul.f32 %v88, %v629
    %v632 = vmul.f32 %v89, %v629
    %v633 = vmul.f32 %v90, %v629
    %v638 = vrot.slane %v630, 1
    %v639 = vrot.slane %v631, 1
    %v640 = vsel %vm349, %v638, %v639
    %v641 = vrot.slane %v632, 1
    %v642 = vrot.slane %v633, 1
    %v643 = vsel %vm349, %v641, %v642
    %644 = vrot.lane.b32.xlu0 %v640, 126
    %v645 = vpop.permute.xlu0 %644
    %646 = vrot.lane.b32.xlu0 %v639, 126
    %v647 = vpop.permute.xlu0 %646
    %648 = vrot.lane.b32.xlu0 %v643, 126
    %v649 = vpop.permute.xlu0 %648
    %650 = vrot.lane.b32.xlu0 %v642, 126
    %v651 = vpop.permute.xlu0 %650
    %v656 = vadd.f32 %v528, %v645
    %v657 = vadd.f32 %v529, %v647
    %v658 = vadd.f32 %v530, %v649
    %v659 = vadd.f32 %v531, %v651
    %s660 = sld [smem:[#allocation2 + $0x20]]
    %v661 = vstv %s660
    %v662 = vmul.f32 %v87, %v661
    %v663 = vmul.f32 %v88, %v661
    %v664 = vmul.f32 %v89, %v661
    %v665 = vmul.f32 %v90, %v661
    %v670 = vrot.slane %v662, 1
    %v671 = vrot.slane %v663, 1
    %v672 = vsel %vm349, %v670, %v671
    %v673 = vrot.slane %v664, 1
    %v674 = vrot.slane %v665, 1
    %v675 = vsel %vm349, %v673, %v674
    %676 = vrot.lane.b32.xlu0 %v672, 126
    %v677 = vpop.permute.xlu0 %676
    %678 = vrot.lane.b32.xlu0 %v671, 126
    %v679 = vpop.permute.xlu0 %678
    %680 = vrot.lane.b32.xlu0 %v675, 126
    %v681 = vpop.permute.xlu0 %680
    %682 = vrot.lane.b32.xlu0 %v674, 126
    %v683 = vpop.permute.xlu0 %682
    %v688 = vadd.f32 %v560, %v677
    %v689 = vadd.f32 %v561, %v679
    %v690 = vadd.f32 %v562, %v681
    %v691 = vadd.f32 %v563, %v683
    %s692 = sld [smem:[#allocation2 + $0x6]]
    %v693 = vstv %s692
    %v694 = vmul.f32 %v87, %v693
    %v695 = vmul.f32 %v88, %v693
    %v696 = vmul.f32 %v89, %v693
    %v697 = vmul.f32 %v90, %v693
    %vm702 = vcmask 1045504
    %v703 = vrot.slane %v694, 2
    %v704 = vrot.slane %v695, 2
    %v705 = vsel %vm702, %v703, %v704
    %v706 = vrot.slane %v696, 2
    %v707 = vrot.slane %v697, 2
    %v708 = vsel %vm702, %v706, %v707
    %v713 = vadd.f32 %v592, %v705
    %v714 = vadd.f32 %v593, %v704
    %v715 = vadd.f32 %v594, %v708
    %v716 = vadd.f32 %v595, %v707
    %s717 = sld [smem:[#allocation2 + $0xf]]
    %v718 = vstv %s717
    %v719 = vmul.f32 %v87, %v718
    %v720 = vmul.f32 %v88, %v718
    %v721 = vmul.f32 %v89, %v718
    %v722 = vmul.f32 %v90, %v718
    %v727 = vrot.slane %v719, 2
    %v728 = vrot.slane %v720, 2
    %v729 = vsel %vm702, %v727, %v728
    %v730 = vrot.slane %v721, 2
    %v731 = vrot.slane %v722, 2
    %v732 = vsel %vm702, %v730, %v731
    %v737 = vadd.f32 %v624, %v729
    %v738 = vadd.f32 %v625, %v728
    %v739 = vadd.f32 %v626, %v732
    %v740 = vadd.f32 %v627, %v731
    %s741 = sld [smem:[#allocation2 + $0x18]]
    %v742 = vstv %s741
    %v743 = vmul.f32 %v87, %v742
    %v744 = vmul.f32 %v88, %v742
    %v745 = vmul.f32 %v89, %v742
    %v746 = vmul.f32 %v90, %v742
    %v751 = vrot.slane %v743, 2
    %v752 = vrot.slane %v744, 2
    %v753 = vsel %vm702, %v751, %v752
    %v754 = vrot.slane %v745, 2
    %v755 = vrot.slane %v746, 2
    %v756 = vsel %vm702, %v754, %v755
    %v761 = vadd.f32 %v656, %v753
    %v762 = vadd.f32 %v657, %v752
    %v763 = vadd.f32 %v658, %v756
    %v764 = vadd.f32 %v659, %v755
    %s765 = sld [smem:[#allocation2 + $0x21]]
    %v766 = vstv %s765
    %v767 = vmul.f32 %v87, %v766
    %v768 = vmul.f32 %v88, %v766
    %v769 = vmul.f32 %v89, %v766
    %v770 = vmul.f32 %v90, %v766
    %v775 = vrot.slane %v767, 2
    %v776 = vrot.slane %v768, 2
    %v777 = vsel %vm702, %v775, %v776
    %v778 = vrot.slane %v769, 2
    %v779 = vrot.slane %v770, 2
    %v780 = vsel %vm702, %v778, %v779
    %v785 = vadd.f32 %v688, %v777
    %v786 = vadd.f32 %v689, %v776
    %v787 = vadd.f32 %v690, %v780
    %v788 = vadd.f32 %v691, %v779
    %s789 = sld [smem:[#allocation2 + $0x7]]
    %v790 = vstv %s789
    %v791 = vmul.f32 %v87, %v790
    %v792 = vmul.f32 %v88, %v790
    %v793 = vmul.f32 %v89, %v790
    %v794 = vmul.f32 %v90, %v790
    %v799 = vrot.slane %v791, 2
    %v800 = vrot.slane %v792, 2
    %v801 = vsel %vm702, %v799, %v800
    %v802 = vrot.slane %v793, 2
    %v803 = vrot.slane %v794, 2
    %v804 = vsel %vm702, %v802, %v803
    %805 = vrot.lane.b32.xlu0 %v801, 127
    %v806 = vpop.permute.xlu0 %805
    %807 = vrot.lane.b32.xlu0 %v800, 127
    %v808 = vpop.permute.xlu0 %807
    %809 = vrot.lane.b32.xlu0 %v804, 127
    %v810 = vpop.permute.xlu0 %809
    %811 = vrot.lane.b32.xlu0 %v803, 127
    %v812 = vpop.permute.xlu0 %811
    %v817 = vadd.f32 %v713, %v806
    %v818 = vadd.f32 %v714, %v808
    %v819 = vadd.f32 %v715, %v810
    %v820 = vadd.f32 %v716, %v812
    %s821 = sld [smem:[#allocation2 + $0x10]]
    %v822 = vstv %s821
    %v823 = vmul.f32 %v87, %v822
    %v824 = vmul.f32 %v88, %v822
    %v825 = vmul.f32 %v89, %v822
    %v826 = vmul.f32 %v90, %v822
    %v831 = vrot.slane %v823, 2
    %v832 = vrot.slane %v824, 2
    %v833 = vsel %vm702, %v831, %v832
    %v834 = vrot.slane %v825, 2
    %v835 = vrot.slane %v826, 2
    %v836 = vsel %vm702, %v834, %v835
    %837 = vrot.lane.b32.xlu0 %v833, 127
    %v838 = vpop.permute.xlu0 %837
    %839 = vrot.lane.b32.xlu0 %v832, 127
    %v840 = vpop.permute.xlu0 %839
    %841 = vrot.lane.b32.xlu0 %v836, 127
    %v842 = vpop.permute.xlu0 %841
    %843 = vrot.lane.b32.xlu0 %v835, 127
    %v844 = vpop.permute.xlu0 %843
    %v849 = vadd.f32 %v737, %v838
    %v850 = vadd.f32 %v738, %v840
    %v851 = vadd.f32 %v739, %v842
    %v852 = vadd.f32 %v740, %v844
    %s853 = sld [smem:[#allocation2 + $0x19]]
    %v854 = vstv %s853
    %v855 = vmul.f32 %v87, %v854
    %v856 = vmul.f32 %v88, %v854
    %v857 = vmul.f32 %v89, %v854
    %v858 = vmul.f32 %v90, %v854
    %v863 = vrot.slane %v855, 2
    %v864 = vrot.slane %v856, 2
    %v865 = vsel %vm702, %v863, %v864
    %v866 = vrot.slane %v857, 2
    %v867 = vrot.slane %v858, 2
    %v868 = vsel %vm702, %v866, %v867
    %869 = vrot.lane.b32.xlu0 %v865, 127
    %v870 = vpop.permute.xlu0 %869
    %871 = vrot.lane.b32.xlu0 %v864, 127
    %v872 = vpop.permute.xlu0 %871
    %873 = vrot.lane.b32.xlu0 %v868, 127
    %v874 = vpop.permute.xlu0 %873
    %875 = vrot.lane.b32.xlu0 %v867, 127
    %v876 = vpop.permute.xlu0 %875
    %v881 = vadd.f32 %v761, %v870
    %v882 = vadd.f32 %v762, %v872
    %v883 = vadd.f32 %v763, %v874
    %v884 = vadd.f32 %v764, %v876
    %s885 = sld [smem:[#allocation2 + $0x22]]
    %v886 = vstv %s885
    %v887 = vmul.f32 %v87, %v886
    %v888 = vmul.f32 %v88, %v886
    %v889 = vmul.f32 %v89, %v886
    %v890 = vmul.f32 %v90, %v886
    %v895 = vrot.slane %v887, 2
    %v896 = vrot.slane %v888, 2
    %v897 = vsel %vm702, %v895, %v896
    %v898 = vrot.slane %v889, 2
    %v899 = vrot.slane %v890, 2
    %v900 = vsel %vm702, %v898, %v899
    %901 = vrot.lane.b32.xlu0 %v897, 127
    %v902 = vpop.permute.xlu0 %901
    %903 = vrot.lane.b32.xlu0 %v896, 127
    %v904 = vpop.permute.xlu0 %903
    %905 = vrot.lane.b32.xlu0 %v900, 127
    %v906 = vpop.permute.xlu0 %905
    %907 = vrot.lane.b32.xlu0 %v899, 127
    %v908 = vpop.permute.xlu0 %907
    %v913 = vadd.f32 %v785, %v902
    %v914 = vadd.f32 %v786, %v904
    %v915 = vadd.f32 %v787, %v906
    %v916 = vadd.f32 %v788, %v908
    %s917 = sld [smem:[#allocation2 + $0x8]]
    %v918 = vstv %s917
    %v919 = vmul.f32 %v87, %v918
    %v920 = vmul.f32 %v88, %v918
    %v921 = vmul.f32 %v89, %v918
    %v922 = vmul.f32 %v90, %v918
    %v927 = vrot.slane %v919, 2
    %v928 = vrot.slane %v920, 2
    %v929 = vsel %vm702, %v927, %v928
    %v930 = vrot.slane %v921, 2
    %v931 = vrot.slane %v922, 2
    %v932 = vsel %vm702, %v930, %v931
    %933 = vrot.lane.b32.xlu0 %v929, 126
    %v934 = vpop.permute.xlu0 %933
    %935 = vrot.lane.b32.xlu0 %v928, 126
    %v936 = vpop.permute.xlu0 %935
    %937 = vrot.lane.b32.xlu0 %v932, 126
    %v938 = vpop.permute.xlu0 %937
    %939 = vrot.lane.b32.xlu0 %v931, 126
    %v940 = vpop.permute.xlu0 %939
    %v945 = vadd.f32 %v817, %v934
    %v946 = vadd.f32 %v818, %v936
    %v947 = vadd.f32 %v819, %v938
    %v948 = vadd.f32 %v820, %v940
    %s949 = sld [smem:[#allocation2 + $0x11]]
    %v950 = vstv %s949
    %v951 = vmul.f32 %v87, %v950
    %v952 = vmul.f32 %v88, %v950
    %v953 = vmul.f32 %v89, %v950
    %v954 = vmul.f32 %v90, %v950
    %v959 = vrot.slane %v951, 2
    %v960 = vrot.slane %v952, 2
    %v961 = vsel %vm702, %v959, %v960
    %v962 = vrot.slane %v953, 2
    %v963 = vrot.slane %v954, 2
    %v964 = vsel %vm702, %v962, %v963
    %965 = vrot.lane.b32.xlu0 %v961, 126
    %v966 = vpop.permute.xlu0 %965
    %967 = vrot.lane.b32.xlu0 %v960, 126
    %v968 = vpop.permute.xlu0 %967
    %969 = vrot.lane.b32.xlu0 %v964, 126
    %v970 = vpop.permute.xlu0 %969
    %971 = vrot.lane.b32.xlu0 %v963, 126
    %v972 = vpop.permute.xlu0 %971
    %v977 = vadd.f32 %v849, %v966
    %v978 = vadd.f32 %v850, %v968
    %v979 = vadd.f32 %v851, %v970
    %v980 = vadd.f32 %v852, %v972
    %s981 = sld [smem:[#allocation2 + $0x1a]]
    %v982 = vstv %s981
    %v983 = vmul.f32 %v87, %v982
    %v984 = vmul.f32 %v88, %v982
    %v985 = vmul.f32 %v89, %v982
    %v986 = vmul.f32 %v90, %v982
    %v991 = vrot.slane %v983, 2
    %v992 = vrot.slane %v984, 2
    %v993 = vsel %vm702, %v991, %v992
    %v994 = vrot.slane %v985, 2
    %v995 = vrot.slane %v986, 2
    %v996 = vsel %vm702, %v994, %v995
    %997 = vrot.lane.b32.xlu0 %v993, 126
    %v998 = vpop.permute.xlu0 %997
    %999 = vrot.lane.b32.xlu0 %v992, 126
    %v1000 = vpop.permute.xlu0 %999
    %1001 = vrot.lane.b32.xlu0 %v996, 126
    %v1002 = vpop.permute.xlu0 %1001
    %1003 = vrot.lane.b32.xlu0 %v995, 126
    %v1004 = vpop.permute.xlu0 %1003
    %v1009 = vadd.f32 %v881, %v998
    %v1010 = vadd.f32 %v882, %v1000
    %v1011 = vadd.f32 %v883, %v1002
    %v1012 = vadd.f32 %v884, %v1004
    %s1013 = sld [smem:[#allocation2 + $0x23]]
    %v1014 = vstv %s1013
    %v1015 = vmul.f32 %v87, %v1014
    %v1016 = vmul.f32 %v88, %v1014
    %v1017 = vmul.f32 %v89, %v1014
    %v1018 = vmul.f32 %v90, %v1014
    %v1023 = vrot.slane %v1015, 2
    %v1024 = vrot.slane %v1016, 2
    %v1025 = vsel %vm702, %v1023, %v1024
    %v1026 = vrot.slane %v1017, 2
    %v1027 = vrot.slane %v1018, 2
    %v1028 = vsel %vm702, %v1026, %v1027
    %1029 = vrot.lane.b32.xlu0 %v1025, 126
    %v1030 = vpop.permute.xlu0 %1029
    %1031 = vrot.lane.b32.xlu0 %v1024, 126
    %v1032 = vpop.permute.xlu0 %1031
    %1033 = vrot.lane.b32.xlu0 %v1028, 126
    %v1034 = vpop.permute.xlu0 %1033
    %1035 = vrot.lane.b32.xlu0 %v1027, 126
    %v1036 = vpop.permute.xlu0 %1035
    %v1041 = vadd.f32 %v913, %v1030
    %v1042 = vadd.f32 %v914, %v1032
    %v1043 = vadd.f32 %v915, %v1034
    %v1044 = vadd.f32 %v916, %v1036
    %s1045 = sld [smem:[#allocation5]]
    %v1046 = vstv %s1045
    %v1047 = vadd.f32 %v945, %v1046
    %v1048 = vadd.f32 %v946, %v1046
    %v1049 = vadd.f32 %v947, %v1046
    %v1050 = vadd.f32 %v948, %v1046
    %v1051 = vmax.f32 %v1047, 0.0
    %v1052 = vmax.f32 %v1048, 0.0
    %v1053 = vmax.f32 %v1049, 0.0
    %v1054 = vmax.f32 %v1050, 0.0
    %v1059 = vrot.slane %v1051, 1
    %v1060 = vrot.slane %v1052, 1
    %v1061 = vsel %vm349, %v1059, %v1060
    %v1062 = vrot.slane %v1053, 1
    %v1063 = vrot.slane %v1054, 1
    %v1064 = vsel %vm349, %v1062, %v1063
    %v1069 = vmax.f32 %v1051, %v1061
    %v1070 = vmax.f32 %v1052, %v1060
    %v1071 = vmax.f32 %v1053, %v1064
    %v1072 = vmax.f32 %v1054, %v1063
    %s1073 = sld [smem:[#allocation5 + $0x1]]
    %v1074 = vstv %s1073
    %v1075 = vadd.f32 %v977, %v1074
    %v1076 = vadd.f32 %v978, %v1074
    %v1077 = vadd.f32 %v979, %v1074
    %v1078 = vadd.f32 %v980, %v1074
    %v1079 = vmax.f32 %v1075, 0.0
    %v1080 = vmax.f32 %v1076, 0.0
    %v1081 = vmax.f32 %v1077, 0.0
    %v1082 = vmax.f32 %v1078, 0.0
    %v1087 = vrot.slane %v1079, 1
    %v1088 = vrot.slane %v1080, 1
    %v1089 = vsel %vm349, %v1087, %v1088
    %v1090 = vrot.slane %v1081, 1
    %v1091 = vrot.slane %v1082, 1
    %v1092 = vsel %vm349, %v1090, %v1091
    %v1097 = vmax.f32 %v1079, %v1089
    %v1098 = vmax.f32 %v1080, %v1088
    %v1099 = vmax.f32 %v1081, %v1092
    %v1100 = vmax.f32 %v1082, %v1091
    %s1101 = sld [smem:[#allocation5 + $0x2]]
    %v1102 = vstv %s1101
    %v1103 = vadd.f32 %v1009, %v1102
    %v1104 = vadd.f32 %v1010, %v1102
    %v1105 = vadd.f32 %v1011, %v1102
    %v1106 = vadd.f32 %v1012, %v1102
    %v1107 = vmax.f32 %v1103, 0.0
    %v1108 = vmax.f32 %v1104, 0.0
    %v1109 = vmax.f32 %v1105, 0.0
    %v1110 = vmax.f32 %v1106, 0.0
    %v1115 = vrot.slane %v1107, 1
    %v1116 = vrot.slane %v1108, 1
    %v1117 = vsel %vm349, %v1115, %v1116
    %v1118 = vrot.slane %v1109, 1
    %v1119 = vrot.slane %v1110, 1
    %v1120 = vsel %vm349, %v1118, %v1119
    %v1125 = vmax.f32 %v1107, %v1117
    %v1126 = vmax.f32 %v1108, %v1116
    %v1127 = vmax.f32 %v1109, %v1120
    %v1128 = vmax.f32 %v1110, %v1119
    %s1129 = sld [smem:[#allocation5 + $0x3]]
    %v1130 = vstv %s1129
    %v1131 = vadd.f32 %v1041, %v1130
    %v1132 = vadd.f32 %v1042, %v1130
    %v1133 = vadd.f32 %v1043, %v1130
    %v1134 = vadd.f32 %v1044, %v1130
    %v1135 = vmax.f32 %v1131, 0.0
    %v1136 = vmax.f32 %v1132, 0.0
    %v1137 = vmax.f32 %v1133, 0.0
    %v1138 = vmax.f32 %v1134, 0.0
    %v1143 = vrot.slane %v1135, 1
    %v1144 = vrot.slane %v1136, 1
    %v1145 = vsel %vm349, %v1143, %v1144
    %v1146 = vrot.slane %v1137, 1
    %v1147 = vrot.slane %v1138, 1
    %v1148 = vsel %vm349, %v1146, %v1147
    %v1153 = vmax.f32 %v1135, %v1145
    %v1154 = vmax.f32 %v1136, %v1144
    %v1155 = vmax.f32 %v1137, %v1148
    %v1156 = vmax.f32 %v1138, %v1147
    %v1159 = vrot.slane %v1069, 1
    %v1160 = vrot.slane %v1071, 1
    %v1163 = vrot.slane %v1069, 2
    %v1164 = vrot.slane %v1071, 2
    %v1167 = vrot.slane %v1069, 3
    %v1168 = vrot.slane %v1071, 3
    %v1173 = vrot.slane %v1070, 4
    %v1174 = vrot.slane %v1072, 4
    %v1177 = vrot.slane %v1070, 5
    %v1178 = vrot.slane %v1072, 5
    %v1181 = vrot.slane %v1070, 6
    %v1182 = vrot.slane %v1072, 6
    %v1187 = vrot.slane %v1097, 1
    %v1188 = vrot.slane %v1099, 1
    %v1191 = vrot.slane %v1097, 2
    %v1192 = vrot.slane %v1099, 2
    %v1195 = vrot.slane %v1097, 3
    %v1196 = vrot.slane %v1099, 3
    %v1199 = vrot.slane %v1097, 4
    %v1200 = vrot.slane %v1099, 4
    %v1205 = vrot.slane %v1098, 5
    %v1206 = vrot.slane %v1100, 5
    %v1209 = vrot.slane %v1098, 6
    %v1210 = vrot.slane %v1100, 6
    %v1213 = vrot.slane %v1098, 7
    %v1214 = vrot.slane %v1100, 7
    %v1219 = vrot.slane %v1125, 2
    %v1220 = vrot.slane %v1127, 2
    %v1223 = vrot.slane %v1125, 3
    %v1224 = vrot.slane %v1127, 3
    %vm1227 = vcmask 1040384
    %v1228 = vsel %vm1227, %v1069, %v1159
    %v1229 = vsel %vm1227, %v1071, %v1160
    %vm1230 = vcmask 1041408
    %v1231 = vsel %vm1230, %v1228, %v1163
    %v1232 = vsel %vm1230, %v1229, %v1164
    %vm1233 = vcmask 1042432
    %v1234 = vsel %vm1233, %v1231, %v1167
    %v1235 = vsel %vm1233, %v1232, %v1168
    %vm1236 = vcmask 1043456
    %v1237 = vsel %vm1236, %v1234, %v1173
    %v1238 = vsel %vm1236, %v1235, %v1174
    %vm1239 = vcmask 1044480
    %v1240 = vsel %vm1239, %v1237, %v1177
    %v1241 = vsel %vm1239, %v1238, %v1178
    %v1242 = vsel %vm702, %v1240, %v1181
    %v1243 = vsel %vm702, %v1241, %v1182
    %v1244 = vsel %vm349, %v1242, %v1187
    %v1245 = vsel %vm349, %v1243, %v1188
    %v1246 = vsel %vm1227, %v1191, %v1195
    %v1247 = vsel %vm1227, %v1192, %v1196
    %v1248 = vsel %vm1230, %v1246, %v1199
    %v1249 = vsel %vm1230, %v1247, %v1200
    %v1250 = vsel %vm1233, %v1248, %v1205
    %v1251 = vsel %vm1233, %v1249, %v1206
    %v1252 = vsel %vm1236, %v1250, %v1209
    %v1253 = vsel %vm1236, %v1251, %v1210
    %v1254 = vsel %vm1239, %v1252, %v1213
    %v1255 = vsel %vm1239, %v1253, %v1214
    %v1256 = vsel %vm702, %v1254, %v1219
    %v1257 = vsel %vm702, %v1255, %v1220
    %v1258 = vsel %vm349, %v1256, %v1223
    %v1259 = vsel %vm349, %v1257, %v1224
    %v1260 = vrot.slane %v1125, 4
    %v1261 = vrot.slane %v1127, 4
    %v1264 = vrot.slane %v1125, 5
    %v1265 = vrot.slane %v1127, 5
    %v1270 = vrot.slane %v1126, 6
    %v1271 = vrot.slane %v1128, 6
    %v1274 = vrot.slane %v1126, 7
    %v1275 = vrot.slane %v1128, 7
    %v1280 = vrot.slane %v1153, 3
    %v1281 = vrot.slane %v1155, 3
    %v1284 = vrot.slane %v1153, 4
    %v1285 = vrot.slane %v1155, 4
    %v1288 = vrot.slane %v1153, 5
    %v1289 = vrot.slane %v1155, 5
    %v1292 = vrot.slane %v1153, 6
    %v1293 = vrot.slane %v1155, 6
    %v1298 = vrot.slane %v1154, 7
    %v1299 = vrot.slane %v1156, 7
    %v1302 = vrot.slane %v1154, 1
    %v1303 = vrot.slane %v1156, 1
    %v1306 = vsel %vm1227, %v1260, %v1264
    %v1307 = vsel %vm1227, %v1261, %v1265
    %v1308 = vsel %vm1230, %v1306, %v1270
    %v1309 = vsel %vm1230, %v1307, %v1271
    %v1310 = vsel %vm1233, %v1308, %v1274
    %v1311 = vsel %vm1233, %v1309, %v1275
    %v1312 = vsel %vm1236, %v1310, %v1126
    %v1313 = vsel %vm1236, %v1311, %v1128
    %v1314 = vsel %vm1239, %v1312, %v1280
    %v1315 = vsel %vm1239, %v1313, %v1281
    %v1316 = vsel %vm702, %v1314, %v1284
    %v1317 = vsel %vm702, %v1315, %v1285
    %v1318 = vsel %vm349, %v1316, %v1288
    %v1319 = vsel %vm349, %v1317, %v1289
    %v1320 = vsel %vm1227, %v1292, %v1298
    %v1321 = vsel %vm1227, %v1293, %v1299
    %v1322 = vsel %vm1230, %v1320, %v1154
    %v1323 = vsel %vm1230, %v1321, %v1156
    %v1324 = vsel %vm1233, %v1322, %v1302
    %v1325 = vsel %vm1233, %v1323, %v1303
    %1334 = vrot.lane.b32.xlu0 %v1244, 127
    %v1335 = vpop.permute.xlu0 %1334
    %1336 = vrot.lane.b32.xlu0 %v1258, 127
    %v1337 = vpop.permute.xlu0 %1336
    %1338 = vrot.lane.b32.xlu0 %v1318, 127
    %v1339 = vpop.permute.xlu0 %1338
    %1340 = vrot.lane.b32.xlu0 %v1324, 127
    %v1341 = vpop.permute.xlu0 %1340
    %1342 = vrot.lane.b32.xlu0 %v1245, 127
    %v1343 = vpop.permute.xlu0 %1342
    %1344 = vrot.lane.b32.xlu0 %v1259, 127
    %v1345 = vpop.permute.xlu0 %1344
    %1346 = vrot.lane.b32.xlu0 %v1319, 127
    %v1347 = vpop.permute.xlu0 %1346
    %1348 = vrot.lane.b32.xlu0 %v1325, 127
    %v1349 = vpop.permute.xlu0 %1348
    %v1358 = vmax.f32 %v1244, %v1335
    %v1359 = vmax.f32 %v1258, %v1337
    %v1360 = vmax.f32 %v1318, %v1339
    %v1361 = vmax.f32 %v1324, %v1341
    %v1362 = vmax.f32 %v1245, %v1343
    %v1363 = vmax.f32 %v1259, %v1345
    %v1364 = vmax.f32 %v1319, %v1347
    %v1365 = vmax.f32 %v1325, %v1349
    %v1366 = vlaneseq
    %v1367 = vshrl.u32 %v1366, 7
    %v1368 = vadd.s32 %v1367, 8
    %v1369 = vadd.s32 %v1367, 16
    %v1370 = vadd.s32 %v1367, 24
    %v1371 = vlaneseq
    %v1372 = vand.u32 %v1371, 127
    %v1373 = vmul.u32 %v1372, 2
    %vm1374 = vcmp.eq.s32.totalorder %v1367, %v1373
    %vm1375 = vcmp.eq.s32.totalorder %v1368, %v1373
    %vm1376 = vcmp.eq.s32.totalorder %v1369, %v1373
    %vm1377 = vcmp.eq.s32.totalorder %v1370, %v1373
    %v1378 = vsel %vm1374, 1, 0
    %v1379 = vsel %vm1375, 1, 0
    %v1380 = vsel %vm1376, 1, 0
    %v1381 = vsel %vm1377, 1, 0
    %v1382 = vcvt.s32.f32 %v1378
    %v1383 = vcvt.s32.f32 %v1379
    %v1384 = vcvt.s32.f32 %v1380
    %v1385 = vcvt.s32.f32 %v1381
    %vm1386 = vcmask 236544
    %v1388 = vsel %vm1386, %v1358, 0
    %v1391 = vsel %vm1386, %v1359, 0
    %v1394 = vsel %vm1386, %v1360, 0
    %v1397 = vsel %vm1386, %v1361, 0
    %v1400 = vsel %vm1239, %v1385, 0
    %1402 = vmatprep.subr.mxu0 0.0
    %1403 = vmatpush1.msra.mxu0 %v1382
    %1404 = vmatprep.subr.mxu0 0.0
    %1405 = vmatpush1.msra.mxu0 %v1383
    %1406 = vmatprep.subr.mxu0 0.0
    %1407 = vmatpush1.msra.mxu0 %v1384
    %1408 = vmatprep.subr.mxu0 0.0
    %1409 = vmatpush1.msra.mxu0 %v1400
    %1410 = vmatprep.subr.mxu0 0.0
    %1411 = vmatpush1.msra.mxu0 0.0
    %1412 = vmatprep.subr.mxu0 0.0
    %1413 = vmatpush1.msra.mxu0 0.0
    %1414 = vmatprep.subr.mxu0 0.0
    %1415 = vmatpush1.msra.mxu0 0.0
    %1416 = vmatprep.subr.mxu0 0.0
    %1417 = vmatpush1.msra.mxu0 0.0
    %1418 = vmatprep.subr.mxu0 0.0
    %1419 = vmatpush1.msra.mxu0 0.0
    %1420 = vmatprep.subr.mxu0 0.0
    %1421 = vmatpush1.msra.mxu0 0.0
    %1422 = vmatprep.subr.mxu0 0.0
    %1423 = vmatpush1.msra.mxu0 0.0
    %1424 = vmatprep.subr.mxu0 0.0
    %1425 = vmatpush1.msra.mxu0 0.0
    %1426 = vmatprep.subr.mxu0 0.0
    %1427 = vmatpush1.msra.mxu0 0.0
    %1428 = vmatprep.subr.mxu0 0.0
    %1429 = vmatpush1.msra.mxu0 0.0
    %1430 = vmatprep.subr.mxu0 0.0
    %1431 = vmatpush1.msra.mxu0 0.0
    %1432 = vmatprep.subr.mxu0 0.0
    %1433 = vmatpush1.msra.mxu0 0.0
    %1434 = vmatprep.subr.mxu0 0.0
    %1435 = vmatpush1.msra.mxu0 0.0
    %1436 = vmatprep.subr.mxu0 0.0
    %1437 = vmatpush1.msra.mxu0 0.0
    %1438 = vmatprep.subr.mxu0 0.0
    %1439 = vmatpush1.msra.mxu0 0.0
    %1440 = vmatprep.subr.mxu0 0.0
    %1441 = vmatpush1.msra.mxu0 0.0
    %1442 = vmatprep.subr.mxu0 0.0
    %1443 = vmatpush1.msra.mxu0 0.0
    %1444 = vmatprep.subr.mxu0 0.0
    %1445 = vmatpush1.msra.mxu0 0.0
    %1446 = vmatprep.subr.mxu0 0.0
    %1447 = vmatpush1.msra.mxu0 0.0
    %1448 = vmatprep.subr.mxu0 0.0
    %1449 = vmatpush1.msra.mxu0 0.0
    %1450 = vmatprep.subr.mxu0 0.0
    %1451 = vmatpush1.msra.mxu0 0.0
    %1452 = vmatprep.subr.mxu0 0.0
    %1453 = vmatpush1.msra.mxu0 0.0
    %1454 = vmatprep.subr.mxu0 0.0
    %1455 = vmatpush1.msra.mxu0 0.0
    %1456 = vmatprep.subr.mxu0 0.0
    %1457 = vmatpush1.msra.mxu0 0.0
    %1458 = vmatprep.subr.mxu0 0.0
    %1459 = vmatpush1.msra.mxu0 0.0
    %1460 = vmatprep.subr.mxu0 0.0
    %1461 = vmatpush1.msra.mxu0 0.0
    %1462 = vmatprep.subr.mxu0 0.0
    %1463 = vmatpush1.msra.mxu0 0.0
    %1464 = vmatprep.subr.mxu0 0.0
    %1465 = vmatpush1.msra.mxu0 0.0
    %1466 = vmatprep.mubr.f32.mxu0 0.0
    %1467 = vmatmul.mubr.f32.gmra.mrb[0].mxu0 %v1388
    %v1468 = vpop.f32.mrb[0].mxu0
    %v1469 = vadd.f32 0.0, %v1468
    %v1470 = vpop.f32.mrb[0].mxu0
    %1471 = vmatprep.mubr.f32.mxu0 0.0
    %1472 = vmatmul.mubr.f32.gmra.mrb[0].mxu0 %v1391
    %v1473 = vpop.f32.mrb[0].mxu0
    %v1474 = vadd.f32 0.0, %v1473
    %v1475 = vpop.f32.mrb[0].mxu0
    %1476 = vmatprep.mubr.f32.mxu0 0.0
    %1477 = vmatmul.mubr.f32.gmra.mrb[0].mxu0 %v1394
    %v1478 = vpop.f32.mrb[0].mxu0
    %v1479 = vadd.f32 0.0, %v1478
    %v1480 = vpop.f32.mrb[0].mxu0
    %1481 = vmatprep.mubr.f32.mxu0 0.0
    %1482 = vmatmul.mubr.f32.gmra.mrb[0].mxu0 %v1397
    %v1483 = vpop.f32.mrb[0].mxu0
    %v1484 = vadd.f32 0.0, %v1483
    %v1485 = vpop.f32.mrb[0].mxu0
    %1486 = vdwg.mxu0
    %v1488 = vsel %vm1386, %v1362, 0
    %v1491 = vsel %vm1386, %v1363, 0
    %v1494 = vsel %vm1386, %v1364, 0
    %v1497 = vsel %vm1386, %v1365, 0
    %1499 = vmatprep.subr.mxu0 0.0
    %1500 = vmatpush1.msra.mxu0 %v1382
    %1501 = vmatprep.subr.mxu0 0.0
    %1502 = vmatpush1.msra.mxu0 %v1383
    %1503 = vmatprep.subr.mxu0 0.0
    %1504 = vmatpush1.msra.mxu0 %v1384
    %1505 = vmatprep.subr.mxu0 0.0
    %1506 = vmatpush1.msra.mxu0 %v1400
    %1507 = vmatprep.subr.mxu0 0.0
    %1508 = vmatpush1.msra.mxu0 0.0
    %1509 = vmatprep.subr.mxu0 0.0
    %1510 = vmatpush1.msra.mxu0 0.0
    %1511 = vmatprep.subr.mxu0 0.0
    %1512 = vmatpush1.msra.mxu0 0.0
    %1513 = vmatprep.subr.mxu0 0.0
    %1514 = vmatpush1.msra.mxu0 0.0
    %1515 = vmatprep.subr.mxu0 0.0
    %1516 = vmatpush1.msra.mxu0 0.0
    %1517 = vmatprep.subr.mxu0 0.0
    %1518 = vmatpush1.msra.mxu0 0.0
    %1519 = vmatprep.subr.mxu0 0.0
    %1520 = vmatpush1.msra.mxu0 0.0
    %1521 = vmatprep.subr.mxu0 0.0
    %1522 = vmatpush1.msra.mxu0 0.0
    %1523 = vmatprep.subr.mxu0 0.0
    %1524 = vmatpush1.msra.mxu0 0.0
    %1525 = vmatprep.subr.mxu0 0.0
    %1526 = vmatpush1.msra.mxu0 0.0
    %1527 = vmatprep.subr.mxu0 0.0
    %1528 = vmatpush1.msra.mxu0 0.0
    %1529 = vmatprep.subr.mxu0 0.0
    %1530 = vmatpush1.msra.mxu0 0.0
    %1531 = vmatprep.subr.mxu0 0.0
    %1532 = vmatpush1.msra.mxu0 0.0
    %1533 = vmatprep.subr.mxu0 0.0
    %1534 = vmatpush1.msra.mxu0 0.0
    %1535 = vmatprep.subr.mxu0 0.0
    %1536 = vmatpush1.msra.mxu0 0.0
    %1537 = vmatprep.subr.mxu0 0.0
    %1538 = vmatpush1.msra.mxu0 0.0
    %1539 = vmatprep.subr.mxu0 0.0
    %1540 = vmatpush1.msra.mxu0 0.0
    %1541 = vmatprep.subr.mxu0 0.0
    %1542 = vmatpush1.msra.mxu0 0.0
    %1543 = vmatprep.subr.mxu0 0.0
    %1544 = vmatpush1.msra.mxu0 0.0
    %1545 = vmatprep.subr.mxu0 0.0
    %1546 = vmatpush1.msra.mxu0 0.0
    %1547 = vmatprep.subr.mxu0 0.0
    %1548 = vmatpush1.msra.mxu0 0.0
    %1549 = vmatprep.subr.mxu0 0.0
    %1550 = vmatpush1.msra.mxu0 0.0
    %1551 = vmatprep.subr.mxu0 0.0
    %1552 = vmatpush1.msra.mxu0 0.0
    %1553 = vmatprep.subr.mxu0 0.0
    %1554 = vmatpush1.msra.mxu0 0.0
    %1555 = vmatprep.subr.mxu0 0.0
    %1556 = vmatpush1.msra.mxu0 0.0
    %1557 = vmatprep.subr.mxu0 0.0
    %1558 = vmatpush1.msra.mxu0 0.0
    %1559 = vmatprep.subr.mxu0 0.0
    %1560 = vmatpush1.msra.mxu0 0.0
    %1561 = vmatprep.subr.mxu0 0.0
    %1562 = vmatpush1.msra.mxu0 0.0
    %1563 = vmatprep.mubr.f32.mxu0 0.0
    %1564 = vmatmul.mubr.f32.gmra.mrb[0].mxu0 %v1488
    %v1565 = vpop.f32.mrb[0].mxu0
    %v1566 = vadd.f32 0.0, %v1565
    %v1567 = vpop.f32.mrb[0].mxu0
    %1568 = vmatprep.mubr.f32.mxu0 0.0
    %1569 = vmatmul.mubr.f32.gmra.mrb[0].mxu0 %v1491
    %v1570 = vpop.f32.mrb[0].mxu0
    %v1571 = vadd.f32 0.0, %v1570
    %v1572 = vpop.f32.mrb[0].mxu0
    %1573 = vmatprep.mubr.f32.mxu0 0.0
    %1574 = vmatmul.mubr.f32.gmra.mrb[0].mxu0 %v1494
    %v1575 = vpop.f32.mrb[0].mxu0
    %v1576 = vadd.f32 0.0, %v1575
    %v1577 = vpop.f32.mrb[0].mxu0
    %1578 = vmatprep.mubr.f32.mxu0 0.0
    %1579 = vmatmul.mubr.f32.gmra.mrb[0].mxu0 %v1497
    %v1580 = vpop.f32.mrb[0].mxu0
    %v1581 = vadd.f32 0.0, %v1580
    %v1582 = vpop.f32.mrb[0].mxu0
    %1583 = vdwg.mxu0
    %s1584 = sld [smem:[#allocation7]]
    %v1585 = vstv %s1584
    %v1586 = vmul.f32 %v1469, %v1585
    %v1587 = vmul.f32 %v1566, %v1585
    %v1588 = vadd.f32 %v1586, 0.0
    %v1589 = vadd.f32 %v1587, 0.0
    %s1590 = sld [smem:[#allocation7 + $0x24]]
    %v1591 = vstv %s1590
    %v1592 = vmul.f32 %v1469, %v1591
    %v1593 = vmul.f32 %v1566, %v1591
    %v1594 = vadd.f32 %v1592, 0.0
    %v1595 = vadd.f32 %v1593, 0.0
    %s1596 = sld [smem:[#allocation7 + $0x48]]
    %v1597 = vstv %s1596
    %v1598 = vmul.f32 %v1469, %v1597
    %v1599 = vmul.f32 %v1566, %v1597
    %v1600 = vadd.f32 %v1598, 0.0
    %v1601 = vadd.f32 %v1599, 0.0
    %s1602 = sld [smem:[#allocation7 + $0x6c]]
    %v1603 = vstv %s1602
    %v1604 = vmul.f32 %v1469, %v1603
    %v1605 = vmul.f32 %v1566, %v1603
    %v1606 = vadd.f32 %v1604, 0.0
    %v1607 = vadd.f32 %v1605, 0.0
    %s1608 = sld [smem:[#allocation7 + $0x1]]
    %v1609 = vstv %s1608
    %v1610 = vmul.f32 %v1469, %v1609
    %v1611 = vmul.f32 %v1566, %v1609
    %1614 = vrot.lane.b32.xlu0 %v1610, 127
    %v1615 = vpop.permute.xlu0 %1614
    %1616 = vrot.lane.b32.xlu0 %v1611, 127
    %v1617 = vpop.permute.xlu0 %1616
    %v1620 = vadd.f32 %v1588, %v1615
    %v1621 = vadd.f32 %v1589, %v1617
    %s1622 = sld [smem:[#allocation7 + $0x25]]
    %v1623 = vstv %s1622
    %v1624 = vmul.f32 %v1469, %v1623
    %v1625 = vmul.f32 %v1566, %v1623
    %1628 = vrot.lane.b32.xlu0 %v1624, 127
    %v1629 = vpop.permute.xlu0 %1628
    %1630 = vrot.lane.b32.xlu0 %v1625, 127
    %v1631 = vpop.permute.xlu0 %1630
    %v1634 = vadd.f32 %v1594, %v1629
    %v1635 = vadd.f32 %v1595, %v1631
    %s1636 = sld [smem:[#allocation7 + $0x49]]
    %v1637 = vstv %s1636
    %v1638 = vmul.f32 %v1469, %v1637
    %v1639 = vmul.f32 %v1566, %v1637
    %1642 = vrot.lane.b32.xlu0 %v1638, 127
    %v1643 = vpop.permute.xlu0 %1642
    %1644 = vrot.lane.b32.xlu0 %v1639, 127
    %v1645 = vpop.permute.xlu0 %1644
    %v1648 = vadd.f32 %v1600, %v1643
    %v1649 = vadd.f32 %v1601, %v1645
    %s1650 = sld [smem:[#allocation7 + $0x6d]]
    %v1651 = vstv %s1650
    %v1652 = vmul.f32 %v1469, %v1651
    %v1653 = vmul.f32 %v1566, %v1651
    %1656 = vrot.lane.b32.xlu0 %v1652, 127
    %v1657 = vpop.permute.xlu0 %1656
    %1658 = vrot.lane.b32.xlu0 %v1653, 127
    %v1659 = vpop.permute.xlu0 %1658
    %v1662 = vadd.f32 %v1606, %v1657
    %v1663 = vadd.f32 %v1607, %v1659
    %s1664 = sld [smem:[#allocation7 + $0x2]]
    %v1665 = vstv %s1664
    %v1666 = vmul.f32 %v1469, %v1665
    %v1667 = vmul.f32 %v1566, %v1665
    %1670 = vrot.lane.b32.xlu0 %v1666, 126
    %v1671 = vpop.permute.xlu0 %1670
    %1672 = vrot.lane.b32.xlu0 %v1667, 126
    %v1673 = vpop.permute.xlu0 %1672
    %v1676 = vadd.f32 %v1620, %v1671
    %v1677 = vadd.f32 %v1621, %v1673
    %s1678 = sld [smem:[#allocation7 + $0x26]]
    %v1679 = vstv %s1678
    %v1680 = vmul.f32 %v1469, %v1679
    %v1681 = vmul.f32 %v1566, %v1679
    %1684 = vrot.lane.b32.xlu0 %v1680, 126
    %v1685 = vpop.permute.xlu0 %1684
    %1686 = vrot.lane.b32.xlu0 %v1681, 126
    %v1687 = vpop.permute.xlu0 %1686
    %v1690 = vadd.f32 %v1634, %v1685
    %v1691 = vadd.f32 %v1635, %v1687
    %s1692 = sld [smem:[#allocation7 + $0x4a]]
    %v1693 = vstv %s1692
    %v1694 = vmul.f32 %v1469, %v1693
    %v1695 = vmul.f32 %v1566, %v1693
    %1698 = vrot.lane.b32.xlu0 %v1694, 126
    %v1699 = vpop.permute.xlu0 %1698
    %1700 = vrot.lane.b32.xlu0 %v1695, 126
    %v1701 = vpop.permute.xlu0 %1700
    %v1704 = vadd.f32 %v1648, %v1699
    %v1705 = vadd.f32 %v1649, %v1701
    %s1706 = sld [smem:[#allocation7 + $0x6e]]
    %v1707 = vstv %s1706
    %v1708 = vmul.f32 %v1469, %v1707
    %v1709 = vmul.f32 %v1566, %v1707
    %1712 = vrot.lane.b32.xlu0 %v1708, 126
    %v1713 = vpop.permute.xlu0 %1712
    %1714 = vrot.lane.b32.xlu0 %v1709, 126
    %v1715 = vpop.permute.xlu0 %1714
    %v1718 = vadd.f32 %v1662, %v1713
    %v1719 = vadd.f32 %v1663, %v1715
    %s1720 = sld [smem:[#allocation7 + $0x3]]
    %v1721 = vstv %s1720
    %v1722 = vmul.f32 %v1469, %v1721
    %v1723 = vmul.f32 %v1566, %v1721
    %v1726 = vrot.slane %v1722, 1
    %v1727 = vrot.slane %v1723, 1
    %v1730 = vadd.f32 %v1676, %v1726
    %v1731 = vadd.f32 %v1677, %v1727
    %s1732 = sld [smem:[#allocation7 + $0x27]]
    %v1733 = vstv %s1732
    %v1734 = vmul.f32 %v1469, %v1733
    %v1735 = vmul.f32 %v1566, %v1733
    %v1738 = vrot.slane %v1734, 1
    %v1739 = vrot.slane %v1735, 1
    %v1742 = vadd.f32 %v1690, %v1738
    %v1743 = vadd.f32 %v1691, %v1739
    %s1744 = sld [smem:[#allocation7 + $0x4b]]
    %v1745 = vstv %s1744
    %v1746 = vmul.f32 %v1469, %v1745
    %v1747 = vmul.f32 %v1566, %v1745
    %v1750 = vrot.slane %v1746, 1
    %v1751 = vrot.slane %v1747, 1
    %v1754 = vadd.f32 %v1704, %v1750
    %v1755 = vadd.f32 %v1705, %v1751
    %s1756 = sld [smem:[#allocation7 + $0x6f]]
    %v1757 = vstv %s1756
    %v1758 = vmul.f32 %v1469, %v1757
    %v1759 = vmul.f32 %v1566, %v1757
    %v1762 = vrot.slane %v1758, 1
    %v1763 = vrot.slane %v1759, 1
    %v1766 = vadd.f32 %v1718, %v1762
    %v1767 = vadd.f32 %v1719, %v1763
    %s1768 = sld [smem:[#allocation7 + $0x4]]
    %v1769 = vstv %s1768
    %v1770 = vmul.f32 %v1469, %v1769
    %v1771 = vmul.f32 %v1566, %v1769
    %v1774 = vrot.slane %v1770, 1
    %v1775 = vrot.slane %v1771, 1
    %1776 = vrot.lane.b32.xlu0 %v1774, 127
    %v1777 = vpop.permute.xlu0 %1776
    %1778 = vrot.lane.b32.xlu0 %v1775, 127
    %v1779 = vpop.permute.xlu0 %1778
    %v1782 = vadd.f32 %v1730, %v1777
    %v1783 = vadd.f32 %v1731, %v1779
    %s1784 = sld [smem:[#allocation7 + $0x28]]
    %v1785 = vstv %s1784
    %v1786 = vmul.f32 %v1469, %v1785
    %v1787 = vmul.f32 %v1566, %v1785
    %v1790 = vrot.slane %v1786, 1
    %v1791 = vrot.slane %v1787, 1
    %1792 = vrot.lane.b32.xlu0 %v1790, 127
    %v1793 = vpop.permute.xlu0 %1792
    %1794 = vrot.lane.b32.xlu0 %v1791, 127
    %v1795 = vpop.permute.xlu0 %1794
    %v1798 = vadd.f32 %v1742, %v1793
    %v1799 = vadd.f32 %v1743, %v1795
    %s1800 = sld [smem:[#allocation7 + $0x4c]]
    %v1801 = vstv %s1800
    %v1802 = vmul.f32 %v1469, %v1801
    %v1803 = vmul.f32 %v1566, %v1801
    %v1806 = vrot.slane %v1802, 1
    %v1807 = vrot.slane %v1803, 1
    %1808 = vrot.lane.b32.xlu0 %v1806, 127
    %v1809 = vpop.permute.xlu0 %1808
    %1810 = vrot.lane.b32.xlu0 %v1807, 127
    %v1811 = vpop.permute.xlu0 %1810
    %v1814 = vadd.f32 %v1754, %v1809
    %v1815 = vadd.f32 %v1755, %v1811
    %s1816 = sld [smem:[#allocation7 + $0x70]]
    %v1817 = vstv %s1816
    %v1818 = vmul.f32 %v1469, %v1817
    %v1819 = vmul.f32 %v1566, %v1817
    %v1822 = vrot.slane %v1818, 1
    %v1823 = vrot.slane %v1819, 1
    %1824 = vrot.lane.b32.xlu0 %v1822, 127
    %v1825 = vpop.permute.xlu0 %1824
    %1826 = vrot.lane.b32.xlu0 %v1823, 127
    %v1827 = vpop.permute.xlu0 %1826
    %v1830 = vadd.f32 %v1766, %v1825
    %v1831 = vadd.f32 %v1767, %v1827
    %s1832 = sld [smem:[#allocation7 + $0x5]]
    %v1833 = vstv %s1832
    %v1834 = vmul.f32 %v1469, %v1833
    %v1835 = vmul.f32 %v1566, %v1833
    %v1838 = vrot.slane %v1834, 1
    %v1839 = vrot.slane %v1835, 1
    %1840 = vrot.lane.b32.xlu0 %v1838, 126
    %v1841 = vpop.permute.xlu0 %1840
    %1842 = vrot.lane.b32.xlu0 %v1839, 126
    %v1843 = vpop.permute.xlu0 %1842
    %v1846 = vadd.f32 %v1782, %v1841
    %v1847 = vadd.f32 %v1783, %v1843
    %s1848 = sld [smem:[#allocation7 + $0x29]]
    %v1849 = vstv %s1848
    %v1850 = vmul.f32 %v1469, %v1849
    %v1851 = vmul.f32 %v1566, %v1849
    %v1854 = vrot.slane %v1850, 1
    %v1855 = vrot.slane %v1851, 1
    %1856 = vrot.lane.b32.xlu0 %v1854, 126
    %v1857 = vpop.permute.xlu0 %1856
    %1858 = vrot.lane.b32.xlu0 %v1855, 126
    %v1859 = vpop.permute.xlu0 %1858
    %v1862 = vadd.f32 %v1798, %v1857
    %v1863 = vadd.f32 %v1799, %v1859
    %s1864 = sld [smem:[#allocation7 + $0x4d]]
    %v1865 = vstv %s1864
    %v1866 = vmul.f32 %v1469, %v1865
    %v1867 = vmul.f32 %v1566, %v1865
    %v1870 = vrot.slane %v1866, 1
    %v1871 = vrot.slane %v1867, 1
    %1872 = vrot.lane.b32.xlu0 %v1870, 126
    %v1873 = vpop.permute.xlu0 %1872
    %1874 = vrot.lane.b32.xlu0 %v1871, 126
    %v1875 = vpop.permute.xlu0 %1874
    %v1878 = vadd.f32 %v1814, %v1873
    %v1879 = vadd.f32 %v1815, %v1875
    %s1880 = sld [smem:[#allocation7 + $0x71]]
    %v1881 = vstv %s1880
    %v1882 = vmul.f32 %v1469, %v1881
    %v1883 = vmul.f32 %v1566, %v1881
    %v1886 = vrot.slane %v1882, 1
    %v1887 = vrot.slane %v1883, 1
    %1888 = vrot.lane.b32.xlu0 %v1886, 126
    %v1889 = vpop.permute.xlu0 %1888
    %1890 = vrot.lane.b32.xlu0 %v1887, 126
    %v1891 = vpop.permute.xlu0 %1890
    %v1894 = vadd.f32 %v1830, %v1889
    %v1895 = vadd.f32 %v1831, %v1891
    %s1896 = sld [smem:[#allocation7 + $0x6]]
    %v1897 = vstv %s1896
    %v1898 = vmul.f32 %v1469, %v1897
    %v1899 = vmul.f32 %v1566, %v1897
    %v1902 = vrot.slane %v1898, 2
    %v1903 = vrot.slane %v1899, 2
    %v1906 = vadd.f32 %v1846, %v1902
    %v1907 = vadd.f32 %v1847, %v1903
    %s1908 = sld [smem:[#allocation7 + $0x2a]]
    %v1909 = vstv %s1908
    %v1910 = vmul.f32 %v1469, %v1909
    %v1911 = vmul.f32 %v1566, %v1909
    %v1914 = vrot.slane %v1910, 2
    %v1915 = vrot.slane %v1911, 2
    %v1918 = vadd.f32 %v1862, %v1914
    %v1919 = vadd.f32 %v1863, %v1915
    %s1920 = sld [smem:[#allocation7 + $0x4e]]
    %v1921 = vstv %s1920
    %v1922 = vmul.f32 %v1469, %v1921
    %v1923 = vmul.f32 %v1566, %v1921
    %v1926 = vrot.slane %v1922, 2
    %v1927 = vrot.slane %v1923, 2
    %v1930 = vadd.f32 %v1878, %v1926
    %v1931 = vadd.f32 %v1879, %v1927
    %s1932 = sld [smem:[#allocation7 + $0x72]]
    %v1933 = vstv %s1932
    %v1934 = vmul.f32 %v1469, %v1933
    %v1935 = vmul.f32 %v1566, %v1933
    %v1938 = vrot.slane %v1934, 2
    %v1939 = vrot.slane %v1935, 2
    %v1942 = vadd.f32 %v1894, %v1938
    %v1943 = vadd.f32 %v1895, %v1939
    %s1944 = sld [smem:[#allocation7 + $0x7]]
    %v1945 = vstv %s1944
    %v1946 = vmul.f32 %v1469, %v1945
    %v1947 = vmul.f32 %v1566, %v1945
    %v1950 = vrot.slane %v1946, 2
    %v1951 = vrot.slane %v1947, 2
    %1952 = vrot.lane.b32.xlu0 %v1950, 127
    %v1953 = vpop.permute.xlu0 %1952
    %1954 = vrot.lane.b32.xlu0 %v1951, 127
    %v1955 = vpop.permute.xlu0 %1954
    %v1958 = vadd.f32 %v1906, %v1953
    %v1959 = vadd.f32 %v1907, %v1955
    %s1960 = sld [smem:[#allocation7 + $0x2b]]
    %v1961 = vstv %s1960
    %v1962 = vmul.f32 %v1469, %v1961
    %v1963 = vmul.f32 %v1566, %v1961
    %v1966 = vrot.slane %v1962, 2
    %v1967 = vrot.slane %v1963, 2
    %1968 = vrot.lane.b32.xlu0 %v1966, 127
    %v1969 = vpop.permute.xlu0 %1968
    %1970 = vrot.lane.b32.xlu0 %v1967, 127
    %v1971 = vpop.permute.xlu0 %1970
    %v1974 = vadd.f32 %v1918, %v1969
    %v1975 = vadd.f32 %v1919, %v1971
    %s1976 = sld [smem:[#allocation7 + $0x4f]]
    %v1977 = vstv %s1976
    %v1978 = vmul.f32 %v1469, %v1977
    %v1979 = vmul.f32 %v1566, %v1977
    %v1982 = vrot.slane %v1978, 2
    %v1983 = vrot.slane %v1979, 2
    %1984 = vrot.lane.b32.xlu0 %v1982, 127
    %v1985 = vpop.permute.xlu0 %1984
    %1986 = vrot.lane.b32.xlu0 %v1983, 127
    %v1987 = vpop.permute.xlu0 %1986
    %v1990 = vadd.f32 %v1930, %v1985
    %v1991 = vadd.f32 %v1931, %v1987
    %s1992 = sld [smem:[#allocation7 + $0x73]]
    %v1993 = vstv %s1992
    %v1994 = vmul.f32 %v1469, %v1993
    %v1995 = vmul.f32 %v1566, %v1993
    %v1998 = vrot.slane %v1994, 2
    %v1999 = vrot.slane %v1995, 2
    %2000 = vrot.lane.b32.xlu0 %v1998, 127
    %v2001 = vpop.permute.xlu0 %2000
    %2002 = vrot.lane.b32.xlu0 %v1999, 127
    %v2003 = vpop.permute.xlu0 %2002
    %v2006 = vadd.f32 %v1942, %v2001
    %v2007 = vadd.f32 %v1943, %v2003
    %s2008 = sld [smem:[#allocation7 + $0x8]]
    %v2009 = vstv %s2008
    %v2010 = vmul.f32 %v1469, %v2009
    %v2011 = vmul.f32 %v1566, %v2009
    %v2014 = vrot.slane %v2010, 2
    %v2015 = vrot.slane %v2011, 2
    %2016 = vrot.lane.b32.xlu0 %v2014, 126
    %v2017 = vpop.permute.xlu0 %2016
    %2018 = vrot.lane.b32.xlu0 %v2015, 126
    %v2019 = vpop.permute.xlu0 %2018
    %v2022 = vadd.f32 %v1958, %v2017
    %v2023 = vadd.f32 %v1959, %v2019
    %s2024 = sld [smem:[#allocation7 + $0x2c]]
    %v2025 = vstv %s2024
    %v2026 = vmul.f32 %v1469, %v2025
    %v2027 = vmul.f32 %v1566, %v2025
    %v2030 = vrot.slane %v2026, 2
    %v2031 = vrot.slane %v2027, 2
    %2032 = vrot.lane.b32.xlu0 %v2030, 126
    %v2033 = vpop.permute.xlu0 %2032
    %2034 = vrot.lane.b32.xlu0 %v2031, 126
    %v2035 = vpop.permute.xlu0 %2034
    %v2038 = vadd.f32 %v1974, %v2033
    %v2039 = vadd.f32 %v1975, %v2035
    %s2040 = sld [smem:[#allocation7 + $0x50]]
    %v2041 = vstv %s2040
    %v2042 = vmul.f32 %v1469, %v2041
    %v2043 = vmul.f32 %v1566, %v2041
    %v2046 = vrot.slane %v2042, 2
    %v2047 = vrot.slane %v2043, 2
    %2048 = vrot.lane.b32.xlu0 %v2046, 126
    %v2049 = vpop.permute.xlu0 %2048
    %2050 = vrot.lane.b32.xlu0 %v2047, 126
    %v2051 = vpop.permute.xlu0 %2050
    %v2054 = vadd.f32 %v1990, %v2049
    %v2055 = vadd.f32 %v1991, %v2051
    %s2056 = sld [smem:[#allocation7 + $0x74]]
    %v2057 = vstv %s2056
    %v2058 = vmul.f32 %v1469, %v2057
    %v2059 = vmul.f32 %v1566, %v2057
    %v2062 = vrot.slane %v2058, 2
    %v2063 = vrot.slane %v2059, 2
    %2064 = vrot.lane.b32.xlu0 %v2062, 126
    %v2065 = vpop.permute.xlu0 %2064
    %2066 = vrot.lane.b32.xlu0 %v2063, 126
    %v2067 = vpop.permute.xlu0 %2066
    %v2070 = vadd.f32 %v2006, %v2065
    %v2071 = vadd.f32 %v2007, %v2067
    %s2072 = sld [smem:[#allocation7 + $0x9]]
    %v2073 = vstv %s2072
    %v2074 = vmul.f32 %v1469, %v2073
    %v2075 = vmul.f32 %v1474, %v2073
    %v2076 = vmul.f32 %v1566, %v2073
    %v2077 = vmul.f32 %v1571, %v2073
    %v2082 = vrot.slane %v2074, 7
    %v2083 = vrot.slane %v2075, 7
    %v2084 = vsel %vm1227, %v2082, %v2083
    %v2085 = vrot.slane %v2076, 7
    %v2086 = vrot.slane %v2077, 7
    %v2087 = vsel %vm1227, %v2085, %v2086
    %v2090 = vadd.f32 %v2022, %v2084
    %v2091 = vadd.f32 %v2023, %v2087
    %s2092 = sld [smem:[#allocation7 + $0x2d]]
    %v2093 = vstv %s2092
    %v2094 = vmul.f32 %v1469, %v2093
    %v2095 = vmul.f32 %v1474, %v2093
    %v2096 = vmul.f32 %v1566, %v2093
    %v2097 = vmul.f32 %v1571, %v2093
    %v2102 = vrot.slane %v2094, 7
    %v2103 = vrot.slane %v2095, 7
    %v2104 = vsel %vm1227, %v2102, %v2103
    %v2105 = vrot.slane %v2096, 7
    %v2106 = vrot.slane %v2097, 7
    %v2107 = vsel %vm1227, %v2105, %v2106
    %v2110 = vadd.f32 %v2038, %v2104
    %v2111 = vadd.f32 %v2039, %v2107
    %s2112 = sld [smem:[#allocation7 + $0x51]]
    %v2113 = vstv %s2112
    %v2114 = vmul.f32 %v1469, %v2113
    %v2115 = vmul.f32 %v1474, %v2113
    %v2116 = vmul.f32 %v1566, %v2113
    %v2117 = vmul.f32 %v1571, %v2113
    %v2122 = vrot.slane %v2114, 7
    %v2123 = vrot.slane %v2115, 7
    %v2124 = vsel %vm1227, %v2122, %v2123
    %v2125 = vrot.slane %v2116, 7
    %v2126 = vrot.slane %v2117, 7
    %v2127 = vsel %vm1227, %v2125, %v2126
    %v2130 = vadd.f32 %v2054, %v2124
    %v2131 = vadd.f32 %v2055, %v2127
    %s2132 = sld [smem:[#allocation7 + $0x75]]
    %v2133 = vstv %s2132
    %v2134 = vmul.f32 %v1469, %v2133
    %v2135 = vmul.f32 %v1474, %v2133
    %v2136 = vmul.f32 %v1566, %v2133
    %v2137 = vmul.f32 %v1571, %v2133
    %v2142 = vrot.slane %v2134, 7
    %v2143 = vrot.slane %v2135, 7
    %v2144 = vsel %vm1227, %v2142, %v2143
    %v2145 = vrot.slane %v2136, 7
    %v2146 = vrot.slane %v2137, 7
    %v2147 = vsel %vm1227, %v2145, %v2146
    %v2150 = vadd.f32 %v2070, %v2144
    %v2151 = vadd.f32 %v2071, %v2147
    %s2152 = sld [smem:[#allocation7 + $0xa]]
    %v2153 = vstv %s2152
    %v2154 = vmul.f32 %v1469, %v2153
    %v2155 = vmul.f32 %v1474, %v2153
    %v2156 = vmul.f32 %v1566, %v2153
    %v2157 = vmul.f32 %v1571, %v2153
    %v2162 = vrot.slane %v2154, 7
    %v2163 = vrot.slane %v2155, 7
    %v2164 = vsel %vm1227, %v2162, %v2163
    %v2165 = vrot.slane %v2156, 7
    %v2166 = vrot.slane %v2157, 7
    %v2167 = vsel %vm1227, %v2165, %v2166
    %2168 = vrot.lane.b32.xlu0 %v2164, 127
    %v2169 = vpop.permute.xlu0 %2168
    %2170 = vrot.lane.b32.xlu0 %v2167, 127
    %v2171 = vpop.permute.xlu0 %2170
    %v2174 = vadd.f32 %v2090, %v2169
    %v2175 = vadd.f32 %v2091, %v2171
    %s2176 = sld [smem:[#allocation7 + $0x2e]]
    %v2177 = vstv %s2176
    %v2178 = vmul.f32 %v1469, %v2177
    %v2179 = vmul.f32 %v1474, %v2177
    %v2180 = vmul.f32 %v1566, %v2177
    %v2181 = vmul.f32 %v1571, %v2177
    %v2186 = vrot.slane %v2178, 7
    %v2187 = vrot.slane %v2179, 7
    %v2188 = vsel %vm1227, %v2186, %v2187
    %v2189 = vrot.slane %v2180, 7
    %v2190 = vrot.slane %v2181, 7
    %v2191 = vsel %vm1227, %v2189, %v2190
    %2192 = vrot.lane.b32.xlu0 %v2188, 127
    %v2193 = vpop.permute.xlu0 %2192
    %2194 = vrot.lane.b32.xlu0 %v2191, 127
    %v2195 = vpop.permute.xlu0 %2194
    %v2198 = vadd.f32 %v2110, %v2193
    %v2199 = vadd.f32 %v2111, %v2195
    %s2200 = sld [smem:[#allocation7 + $0x52]]
    %v2201 = vstv %s2200
    %v2202 = vmul.f32 %v1469, %v2201
    %v2203 = vmul.f32 %v1474, %v2201
    %v2204 = vmul.f32 %v1566, %v2201
    %v2205 = vmul.f32 %v1571, %v2201
    %v2210 = vrot.slane %v2202, 7
    %v2211 = vrot.slane %v2203, 7
    %v2212 = vsel %vm1227, %v2210, %v2211
    %v2213 = vrot.slane %v2204, 7
    %v2214 = vrot.slane %v2205, 7
    %v2215 = vsel %vm1227, %v2213, %v2214
    %2216 = vrot.lane.b32.xlu0 %v2212, 127
    %v2217 = vpop.permute.xlu0 %2216
    %2218 = vrot.lane.b32.xlu0 %v2215, 127
    %v2219 = vpop.permute.xlu0 %2218
    %v2222 = vadd.f32 %v2130, %v2217
    %v2223 = vadd.f32 %v2131, %v2219
    %s2224 = sld [smem:[#allocation7 + $0x76]]
    %v2225 = vstv %s2224
    %v2226 = vmul.f32 %v1469, %v2225
    %v2227 = vmul.f32 %v1474, %v2225
    %v2228 = vmul.f32 %v1566, %v2225
    %v2229 = vmul.f32 %v1571, %v2225
    %v2234 = vrot.slane %v2226, 7
    %v2235 = vrot.slane %v2227, 7
    %v2236 = vsel %vm1227, %v2234, %v2235
    %v2237 = vrot.slane %v2228, 7
    %v2238 = vrot.slane %v2229, 7
    %v2239 = vsel %vm1227, %v2237, %v2238
    %2240 = vrot.lane.b32.xlu0 %v2236, 127
    %v2241 = vpop.permute.xlu0 %2240
    %2242 = vrot.lane.b32.xlu0 %v2239, 127
    %v2243 = vpop.permute.xlu0 %2242
    %v2246 = vadd.f32 %v2150, %v2241
    %v2247 = vadd.f32 %v2151, %v2243
    %s2248 = sld [smem:[#allocation7 + $0xb]]
    %v2249 = vstv %s2248
    %v2250 = vmul.f32 %v1469, %v2249
    %v2251 = vmul.f32 %v1474, %v2249
    %v2252 = vmul.f32 %v1566, %v2249
    %v2253 = vmul.f32 %v1571, %v2249
    %v2258 = vrot.slane %v2250, 7
    %v2259 = vrot.slane %v2251, 7
    %v2260 = vsel %vm1227, %v2258, %v2259
    %v2261 = vrot.slane %v2252, 7
    %v2262 = vrot.slane %v2253, 7
    %v2263 = vsel %vm1227, %v2261, %v2262
    %2264 = vrot.lane.b32.xlu0 %v2260, 126
    %v2265 = vpop.permute.xlu0 %2264
    %2266 = vrot.lane.b32.xlu0 %v2263, 126
    %v2267 = vpop.permute.xlu0 %2266
    %v2270 = vadd.f32 %v2174, %v2265
    %v2271 = vadd.f32 %v2175, %v2267
    %s2272 = sld [smem:[#allocation7 + $0x2f]]
    %v2273 = vstv %s2272
    %v2274 = vmul.f32 %v1469, %v2273
    %v2275 = vmul.f32 %v1474, %v2273
    %v2276 = vmul.f32 %v1566, %v2273
    %v2277 = vmul.f32 %v1571, %v2273
    %v2282 = vrot.slane %v2274, 7
    %v2283 = vrot.slane %v2275, 7
    %v2284 = vsel %vm1227, %v2282, %v2283
    %v2285 = vrot.slane %v2276, 7
    %v2286 = vrot.slane %v2277, 7
    %v2287 = vsel %vm1227, %v2285, %v2286
    %2288 = vrot.lane.b32.xlu0 %v2284, 126
    %v2289 = vpop.permute.xlu0 %2288
    %2290 = vrot.lane.b32.xlu0 %v2287, 126
    %v2291 = vpop.permute.xlu0 %2290
    %v2294 = vadd.f32 %v2198, %v2289
    %v2295 = vadd.f32 %v2199, %v2291
    %s2296 = sld [smem:[#allocation7 + $0x53]]
    %v2297 = vstv %s2296
    %v2298 = vmul.f32 %v1469, %v2297
    %v2299 = vmul.f32 %v1474, %v2297
    %v2300 = vmul.f32 %v1566, %v2297
    %v2301 = vmul.f32 %v1571, %v2297
    %v2306 = vrot.slane %v2298, 7
    %v2307 = vrot.slane %v2299, 7
    %v2308 = vsel %vm1227, %v2306, %v2307
    %v2309 = vrot.slane %v2300, 7
    %v2310 = vrot.slane %v2301, 7
    %v2311 = vsel %vm1227, %v2309, %v2310
    %2312 = vrot.lane.b32.xlu0 %v2308, 126
    %v2313 = vpop.permute.xlu0 %2312
    %2314 = vrot.lane.b32.xlu0 %v2311, 126
    %v2315 = vpop.permute.xlu0 %2314
    %v2318 = vadd.f32 %v2222, %v2313
    %v2319 = vadd.f32 %v2223, %v2315
    %s2320 = sld [smem:[#allocation7 + $0x77]]
    %v2321 = vstv %s2320
    %v2322 = vmul.f32 %v1469, %v2321
    %v2323 = vmul.f32 %v1474, %v2321
    %v2324 = vmul.f32 %v1566, %v2321
    %v2325 = vmul.f32 %v1571, %v2321
    %v2330 = vrot.slane %v2322, 7
    %v2331 = vrot.slane %v2323, 7
    %v2332 = vsel %vm1227, %v2330, %v2331
    %v2333 = vrot.slane %v2324, 7
    %v2334 = vrot.slane %v2325, 7
    %v2335 = vsel %vm1227, %v2333, %v2334
    %2336 = vrot.lane.b32.xlu0 %v2332, 126
    %v2337 = vpop.permute.xlu0 %2336
    %2338 = vrot.lane.b32.xlu0 %v2335, 126
    %v2339 = vpop.permute.xlu0 %2338
    %v2342 = vadd.f32 %v2246, %v2337
    %v2343 = vadd.f32 %v2247, %v2339
    %s2344 = sld [smem:[#allocation7 + $0xc]]
    %v2345 = vstv %s2344
    %v2346 = vmul.f32 %v1474, %v2345
    %v2347 = vmul.f32 %v1571, %v2345
    %v2348 = vadd.f32 %v2270, %v2346
    %v2349 = vadd.f32 %v2271, %v2347
    %s2350 = sld [smem:[#allocation7 + $0x30]]
    %v2351 = vstv %s2350
    %v2352 = vmul.f32 %v1474, %v2351
    %v2353 = vmul.f32 %v1571, %v2351
    %v2354 = vadd.f32 %v2294, %v2352
    %v2355 = vadd.f32 %v2295, %v2353
    %s2356 = sld [smem:[#allocation7 + $0x54]]
    %v2357 = vstv %s2356
    %v2358 = vmul.f32 %v1474, %v2357
    %v2359 = vmul.f32 %v1571, %v2357
    %v2360 = vadd.f32 %v2318, %v2358
    %v2361 = vadd.f32 %v2319, %v2359
    %s2362 = sld [smem:[#allocation7 + $0x78]]
    %v2363 = vstv %s2362
    %v2364 = vmul.f32 %v1474, %v2363
    %v2365 = vmul.f32 %v1571, %v2363
    %v2366 = vadd.f32 %v2342, %v2364
    %v2367 = vadd.f32 %v2343, %v2365
    %s2368 = sld [smem:[#allocation7 + $0xd]]
    %v2369 = vstv %s2368
    %v2370 = vmul.f32 %v1474, %v2369
    %v2371 = vmul.f32 %v1571, %v2369
    %2374 = vrot.lane.b32.xlu0 %v2370, 127
    %v2375 = vpop.permute.xlu0 %2374
    %2376 = vrot.lane.b32.xlu0 %v2371, 127
    %v2377 = vpop.permute.xlu0 %2376
    %v2380 = vadd.f32 %v2348, %v2375
    %v2381 = vadd.f32 %v2349, %v2377
    %s2382 = sld [smem:[#allocation7 + $0x31]]
    %v2383 = vstv %s2382
    %v2384 = vmul.f32 %v1474, %v2383
    %v2385 = vmul.f32 %v1571, %v2383
    %2388 = vrot.lane.b32.xlu0 %v2384, 127
    %v2389 = vpop.permute.xlu0 %2388
    %2390 = vrot.lane.b32.xlu0 %v2385, 127
    %v2391 = vpop.permute.xlu0 %2390
    %v2394 = vadd.f32 %v2354, %v2389
    %v2395 = vadd.f32 %v2355, %v2391
    %s2396 = sld [smem:[#allocation7 + $0x55]]
    %v2397 = vstv %s2396
    %v2398 = vmul.f32 %v1474, %v2397
    %v2399 = vmul.f32 %v1571, %v2397
    %2402 = vrot.lane.b32.xlu0 %v2398, 127
    %v2403 = vpop.permute.xlu0 %2402
    %2404 = vrot.lane.b32.xlu0 %v2399, 127
    %v2405 = vpop.permute.xlu0 %2404
    %v2408 = vadd.f32 %v2360, %v2403
    %v2409 = vadd.f32 %v2361, %v2405
    %s2410 = sld [smem:[#allocation7 + $0x79]]
    %v2411 = vstv %s2410
    %v2412 = vmul.f32 %v1474, %v2411
    %v2413 = vmul.f32 %v1571, %v2411
    %2416 = vrot.lane.b32.xlu0 %v2412, 127
    %v2417 = vpop.permute.xlu0 %2416
    %2418 = vrot.lane.b32.xlu0 %v2413, 127
    %v2419 = vpop.permute.xlu0 %2418
    %v2422 = vadd.f32 %v2366, %v2417
    %v2423 = vadd.f32 %v2367, %v2419
    %s2424 = sld [smem:[#allocation7 + $0xe]]
    %v2425 = vstv %s2424
    %v2426 = vmul.f32 %v1474, %v2425
    %v2427 = vmul.f32 %v1571, %v2425
    %2430 = vrot.lane.b32.xlu0 %v2426, 126
    %v2431 = vpop.permute.xlu0 %2430
    %2432 = vrot.lane.b32.xlu0 %v2427, 126
    %v2433 = vpop.permute.xlu0 %2432
    %v2436 = vadd.f32 %v2380, %v2431
    %v2437 = vadd.f32 %v2381, %v2433
    %s2438 = sld [smem:[#allocation7 + $0x32]]
    %v2439 = vstv %s2438
    %v2440 = vmul.f32 %v1474, %v2439
    %v2441 = vmul.f32 %v1571, %v2439
    %2444 = vrot.lane.b32.xlu0 %v2440, 126
    %v2445 = vpop.permute.xlu0 %2444
    %2446 = vrot.lane.b32.xlu0 %v2441, 126
    %v2447 = vpop.permute.xlu0 %2446
    %v2450 = vadd.f32 %v2394, %v2445
    %v2451 = vadd.f32 %v2395, %v2447
    %s2452 = sld [smem:[#allocation7 + $0x56]]
    %v2453 = vstv %s2452
    %v2454 = vmul.f32 %v1474, %v2453
    %v2455 = vmul.f32 %v1571, %v2453
    %2458 = vrot.lane.b32.xlu0 %v2454, 126
    %v2459 = vpop.permute.xlu0 %2458
    %2460 = vrot.lane.b32.xlu0 %v2455, 126
    %v2461 = vpop.permute.xlu0 %2460
    %v2464 = vadd.f32 %v2408, %v2459
    %v2465 = vadd.f32 %v2409, %v2461
    %s2466 = sld [smem:[#allocation7 + $0x7a]]
    %v2467 = vstv %s2466
    %v2468 = vmul.f32 %v1474, %v2467
    %v2469 = vmul.f32 %v1571, %v2467
    %2472 = vrot.lane.b32.xlu0 %v2468, 126
    %v2473 = vpop.permute.xlu0 %2472
    %2474 = vrot.lane.b32.xlu0 %v2469, 126
    %v2475 = vpop.permute.xlu0 %2474
    %v2478 = vadd.f32 %v2422, %v2473
    %v2479 = vadd.f32 %v2423, %v2475
    %s2480 = sld [smem:[#allocation7 + $0xf]]
    %v2481 = vstv %s2480
    %v2482 = vmul.f32 %v1474, %v2481
    %v2483 = vmul.f32 %v1571, %v2481
    %v2486 = vrot.slane %v2482, 1
    %v2487 = vrot.slane %v2483, 1
    %v2490 = vadd.f32 %v2436, %v2486
    %v2491 = vadd.f32 %v2437, %v2487
    %s2492 = sld [smem:[#allocation7 + $0x33]]
    %v2493 = vstv %s2492
    %v2494 = vmul.f32 %v1474, %v2493
    %v2495 = vmul.f32 %v1571, %v2493
    %v2498 = vrot.slane %v2494, 1
    %v2499 = vrot.slane %v2495, 1
    %v2502 = vadd.f32 %v2450, %v2498
    %v2503 = vadd.f32 %v2451, %v2499
    %s2504 = sld [smem:[#allocation7 + $0x57]]
    %v2505 = vstv %s2504
    %v2506 = vmul.f32 %v1474, %v2505
    %v2507 = vmul.f32 %v1571, %v2505
    %v2510 = vrot.slane %v2506, 1
    %v2511 = vrot.slane %v2507, 1
    %v2514 = vadd.f32 %v2464, %v2510
    %v2515 = vadd.f32 %v2465, %v2511
    %s2516 = sld [smem:[#allocation7 + $0x7b]]
    %v2517 = vstv %s2516
    %v2518 = vmul.f32 %v1474, %v2517
    %v2519 = vmul.f32 %v1571, %v2517
    %v2522 = vrot.slane %v2518, 1
    %v2523 = vrot.slane %v2519, 1
    %v2526 = vadd.f32 %v2478, %v2522
    %v2527 = vadd.f32 %v2479, %v2523
    %s2528 = sld [smem:[#allocation7 + $0x10]]
    %v2529 = vstv %s2528
    %v2530 = vmul.f32 %v1474, %v2529
    %v2531 = vmul.f32 %v1571, %v2529
    %v2534 = vrot.slane %v2530, 1
    %v2535 = vrot.slane %v2531, 1
    %2536 = vrot.lane.b32.xlu0 %v2534, 127
    %v2537 = vpop.permute.xlu0 %2536
    %2538 = vrot.lane.b32.xlu0 %v2535, 127
    %v2539 = vpop.permute.xlu0 %2538
    %v2542 = vadd.f32 %v2490, %v2537
    %v2543 = vadd.f32 %v2491, %v2539
    %s2544 = sld [smem:[#allocation7 + $0x34]]
    %v2545 = vstv %s2544
    %v2546 = vmul.f32 %v1474, %v2545
    %v2547 = vmul.f32 %v1571, %v2545
    %v2550 = vrot.slane %v2546, 1
    %v2551 = vrot.slane %v2547, 1
    %2552 = vrot.lane.b32.xlu0 %v2550, 127
    %v2553 = vpop.permute.xlu0 %2552
    %2554 = vrot.lane.b32.xlu0 %v2551, 127
    %v2555 = vpop.permute.xlu0 %2554
    %v2558 = vadd.f32 %v2502, %v2553
    %v2559 = vadd.f32 %v2503, %v2555
    %s2560 = sld [smem:[#allocation7 + $0x58]]
    %v2561 = vstv %s2560
    %v2562 = vmul.f32 %v1474, %v2561
    %v2563 = vmul.f32 %v1571, %v2561
    %v2566 = vrot.slane %v2562, 1
    %v2567 = vrot.slane %v2563, 1
    %2568 = vrot.lane.b32.xlu0 %v2566, 127
    %v2569 = vpop.permute.xlu0 %2568
    %2570 = vrot.lane.b32.xlu0 %v2567, 127
    %v2571 = vpop.permute.xlu0 %2570
    %v2574 = vadd.f32 %v2514, %v2569
    %v2575 = vadd.f32 %v2515, %v2571
    %s2576 = sld [smem:[#allocation7 + $0x7c]]
    %v2577 = vstv %s2576
    %v2578 = vmul.f32 %v1474, %v2577
    %v2579 = vmul.f32 %v1571, %v2577
    %v2582 = vrot.slane %v2578, 1
    %v2583 = vrot.slane %v2579, 1
    %2584 = vrot.lane.b32.xlu0 %v2582, 127
    %v2585 = vpop.permute.xlu0 %2584
    %2586 = vrot.lane.b32.xlu0 %v2583, 127
    %v2587 = vpop.permute.xlu0 %2586
    %v2590 = vadd.f32 %v2526, %v2585
    %v2591 = vadd.f32 %v2527, %v2587
    %s2592 = sld [smem:[#allocation7 + $0x11]]
    %v2593 = vstv %s2592
    %v2594 = vmul.f32 %v1474, %v2593
    %v2595 = vmul.f32 %v1571, %v2593
    %v2598 = vrot.slane %v2594, 1
    %v2599 = vrot.slane %v2595, 1
    %2600 = vrot.lane.b32.xlu0 %v2598, 126
    %v2601 = vpop.permute.xlu0 %2600
    %2602 = vrot.lane.b32.xlu0 %v2599, 126
    %v2603 = vpop.permute.xlu0 %2602
    %v2606 = vadd.f32 %v2542, %v2601
    %v2607 = vadd.f32 %v2543, %v2603
    %s2608 = sld [smem:[#allocation7 + $0x35]]
    %v2609 = vstv %s2608
    %v2610 = vmul.f32 %v1474, %v2609
    %v2611 = vmul.f32 %v1571, %v2609
    %v2614 = vrot.slane %v2610, 1
    %v2615 = vrot.slane %v2611, 1
    %2616 = vrot.lane.b32.xlu0 %v2614, 126
    %v2617 = vpop.permute.xlu0 %2616
    %2618 = vrot.lane.b32.xlu0 %v2615, 126
    %v2619 = vpop.permute.xlu0 %2618
    %v2622 = vadd.f32 %v2558, %v2617
    %v2623 = vadd.f32 %v2559, %v2619
    %s2624 = sld [smem:[#allocation7 + $0x59]]
    %v2625 = vstv %s2624
    %v2626 = vmul.f32 %v1474, %v2625
    %v2627 = vmul.f32 %v1571, %v2625
    %v2630 = vrot.slane %v2626, 1
    %v2631 = vrot.slane %v2627, 1
    %2632 = vrot.lane.b32.xlu0 %v2630, 126
    %v2633 = vpop.permute.xlu0 %2632
    %2634 = vrot.lane.b32.xlu0 %v2631, 126
    %v2635 = vpop.permute.xlu0 %2634
    %v2638 = vadd.f32 %v2574, %v2633
    %v2639 = vadd.f32 %v2575, %v2635
    %s2640 = sld [smem:[#allocation7 + $0x7d]]
    %v2641 = vstv %s2640
    %v2642 = vmul.f32 %v1474, %v2641
    %v2643 = vmul.f32 %v1571, %v2641
    %v2646 = vrot.slane %v2642, 1
    %v2647 = vrot.slane %v2643, 1
    %2648 = vrot.lane.b32.xlu0 %v2646, 126
    %v2649 = vpop.permute.xlu0 %2648
    %2650 = vrot.lane.b32.xlu0 %v2647, 126
    %v2651 = vpop.permute.xlu0 %2650
    %v2654 = vadd.f32 %v2590, %v2649
    %v2655 = vadd.f32 %v2591, %v2651
    %s2656 = sld [smem:[#allocation7 + $0x12]]
    %v2657 = vstv %s2656
    %v2658 = vmul.f32 %v1474, %v2657
    %v2659 = vmul.f32 %v1479, %v2657
    %v2660 = vmul.f32 %v1571, %v2657
    %v2661 = vmul.f32 %v1576, %v2657
    %v2666 = vrot.slane %v2658, 6
    %v2667 = vrot.slane %v2659, 6
    %v2668 = vsel %vm1230, %v2666, %v2667
    %v2669 = vrot.slane %v2660, 6
    %v2670 = vrot.slane %v2661, 6
    %v2671 = vsel %vm1230, %v2669, %v2670
    %v2674 = vadd.f32 %v2606, %v2668
    %v2675 = vadd.f32 %v2607, %v2671
    %s2676 = sld [smem:[#allocation7 + $0x36]]
    %v2677 = vstv %s2676
    %v2678 = vmul.f32 %v1474, %v2677
    %v2679 = vmul.f32 %v1479, %v2677
    %v2680 = vmul.f32 %v1571, %v2677
    %v2681 = vmul.f32 %v1576, %v2677
    %v2686 = vrot.slane %v2678, 6
    %v2687 = vrot.slane %v2679, 6
    %v2688 = vsel %vm1230, %v2686, %v2687
    %v2689 = vrot.slane %v2680, 6
    %v2690 = vrot.slane %v2681, 6
    %v2691 = vsel %vm1230, %v2689, %v2690
    %v2694 = vadd.f32 %v2622, %v2688
    %v2695 = vadd.f32 %v2623, %v2691
    %s2696 = sld [smem:[#allocation7 + $0x5a]]
    %v2697 = vstv %s2696
    %v2698 = vmul.f32 %v1474, %v2697
    %v2699 = vmul.f32 %v1479, %v2697
    %v2700 = vmul.f32 %v1571, %v2697
    %v2701 = vmul.f32 %v1576, %v2697
    %v2706 = vrot.slane %v2698, 6
    %v2707 = vrot.slane %v2699, 6
    %v2708 = vsel %vm1230, %v2706, %v2707
    %v2709 = vrot.slane %v2700, 6
    %v2710 = vrot.slane %v2701, 6
    %v2711 = vsel %vm1230, %v2709, %v2710
    %v2714 = vadd.f32 %v2638, %v2708
    %v2715 = vadd.f32 %v2639, %v2711
    %s2716 = sld [smem:[#allocation7 + $0x7e]]
    %v2717 = vstv %s2716
    %v2718 = vmul.f32 %v1474, %v2717
    %v2719 = vmul.f32 %v1479, %v2717
    %v2720 = vmul.f32 %v1571, %v2717
    %v2721 = vmul.f32 %v1576, %v2717
    %v2726 = vrot.slane %v2718, 6
    %v2727 = vrot.slane %v2719, 6
    %v2728 = vsel %vm1230, %v2726, %v2727
    %v2729 = vrot.slane %v2720, 6
    %v2730 = vrot.slane %v2721, 6
    %v2731 = vsel %vm1230, %v2729, %v2730
    %v2734 = vadd.f32 %v2654, %v2728
    %v2735 = vadd.f32 %v2655, %v2731
    %s2736 = sld [smem:[#allocation7 + $0x13]]
    %v2737 = vstv %s2736
    %v2738 = vmul.f32 %v1474, %v2737
    %v2739 = vmul.f32 %v1479, %v2737
    %v2740 = vmul.f32 %v1571, %v2737
    %v2741 = vmul.f32 %v1576, %v2737
    %v2746 = vrot.slane %v2738, 6
    %v2747 = vrot.slane %v2739, 6
    %v2748 = vsel %vm1230, %v2746, %v2747
    %v2749 = vrot.slane %v2740, 6
    %v2750 = vrot.slane %v2741, 6
    %v2751 = vsel %vm1230, %v2749, %v2750
    %2752 = vrot.lane.b32.xlu0 %v2748, 127
    %v2753 = vpop.permute.xlu0 %2752
    %2754 = vrot.lane.b32.xlu0 %v2751, 127
    %v2755 = vpop.permute.xlu0 %2754
    %v2758 = vadd.f32 %v2674, %v2753
    %v2759 = vadd.f32 %v2675, %v2755
    %s2760 = sld [smem:[#allocation7 + $0x37]]
    %v2761 = vstv %s2760
    %v2762 = vmul.f32 %v1474, %v2761
    %v2763 = vmul.f32 %v1479, %v2761
    %v2764 = vmul.f32 %v1571, %v2761
    %v2765 = vmul.f32 %v1576, %v2761
    %v2770 = vrot.slane %v2762, 6
    %v2771 = vrot.slane %v2763, 6
    %v2772 = vsel %vm1230, %v2770, %v2771
    %v2773 = vrot.slane %v2764, 6
    %v2774 = vrot.slane %v2765, 6
    %v2775 = vsel %vm1230, %v2773, %v2774
    %2776 = vrot.lane.b32.xlu0 %v2772, 127
    %v2777 = vpop.permute.xlu0 %2776
    %2778 = vrot.lane.b32.xlu0 %v2775, 127
    %v2779 = vpop.permute.xlu0 %2778
    %v2782 = vadd.f32 %v2694, %v2777
    %v2783 = vadd.f32 %v2695, %v2779
    %s2784 = sld [smem:[#allocation7 + $0x5b]]
    %v2785 = vstv %s2784
    %v2786 = vmul.f32 %v1474, %v2785
    %v2787 = vmul.f32 %v1479, %v2785
    %v2788 = vmul.f32 %v1571, %v2785
    %v2789 = vmul.f32 %v1576, %v2785
    %v2794 = vrot.slane %v2786, 6
    %v2795 = vrot.slane %v2787, 6
    %v2796 = vsel %vm1230, %v2794, %v2795
    %v2797 = vrot.slane %v2788, 6
    %v2798 = vrot.slane %v2789, 6
    %v2799 = vsel %vm1230, %v2797, %v2798
    %2800 = vrot.lane.b32.xlu0 %v2796, 127
    %v2801 = vpop.permute.xlu0 %2800
    %2802 = vrot.lane.b32.xlu0 %v2799, 127
    %v2803 = vpop.permute.xlu0 %2802
    %v2806 = vadd.f32 %v2714, %v2801
    %v2807 = vadd.f32 %v2715, %v2803
    %s2808 = sld [smem:[#allocation7 + $0x7f]]
    %v2809 = vstv %s2808
    %v2810 = vmul.f32 %v1474, %v2809
    %v2811 = vmul.f32 %v1479, %v2809
    %v2812 = vmul.f32 %v1571, %v2809
    %v2813 = vmul.f32 %v1576, %v2809
    %v2818 = vrot.slane %v2810, 6
    %v2819 = vrot.slane %v2811, 6
    %v2820 = vsel %vm1230, %v2818, %v2819
    %v2821 = vrot.slane %v2812, 6
    %v2822 = vrot.slane %v2813, 6
    %v2823 = vsel %vm1230, %v2821, %v2822
    %2824 = vrot.lane.b32.xlu0 %v2820, 127
    %v2825 = vpop.permute.xlu0 %2824
    %2826 = vrot.lane.b32.xlu0 %v2823, 127
    %v2827 = vpop.permute.xlu0 %2826
    %v2830 = vadd.f32 %v2734, %v2825
    %v2831 = vadd.f32 %v2735, %v2827
    %s2832 = sld [smem:[#allocation7 + $0x14]]
    %v2833 = vstv %s2832
    %v2834 = vmul.f32 %v1474, %v2833
    %v2835 = vmul.f32 %v1479, %v2833
    %v2836 = vmul.f32 %v1571, %v2833
    %v2837 = vmul.f32 %v1576, %v2833
    %v2842 = vrot.slane %v2834, 6
    %v2843 = vrot.slane %v2835, 6
    %v2844 = vsel %vm1230, %v2842, %v2843
    %v2845 = vrot.slane %v2836, 6
    %v2846 = vrot.slane %v2837, 6
    %v2847 = vsel %vm1230, %v2845, %v2846
    %2848 = vrot.lane.b32.xlu0 %v2844, 126
    %v2849 = vpop.permute.xlu0 %2848
    %2850 = vrot.lane.b32.xlu0 %v2847, 126
    %v2851 = vpop.permute.xlu0 %2850
    %v2854 = vadd.f32 %v2758, %v2849
    %v2855 = vadd.f32 %v2759, %v2851
    %s2856 = sld [smem:[#allocation7 + $0x38]]
    %v2857 = vstv %s2856
    %v2858 = vmul.f32 %v1474, %v2857
    %v2859 = vmul.f32 %v1479, %v2857
    %v2860 = vmul.f32 %v1571, %v2857
    %v2861 = vmul.f32 %v1576, %v2857
    %v2866 = vrot.slane %v2858, 6
    %v2867 = vrot.slane %v2859, 6
    %v2868 = vsel %vm1230, %v2866, %v2867
    %v2869 = vrot.slane %v2860, 6
    %v2870 = vrot.slane %v2861, 6
    %v2871 = vsel %vm1230, %v2869, %v2870
    %2872 = vrot.lane.b32.xlu0 %v2868, 126
    %v2873 = vpop.permute.xlu0 %2872
    %2874 = vrot.lane.b32.xlu0 %v2871, 126
    %v2875 = vpop.permute.xlu0 %2874
    %v2878 = vadd.f32 %v2782, %v2873
    %v2879 = vadd.f32 %v2783, %v2875
    %s2880 = sld [smem:[#allocation7 + $0x5c]]
    %v2881 = vstv %s2880
    %v2882 = vmul.f32 %v1474, %v2881
    %v2883 = vmul.f32 %v1479, %v2881
    %v2884 = vmul.f32 %v1571, %v2881
    %v2885 = vmul.f32 %v1576, %v2881
    %v2890 = vrot.slane %v2882, 6
    %v2891 = vrot.slane %v2883, 6
    %v2892 = vsel %vm1230, %v2890, %v2891
    %v2893 = vrot.slane %v2884, 6
    %v2894 = vrot.slane %v2885, 6
    %v2895 = vsel %vm1230, %v2893, %v2894
    %2896 = vrot.lane.b32.xlu0 %v2892, 126
    %v2897 = vpop.permute.xlu0 %2896
    %2898 = vrot.lane.b32.xlu0 %v2895, 126
    %v2899 = vpop.permute.xlu0 %2898
    %v2902 = vadd.f32 %v2806, %v2897
    %v2903 = vadd.f32 %v2807, %v2899
    %s2904 = sld [smem:[#allocation7 + $0x80]]
    %v2905 = vstv %s2904
    %v2906 = vmul.f32 %v1474, %v2905
    %v2907 = vmul.f32 %v1479, %v2905
    %v2908 = vmul.f32 %v1571, %v2905
    %v2909 = vmul.f32 %v1576, %v2905
    %v2914 = vrot.slane %v2906, 6
    %v2915 = vrot.slane %v2907, 6
    %v2916 = vsel %vm1230, %v2914, %v2915
    %v2917 = vrot.slane %v2908, 6
    %v2918 = vrot.slane %v2909, 6
    %v2919 = vsel %vm1230, %v2917, %v2918
    %2920 = vrot.lane.b32.xlu0 %v2916, 126
    %v2921 = vpop.permute.xlu0 %2920
    %2922 = vrot.lane.b32.xlu0 %v2919, 126
    %v2923 = vpop.permute.xlu0 %2922
    %v2926 = vadd.f32 %v2830, %v2921
    %v2927 = vadd.f32 %v2831, %v2923
    %s2928 = sld [smem:[#allocation7 + $0x15]]
    %v2929 = vstv %s2928
    %v2930 = vmul.f32 %v1474, %v2929
    %v2931 = vmul.f32 %v1479, %v2929
    %v2932 = vmul.f32 %v1571, %v2929
    %v2933 = vmul.f32 %v1576, %v2929
    %v2938 = vrot.slane %v2930, 7
    %v2939 = vrot.slane %v2931, 7
    %v2940 = vsel %vm1227, %v2938, %v2939
    %v2941 = vrot.slane %v2932, 7
    %v2942 = vrot.slane %v2933, 7
    %v2943 = vsel %vm1227, %v2941, %v2942
    %v2946 = vadd.f32 %v2854, %v2940
    %v2947 = vadd.f32 %v2855, %v2943
    %s2948 = sld [smem:[#allocation7 + $0x39]]
    %v2949 = vstv %s2948
    %v2950 = vmul.f32 %v1474, %v2949
    %v2951 = vmul.f32 %v1479, %v2949
    %v2952 = vmul.f32 %v1571, %v2949
    %v2953 = vmul.f32 %v1576, %v2949
    %v2958 = vrot.slane %v2950, 7
    %v2959 = vrot.slane %v2951, 7
    %v2960 = vsel %vm1227, %v2958, %v2959
    %v2961 = vrot.slane %v2952, 7
    %v2962 = vrot.slane %v2953, 7
    %v2963 = vsel %vm1227, %v2961, %v2962
    %v2966 = vadd.f32 %v2878, %v2960
    %v2967 = vadd.f32 %v2879, %v2963
    %s2968 = sld [smem:[#allocation7 + $0x5d]]
    %v2969 = vstv %s2968
    %v2970 = vmul.f32 %v1474, %v2969
    %v2971 = vmul.f32 %v1479, %v2969
    %v2972 = vmul.f32 %v1571, %v2969
    %v2973 = vmul.f32 %v1576, %v2969
    %v2978 = vrot.slane %v2970, 7
    %v2979 = vrot.slane %v2971, 7
    %v2980 = vsel %vm1227, %v2978, %v2979
    %v2981 = vrot.slane %v2972, 7
    %v2982 = vrot.slane %v2973, 7
    %v2983 = vsel %vm1227, %v2981, %v2982
    %v2986 = vadd.f32 %v2902, %v2980
    %v2987 = vadd.f32 %v2903, %v2983
    %s2988 = sld [smem:[#allocation7 + $0x81]]
    %v2989 = vstv %s2988
    %v2990 = vmul.f32 %v1474, %v2989
    %v2991 = vmul.f32 %v1479, %v2989
    %v2992 = vmul.f32 %v1571, %v2989
    %v2993 = vmul.f32 %v1576, %v2989
    %v2998 = vrot.slane %v2990, 7
    %v2999 = vrot.slane %v2991, 7
    %v3000 = vsel %vm1227, %v2998, %v2999
    %v3001 = vrot.slane %v2992, 7
    %v3002 = vrot.slane %v2993, 7
    %v3003 = vsel %vm1227, %v3001, %v3002
    %v3006 = vadd.f32 %v2926, %v3000
    %v3007 = vadd.f32 %v2927, %v3003
    %s3008 = sld [smem:[#allocation7 + $0x16]]
    %v3009 = vstv %s3008
    %v3010 = vmul.f32 %v1474, %v3009
    %v3011 = vmul.f32 %v1479, %v3009
    %v3012 = vmul.f32 %v1571, %v3009
    %v3013 = vmul.f32 %v1576, %v3009
    %v3018 = vrot.slane %v3010, 7
    %v3019 = vrot.slane %v3011, 7
    %v3020 = vsel %vm1227, %v3018, %v3019
    %v3021 = vrot.slane %v3012, 7
    %v3022 = vrot.slane %v3013, 7
    %v3023 = vsel %vm1227, %v3021, %v3022
    %3024 = vrot.lane.b32.xlu0 %v3020, 127
    %v3025 = vpop.permute.xlu0 %3024
    %3026 = vrot.lane.b32.xlu0 %v3023, 127
    %v3027 = vpop.permute.xlu0 %3026
    %v3030 = vadd.f32 %v2946, %v3025
    %v3031 = vadd.f32 %v2947, %v3027
    %s3032 = sld [smem:[#allocation7 + $0x3a]]
    %v3033 = vstv %s3032
    %v3034 = vmul.f32 %v1474, %v3033
    %v3035 = vmul.f32 %v1479, %v3033
    %v3036 = vmul.f32 %v1571, %v3033
    %v3037 = vmul.f32 %v1576, %v3033
    %v3042 = vrot.slane %v3034, 7
    %v3043 = vrot.slane %v3035, 7
    %v3044 = vsel %vm1227, %v3042, %v3043
    %v3045 = vrot.slane %v3036, 7
    %v3046 = vrot.slane %v3037, 7
    %v3047 = vsel %vm1227, %v3045, %v3046
    %3048 = vrot.lane.b32.xlu0 %v3044, 127
    %v3049 = vpop.permute.xlu0 %3048
    %3050 = vrot.lane.b32.xlu0 %v3047, 127
    %v3051 = vpop.permute.xlu0 %3050
    %v3054 = vadd.f32 %v2966, %v3049
    %v3055 = vadd.f32 %v2967, %v3051
    %s3056 = sld [smem:[#allocation7 + $0x5e]]
    %v3057 = vstv %s3056
    %v3058 = vmul.f32 %v1474, %v3057
    %v3059 = vmul.f32 %v1479, %v3057
    %v3060 = vmul.f32 %v1571, %v3057
    %v3061 = vmul.f32 %v1576, %v3057
    %v3066 = vrot.slane %v3058, 7
    %v3067 = vrot.slane %v3059, 7
    %v3068 = vsel %vm1227, %v3066, %v3067
    %v3069 = vrot.slane %v3060, 7
    %v3070 = vrot.slane %v3061, 7
    %v3071 = vsel %vm1227, %v3069, %v3070
    %3072 = vrot.lane.b32.xlu0 %v3068, 127
    %v3073 = vpop.permute.xlu0 %3072
    %3074 = vrot.lane.b32.xlu0 %v3071, 127
    %v3075 = vpop.permute.xlu0 %3074
    %v3078 = vadd.f32 %v2986, %v3073
    %v3079 = vadd.f32 %v2987, %v3075
    %s3080 = sld [smem:[#allocation7 + $0x82]]
    %v3081 = vstv %s3080
    %v3082 = vmul.f32 %v1474, %v3081
    %v3083 = vmul.f32 %v1479, %v3081
    %v3084 = vmul.f32 %v1571, %v3081
    %v3085 = vmul.f32 %v1576, %v3081
    %v3090 = vrot.slane %v3082, 7
    %v3091 = vrot.slane %v3083, 7
    %v3092 = vsel %vm1227, %v3090, %v3091
    %v3093 = vrot.slane %v3084, 7
    %v3094 = vrot.slane %v3085, 7
    %v3095 = vsel %vm1227, %v3093, %v3094
    %3096 = vrot.lane.b32.xlu0 %v3092, 127
    %v3097 = vpop.permute.xlu0 %3096
    %3098 = vrot.lane.b32.xlu0 %v3095, 127
    %v3099 = vpop.permute.xlu0 %3098
    %v3102 = vadd.f32 %v3006, %v3097
    %v3103 = vadd.f32 %v3007, %v3099
    %s3104 = sld [smem:[#allocation7 + $0x17]]
    %v3105 = vstv %s3104
    %v3106 = vmul.f32 %v1474, %v3105
    %v3107 = vmul.f32 %v1479, %v3105
    %v3108 = vmul.f32 %v1571, %v3105
    %v3109 = vmul.f32 %v1576, %v3105
    %v3114 = vrot.slane %v3106, 7
    %v3115 = vrot.slane %v3107, 7
    %v3116 = vsel %vm1227, %v3114, %v3115
    %v3117 = vrot.slane %v3108, 7
    %v3118 = vrot.slane %v3109, 7
    %v3119 = vsel %vm1227, %v3117, %v3118
    %3120 = vrot.lane.b32.xlu0 %v3116, 126
    %v3121 = vpop.permute.xlu0 %3120
    %3122 = vrot.lane.b32.xlu0 %v3119, 126
    %v3123 = vpop.permute.xlu0 %3122
    %v3126 = vadd.f32 %v3030, %v3121
    %v3127 = vadd.f32 %v3031, %v3123
    %s3128 = sld [smem:[#allocation7 + $0x3b]]
    %v3129 = vstv %s3128
    %v3130 = vmul.f32 %v1474, %v3129
    %v3131 = vmul.f32 %v1479, %v3129
    %v3132 = vmul.f32 %v1571, %v3129
    %v3133 = vmul.f32 %v1576, %v3129
    %v3138 = vrot.slane %v3130, 7
    %v3139 = vrot.slane %v3131, 7
    %v3140 = vsel %vm1227, %v3138, %v3139
    %v3141 = vrot.slane %v3132, 7
    %v3142 = vrot.slane %v3133, 7
    %v3143 = vsel %vm1227, %v3141, %v3142
    %3144 = vrot.lane.b32.xlu0 %v3140, 126
    %v3145 = vpop.permute.xlu0 %3144
    %3146 = vrot.lane.b32.xlu0 %v3143, 126
    %v3147 = vpop.permute.xlu0 %3146
    %v3150 = vadd.f32 %v3054, %v3145
    %v3151 = vadd.f32 %v3055, %v3147
    %s3152 = sld [smem:[#allocation7 + $0x5f]]
    %v3153 = vstv %s3152
    %v3154 = vmul.f32 %v1474, %v3153
    %v3155 = vmul.f32 %v1479, %v3153
    %v3156 = vmul.f32 %v1571, %v3153
    %v3157 = vmul.f32 %v1576, %v3153
    %v3162 = vrot.slane %v3154, 7
    %v3163 = vrot.slane %v3155, 7
    %v3164 = vsel %vm1227, %v3162, %v3163
    %v3165 = vrot.slane %v3156, 7
    %v3166 = vrot.slane %v3157, 7
    %v3167 = vsel %vm1227, %v3165, %v3166
    %3168 = vrot.lane.b32.xlu0 %v3164, 126
    %v3169 = vpop.permute.xlu0 %3168
    %3170 = vrot.lane.b32.xlu0 %v3167, 126
    %v3171 = vpop.permute.xlu0 %3170
    %v3174 = vadd.f32 %v3078, %v3169
    %v3175 = vadd.f32 %v3079, %v3171
    %s3176 = sld [smem:[#allocation7 + $0x83]]
    %v3177 = vstv %s3176
    %v3178 = vmul.f32 %v1474, %v3177
    %v3179 = vmul.f32 %v1479, %v3177
    %v3180 = vmul.f32 %v1571, %v3177
    %v3181 = vmul.f32 %v1576, %v3177
    %v3186 = vrot.slane %v3178, 7
    %v3187 = vrot.slane %v3179, 7
    %v3188 = vsel %vm1227, %v3186, %v3187
    %v3189 = vrot.slane %v3180, 7
    %v3190 = vrot.slane %v3181, 7
    %v3191 = vsel %vm1227, %v3189, %v3190
    %3192 = vrot.lane.b32.xlu0 %v3188, 126
    %v3193 = vpop.permute.xlu0 %3192
    %3194 = vrot.lane.b32.xlu0 %v3191, 126
    %v3195 = vpop.permute.xlu0 %3194
    %v3198 = vadd.f32 %v3102, %v3193
    %v3199 = vadd.f32 %v3103, %v3195
    %s3200 = sld [smem:[#allocation7 + $0x18]]
    %v3201 = vstv %s3200
    %v3202 = vmul.f32 %v1479, %v3201
    %v3203 = vmul.f32 %v1576, %v3201
    %v3204 = vadd.f32 %v3126, %v3202
    %v3205 = vadd.f32 %v3127, %v3203
    %s3206 = sld [smem:[#allocation7 + $0x3c]]
    %v3207 = vstv %s3206
    %v3208 = vmul.f32 %v1479, %v3207
    %v3209 = vmul.f32 %v1576, %v3207
    %v3210 = vadd.f32 %v3150, %v3208
    %v3211 = vadd.f32 %v3151, %v3209
    %s3212 = sld [smem:[#allocation7 + $0x60]]
    %v3213 = vstv %s3212
    %v3214 = vmul.f32 %v1479, %v3213
    %v3215 = vmul.f32 %v1576, %v3213
    %v3216 = vadd.f32 %v3174, %v3214
    %v3217 = vadd.f32 %v3175, %v3215
    %s3218 = sld [smem:[#allocation7 + $0x84]]
    %v3219 = vstv %s3218
    %v3220 = vmul.f32 %v1479, %v3219
    %v3221 = vmul.f32 %v1576, %v3219
    %v3222 = vadd.f32 %v3198, %v3220
    %v3223 = vadd.f32 %v3199, %v3221
    %s3224 = sld [smem:[#allocation7 + $0x19]]
    %v3225 = vstv %s3224
    %v3226 = vmul.f32 %v1479, %v3225
    %v3227 = vmul.f32 %v1576, %v3225
    %3230 = vrot.lane.b32.xlu0 %v3226, 127
    %v3231 = vpop.permute.xlu0 %3230
    %3232 = vrot.lane.b32.xlu0 %v3227, 127
    %v3233 = vpop.permute.xlu0 %3232
    %v3236 = vadd.f32 %v3204, %v3231
    %v3237 = vadd.f32 %v3205, %v3233
    %s3238 = sld [smem:[#allocation7 + $0x3d]]
    %v3239 = vstv %s3238
    %v3240 = vmul.f32 %v1479, %v3239
    %v3241 = vmul.f32 %v1576, %v3239
    %3244 = vrot.lane.b32.xlu0 %v3240, 127
    %v3245 = vpop.permute.xlu0 %3244
    %3246 = vrot.lane.b32.xlu0 %v3241, 127
    %v3247 = vpop.permute.xlu0 %3246
    %v3250 = vadd.f32 %v3210, %v3245
    %v3251 = vadd.f32 %v3211, %v3247
    %s3252 = sld [smem:[#allocation7 + $0x61]]
    %v3253 = vstv %s3252
    %v3254 = vmul.f32 %v1479, %v3253
    %v3255 = vmul.f32 %v1576, %v3253
    %3258 = vrot.lane.b32.xlu0 %v3254, 127
    %v3259 = vpop.permute.xlu0 %3258
    %3260 = vrot.lane.b32.xlu0 %v3255, 127
    %v3261 = vpop.permute.xlu0 %3260
    %v3264 = vadd.f32 %v3216, %v3259
    %v3265 = vadd.f32 %v3217, %v3261
    %s3266 = sld [smem:[#allocation7 + $0x85]]
    %v3267 = vstv %s3266
    %v3268 = vmul.f32 %v1479, %v3267
    %v3269 = vmul.f32 %v1576, %v3267
    %3272 = vrot.lane.b32.xlu0 %v3268, 127
    %v3273 = vpop.permute.xlu0 %3272
    %3274 = vrot.lane.b32.xlu0 %v3269, 127
    %v3275 = vpop.permute.xlu0 %3274
    %v3278 = vadd.f32 %v3222, %v3273
    %v3279 = vadd.f32 %v3223, %v3275
    %s3280 = sld [smem:[#allocation7 + $0x1a]]
    %v3281 = vstv %s3280
    %v3282 = vmul.f32 %v1479, %v3281
    %v3283 = vmul.f32 %v1576, %v3281
    %3286 = vrot.lane.b32.xlu0 %v3282, 126
    %v3287 = vpop.permute.xlu0 %3286
    %3288 = vrot.lane.b32.xlu0 %v3283, 126
    %v3289 = vpop.permute.xlu0 %3288
    %v3292 = vadd.f32 %v3236, %v3287
    %v3293 = vadd.f32 %v3237, %v3289
    %s3294 = sld [smem:[#allocation7 + $0x3e]]
    %v3295 = vstv %s3294
    %v3296 = vmul.f32 %v1479, %v3295
    %v3297 = vmul.f32 %v1576, %v3295
    %3300 = vrot.lane.b32.xlu0 %v3296, 126
    %v3301 = vpop.permute.xlu0 %3300
    %3302 = vrot.lane.b32.xlu0 %v3297, 126
    %v3303 = vpop.permute.xlu0 %3302
    %v3306 = vadd.f32 %v3250, %v3301
    %v3307 = vadd.f32 %v3251, %v3303
    %s3308 = sld [smem:[#allocation7 + $0x62]]
    %v3309 = vstv %s3308
    %v3310 = vmul.f32 %v1479, %v3309
    %v3311 = vmul.f32 %v1576, %v3309
    %3314 = vrot.lane.b32.xlu0 %v3310, 126
    %v3315 = vpop.permute.xlu0 %3314
    %3316 = vrot.lane.b32.xlu0 %v3311, 126
    %v3317 = vpop.permute.xlu0 %3316
    %v3320 = vadd.f32 %v3264, %v3315
    %v3321 = vadd.f32 %v3265, %v3317
    %s3322 = sld [smem:[#allocation7 + $0x86]]
    %v3323 = vstv %s3322
    %v3324 = vmul.f32 %v1479, %v3323
    %v3325 = vmul.f32 %v1576, %v3323
    %3328 = vrot.lane.b32.xlu0 %v3324, 126
    %v3329 = vpop.permute.xlu0 %3328
    %3330 = vrot.lane.b32.xlu0 %v3325, 126
    %v3331 = vpop.permute.xlu0 %3330
    %v3334 = vadd.f32 %v3278, %v3329
    %v3335 = vadd.f32 %v3279, %v3331
    %s3336 = sld [smem:[#allocation7 + $0x1b]]
    %v3337 = vstv %s3336
    %v3338 = vmul.f32 %v1479, %v3337
    %v3339 = vmul.f32 %v1484, %v3337
    %v3340 = vmul.f32 %v1576, %v3337
    %v3341 = vmul.f32 %v1581, %v3337
    %v3346 = vrot.slane %v3338, 5
    %v3347 = vrot.slane %v3339, 5
    %v3348 = vsel %vm1233, %v3346, %v3347
    %v3349 = vrot.slane %v3340, 5
    %v3350 = vrot.slane %v3341, 5
    %v3351 = vsel %vm1233, %v3349, %v3350
    %v3354 = vadd.f32 %v3292, %v3348
    %v3355 = vadd.f32 %v3293, %v3351
    %s3356 = sld [smem:[#allocation7 + $0x3f]]
    %v3357 = vstv %s3356
    %v3358 = vmul.f32 %v1479, %v3357
    %v3359 = vmul.f32 %v1484, %v3357
    %v3360 = vmul.f32 %v1576, %v3357
    %v3361 = vmul.f32 %v1581, %v3357
    %v3366 = vrot.slane %v3358, 5
    %v3367 = vrot.slane %v3359, 5
    %v3368 = vsel %vm1233, %v3366, %v3367
    %v3369 = vrot.slane %v3360, 5
    %v3370 = vrot.slane %v3361, 5
    %v3371 = vsel %vm1233, %v3369, %v3370
    %v3374 = vadd.f32 %v3306, %v3368
    %v3375 = vadd.f32 %v3307, %v3371
    %s3376 = sld [smem:[#allocation7 + $0x63]]
    %v3377 = vstv %s3376
    %v3378 = vmul.f32 %v1479, %v3377
    %v3379 = vmul.f32 %v1484, %v3377
    %v3380 = vmul.f32 %v1576, %v3377
    %v3381 = vmul.f32 %v1581, %v3377
    %v3386 = vrot.slane %v3378, 5
    %v3387 = vrot.slane %v3379, 5
    %v3388 = vsel %vm1233, %v3386, %v3387
    %v3389 = vrot.slane %v3380, 5
    %v3390 = vrot.slane %v3381, 5
    %v3391 = vsel %vm1233, %v3389, %v3390
    %v3394 = vadd.f32 %v3320, %v3388
    %v3395 = vadd.f32 %v3321, %v3391
    %s3396 = sld [smem:[#allocation7 + $0x87]]
    %v3397 = vstv %s3396
    %v3398 = vmul.f32 %v1479, %v3397
    %v3399 = vmul.f32 %v1484, %v3397
    %v3400 = vmul.f32 %v1576, %v3397
    %v3401 = vmul.f32 %v1581, %v3397
    %v3406 = vrot.slane %v3398, 5
    %v3407 = vrot.slane %v3399, 5
    %v3408 = vsel %vm1233, %v3406, %v3407
    %v3409 = vrot.slane %v3400, 5
    %v3410 = vrot.slane %v3401, 5
    %v3411 = vsel %vm1233, %v3409, %v3410
    %v3414 = vadd.f32 %v3334, %v3408
    %v3415 = vadd.f32 %v3335, %v3411
    %s3416 = sld [smem:[#allocation7 + $0x1c]]
    %v3417 = vstv %s3416
    %v3418 = vmul.f32 %v1479, %v3417
    %v3419 = vmul.f32 %v1484, %v3417
    %v3420 = vmul.f32 %v1576, %v3417
    %v3421 = vmul.f32 %v1581, %v3417
    %v3426 = vrot.slane %v3418, 5
    %v3427 = vrot.slane %v3419, 5
    %v3428 = vsel %vm1233, %v3426, %v3427
    %v3429 = vrot.slane %v3420, 5
    %v3430 = vrot.slane %v3421, 5
    %v3431 = vsel %vm1233, %v3429, %v3430
    %3432 = vrot.lane.b32.xlu0 %v3428, 127
    %v3433 = vpop.permute.xlu0 %3432
    %3434 = vrot.lane.b32.xlu0 %v3431, 127
    %v3435 = vpop.permute.xlu0 %3434
    %v3438 = vadd.f32 %v3354, %v3433
    %v3439 = vadd.f32 %v3355, %v3435
    %s3440 = sld [smem:[#allocation7 + $0x40]]
    %v3441 = vstv %s3440
    %v3442 = vmul.f32 %v1479, %v3441
    %v3443 = vmul.f32 %v1484, %v3441
    %v3444 = vmul.f32 %v1576, %v3441
    %v3445 = vmul.f32 %v1581, %v3441
    %v3450 = vrot.slane %v3442, 5
    %v3451 = vrot.slane %v3443, 5
    %v3452 = vsel %vm1233, %v3450, %v3451
    %v3453 = vrot.slane %v3444, 5
    %v3454 = vrot.slane %v3445, 5
    %v3455 = vsel %vm1233, %v3453, %v3454
    %3456 = vrot.lane.b32.xlu0 %v3452, 127
    %v3457 = vpop.permute.xlu0 %3456
    %3458 = vrot.lane.b32.xlu0 %v3455, 127
    %v3459 = vpop.permute.xlu0 %3458
    %v3462 = vadd.f32 %v3374, %v3457
    %v3463 = vadd.f32 %v3375, %v3459
    %s3464 = sld [smem:[#allocation7 + $0x64]]
    %v3465 = vstv %s3464
    %v3466 = vmul.f32 %v1479, %v3465
    %v3467 = vmul.f32 %v1484, %v3465
    %v3468 = vmul.f32 %v1576, %v3465
    %v3469 = vmul.f32 %v1581, %v3465
    %v3474 = vrot.slane %v3466, 5
    %v3475 = vrot.slane %v3467, 5
    %v3476 = vsel %vm1233, %v3474, %v3475
    %v3477 = vrot.slane %v3468, 5
    %v3478 = vrot.slane %v3469, 5
    %v3479 = vsel %vm1233, %v3477, %v3478
    %3480 = vrot.lane.b32.xlu0 %v3476, 127
    %v3481 = vpop.permute.xlu0 %3480
    %3482 = vrot.lane.b32.xlu0 %v3479, 127
    %v3483 = vpop.permute.xlu0 %3482
    %v3486 = vadd.f32 %v3394, %v3481
    %v3487 = vadd.f32 %v3395, %v3483
    %s3488 = sld [smem:[#allocation7 + $0x88]]
    %v3489 = vstv %s3488
    %v3490 = vmul.f32 %v1479, %v3489
    %v3491 = vmul.f32 %v1484, %v3489
    %v3492 = vmul.f32 %v1576, %v3489
    %v3493 = vmul.f32 %v1581, %v3489
    %v3498 = vrot.slane %v3490, 5
    %v3499 = vrot.slane %v3491, 5
    %v3500 = vsel %vm1233, %v3498, %v3499
    %v3501 = vrot.slane %v3492, 5
    %v3502 = vrot.slane %v3493, 5
    %v3503 = vsel %vm1233, %v3501, %v3502
    %3504 = vrot.lane.b32.xlu0 %v3500, 127
    %v3505 = vpop.permute.xlu0 %3504
    %3506 = vrot.lane.b32.xlu0 %v3503, 127
    %v3507 = vpop.permute.xlu0 %3506
    %v3510 = vadd.f32 %v3414, %v3505
    %v3511 = vadd.f32 %v3415, %v3507
    %s3512 = sld [smem:[#allocation7 + $0x1d]]
    %v3513 = vstv %s3512
    %v3514 = vmul.f32 %v1479, %v3513
    %v3515 = vmul.f32 %v1484, %v3513
    %v3516 = vmul.f32 %v1576, %v3513
    %v3517 = vmul.f32 %v1581, %v3513
    %v3522 = vrot.slane %v3514, 5
    %v3523 = vrot.slane %v3515, 5
    %v3524 = vsel %vm1233, %v3522, %v3523
    %v3525 = vrot.slane %v3516, 5
    %v3526 = vrot.slane %v3517, 5
    %v3527 = vsel %vm1233, %v3525, %v3526
    %3528 = vrot.lane.b32.xlu0 %v3524, 126
    %v3529 = vpop.permute.xlu0 %3528
    %3530 = vrot.lane.b32.xlu0 %v3527, 126
    %v3531 = vpop.permute.xlu0 %3530
    %v3534 = vadd.f32 %v3438, %v3529
    %v3535 = vadd.f32 %v3439, %v3531
    %s3536 = sld [smem:[#allocation7 + $0x41]]
    %v3537 = vstv %s3536
    %v3538 = vmul.f32 %v1479, %v3537
    %v3539 = vmul.f32 %v1484, %v3537
    %v3540 = vmul.f32 %v1576, %v3537
    %v3541 = vmul.f32 %v1581, %v3537
    %v3546 = vrot.slane %v3538, 5
    %v3547 = vrot.slane %v3539, 5
    %v3548 = vsel %vm1233, %v3546, %v3547
    %v3549 = vrot.slane %v3540, 5
    %v3550 = vrot.slane %v3541, 5
    %v3551 = vsel %vm1233, %v3549, %v3550
    %3552 = vrot.lane.b32.xlu0 %v3548, 126
    %v3553 = vpop.permute.xlu0 %3552
    %3554 = vrot.lane.b32.xlu0 %v3551, 126
    %v3555 = vpop.permute.xlu0 %3554
    %v3558 = vadd.f32 %v3462, %v3553
    %v3559 = vadd.f32 %v3463, %v3555
    %s3560 = sld [smem:[#allocation7 + $0x65]]
    %v3561 = vstv %s3560
    %v3562 = vmul.f32 %v1479, %v3561
    %v3563 = vmul.f32 %v1484, %v3561
    %v3564 = vmul.f32 %v1576, %v3561
    %v3565 = vmul.f32 %v1581, %v3561
    %v3570 = vrot.slane %v3562, 5
    %v3571 = vrot.slane %v3563, 5
    %v3572 = vsel %vm1233, %v3570, %v3571
    %v3573 = vrot.slane %v3564, 5
    %v3574 = vrot.slane %v3565, 5
    %v3575 = vsel %vm1233, %v3573, %v3574
    %3576 = vrot.lane.b32.xlu0 %v3572, 126
    %v3577 = vpop.permute.xlu0 %3576
    %3578 = vrot.lane.b32.xlu0 %v3575, 126
    %v3579 = vpop.permute.xlu0 %3578
    %v3582 = vadd.f32 %v3486, %v3577
    %v3583 = vadd.f32 %v3487, %v3579
    %s3584 = sld [smem:[#allocation7 + $0x89]]
    %v3585 = vstv %s3584
    %v3586 = vmul.f32 %v1479, %v3585
    %v3587 = vmul.f32 %v1484, %v3585
    %v3588 = vmul.f32 %v1576, %v3585
    %v3589 = vmul.f32 %v1581, %v3585
    %v3594 = vrot.slane %v3586, 5
    %v3595 = vrot.slane %v3587, 5
    %v3596 = vsel %vm1233, %v3594, %v3595
    %v3597 = vrot.slane %v3588, 5
    %v3598 = vrot.slane %v3589, 5
    %v3599 = vsel %vm1233, %v3597, %v3598
    %3600 = vrot.lane.b32.xlu0 %v3596, 126
    %v3601 = vpop.permute.xlu0 %3600
    %3602 = vrot.lane.b32.xlu0 %v3599, 126
    %v3603 = vpop.permute.xlu0 %3602
    %v3606 = vadd.f32 %v3510, %v3601
    %v3607 = vadd.f32 %v3511, %v3603
    %s3608 = sld [smem:[#allocation7 + $0x1e]]
    %v3609 = vstv %s3608
    %v3610 = vmul.f32 %v1479, %v3609
    %v3611 = vmul.f32 %v1484, %v3609
    %v3612 = vmul.f32 %v1576, %v3609
    %v3613 = vmul.f32 %v1581, %v3609
    %v3618 = vrot.slane %v3610, 6
    %v3619 = vrot.slane %v3611, 6
    %v3620 = vsel %vm1230, %v3618, %v3619
    %v3621 = vrot.slane %v3612, 6
    %v3622 = vrot.slane %v3613, 6
    %v3623 = vsel %vm1230, %v3621, %v3622
    %v3626 = vadd.f32 %v3534, %v3620
    %v3627 = vadd.f32 %v3535, %v3623
    %s3628 = sld [smem:[#allocation7 + $0x42]]
    %v3629 = vstv %s3628
    %v3630 = vmul.f32 %v1479, %v3629
    %v3631 = vmul.f32 %v1484, %v3629
    %v3632 = vmul.f32 %v1576, %v3629
    %v3633 = vmul.f32 %v1581, %v3629
    %v3638 = vrot.slane %v3630, 6
    %v3639 = vrot.slane %v3631, 6
    %v3640 = vsel %vm1230, %v3638, %v3639
    %v3641 = vrot.slane %v3632, 6
    %v3642 = vrot.slane %v3633, 6
    %v3643 = vsel %vm1230, %v3641, %v3642
    %v3646 = vadd.f32 %v3558, %v3640
    %v3647 = vadd.f32 %v3559, %v3643
    %s3648 = sld [smem:[#allocation7 + $0x66]]
    %v3649 = vstv %s3648
    %v3650 = vmul.f32 %v1479, %v3649
    %v3651 = vmul.f32 %v1484, %v3649
    %v3652 = vmul.f32 %v1576, %v3649
    %v3653 = vmul.f32 %v1581, %v3649
    %v3658 = vrot.slane %v3650, 6
    %v3659 = vrot.slane %v3651, 6
    %v3660 = vsel %vm1230, %v3658, %v3659
    %v3661 = vrot.slane %v3652, 6
    %v3662 = vrot.slane %v3653, 6
    %v3663 = vsel %vm1230, %v3661, %v3662
    %v3666 = vadd.f32 %v3582, %v3660
    %v3667 = vadd.f32 %v3583, %v3663
    %s3668 = sld [smem:[#allocation7 + $0x8a]]
    %v3669 = vstv %s3668
    %v3670 = vmul.f32 %v1479, %v3669
    %v3671 = vmul.f32 %v1484, %v3669
    %v3672 = vmul.f32 %v1576, %v3669
    %v3673 = vmul.f32 %v1581, %v3669
    %v3678 = vrot.slane %v3670, 6
    %v3679 = vrot.slane %v3671, 6
    %v3680 = vsel %vm1230, %v3678, %v3679
    %v3681 = vrot.slane %v3672, 6
    %v3682 = vrot.slane %v3673, 6
    %v3683 = vsel %vm1230, %v3681, %v3682
    %v3686 = vadd.f32 %v3606, %v3680
    %v3687 = vadd.f32 %v3607, %v3683
    %s3688 = sld [smem:[#allocation7 + $0x1f]]
    %v3689 = vstv %s3688
    %v3690 = vmul.f32 %v1479, %v3689
    %v3691 = vmul.f32 %v1484, %v3689
    %v3692 = vmul.f32 %v1576, %v3689
    %v3693 = vmul.f32 %v1581, %v3689
    %v3698 = vrot.slane %v3690, 6
    %v3699 = vrot.slane %v3691, 6
    %v3700 = vsel %vm1230, %v3698, %v3699
    %v3701 = vrot.slane %v3692, 6
    %v3702 = vrot.slane %v3693, 6
    %v3703 = vsel %vm1230, %v3701, %v3702
    %3704 = vrot.lane.b32.xlu0 %v3700, 127
    %v3705 = vpop.permute.xlu0 %3704
    %3706 = vrot.lane.b32.xlu0 %v3703, 127
    %v3707 = vpop.permute.xlu0 %3706
    %v3710 = vadd.f32 %v3626, %v3705
    %v3711 = vadd.f32 %v3627, %v3707
    %s3712 = sld [smem:[#allocation7 + $0x43]]
    %v3713 = vstv %s3712
    %v3714 = vmul.f32 %v1479, %v3713
    %v3715 = vmul.f32 %v1484, %v3713
    %v3716 = vmul.f32 %v1576, %v3713
    %v3717 = vmul.f32 %v1581, %v3713
    %v3722 = vrot.slane %v3714, 6
    %v3723 = vrot.slane %v3715, 6
    %v3724 = vsel %vm1230, %v3722, %v3723
    %v3725 = vrot.slane %v3716, 6
    %v3726 = vrot.slane %v3717, 6
    %v3727 = vsel %vm1230, %v3725, %v3726
    %3728 = vrot.lane.b32.xlu0 %v3724, 127
    %v3729 = vpop.permute.xlu0 %3728
    %3730 = vrot.lane.b32.xlu0 %v3727, 127
    %v3731 = vpop.permute.xlu0 %3730
    %v3734 = vadd.f32 %v3646, %v3729
    %v3735 = vadd.f32 %v3647, %v3731
    %s3736 = sld [smem:[#allocation7 + $0x67]]
    %v3737 = vstv %s3736
    %v3738 = vmul.f32 %v1479, %v3737
    %v3739 = vmul.f32 %v1484, %v3737
    %v3740 = vmul.f32 %v1576, %v3737
    %v3741 = vmul.f32 %v1581, %v3737
    %v3746 = vrot.slane %v3738, 6
    %v3747 = vrot.slane %v3739, 6
    %v3748 = vsel %vm1230, %v3746, %v3747
    %v3749 = vrot.slane %v3740, 6
    %v3750 = vrot.slane %v3741, 6
    %v3751 = vsel %vm1230, %v3749, %v3750
    %3752 = vrot.lane.b32.xlu0 %v3748, 127
    %v3753 = vpop.permute.xlu0 %3752
    %3754 = vrot.lane.b32.xlu0 %v3751, 127
    %v3755 = vpop.permute.xlu0 %3754
    %v3758 = vadd.f32 %v3666, %v3753
    %v3759 = vadd.f32 %v3667, %v3755
    %s3760 = sld [smem:[#allocation7 + $0x8b]]
    %v3761 = vstv %s3760
    %v3762 = vmul.f32 %v1479, %v3761
    %v3763 = vmul.f32 %v1484, %v3761
    %v3764 = vmul.f32 %v1576, %v3761
    %v3765 = vmul.f32 %v1581, %v3761
    %v3770 = vrot.slane %v3762, 6
    %v3771 = vrot.slane %v3763, 6
    %v3772 = vsel %vm1230, %v3770, %v3771
    %v3773 = vrot.slane %v3764, 6
    %v3774 = vrot.slane %v3765, 6
    %v3775 = vsel %vm1230, %v3773, %v3774
    %3776 = vrot.lane.b32.xlu0 %v3772, 127
    %v3777 = vpop.permute.xlu0 %3776
    %3778 = vrot.lane.b32.xlu0 %v3775, 127
    %v3779 = vpop.permute.xlu0 %3778
    %v3782 = vadd.f32 %v3686, %v3777
    %v3783 = vadd.f32 %v3687, %v3779
    %s3784 = sld [smem:[#allocation7 + $0x20]]
    %v3785 = vstv %s3784
    %v3786 = vmul.f32 %v1479, %v3785
    %v3787 = vmul.f32 %v1484, %v3785
    %v3788 = vmul.f32 %v1576, %v3785
    %v3789 = vmul.f32 %v1581, %v3785
    %v3794 = vrot.slane %v3786, 6
    %v3795 = vrot.slane %v3787, 6
    %v3796 = vsel %vm1230, %v3794, %v3795
    %v3797 = vrot.slane %v3788, 6
    %v3798 = vrot.slane %v3789, 6
    %v3799 = vsel %vm1230, %v3797, %v3798
    %3800 = vrot.lane.b32.xlu0 %v3796, 126
    %v3801 = vpop.permute.xlu0 %3800
    %3802 = vrot.lane.b32.xlu0 %v3799, 126
    %v3803 = vpop.permute.xlu0 %3802
    %v3806 = vadd.f32 %v3710, %v3801
    %v3807 = vadd.f32 %v3711, %v3803
    %s3808 = sld [smem:[#allocation7 + $0x44]]
    %v3809 = vstv %s3808
    %v3810 = vmul.f32 %v1479, %v3809
    %v3811 = vmul.f32 %v1484, %v3809
    %v3812 = vmul.f32 %v1576, %v3809
    %v3813 = vmul.f32 %v1581, %v3809
    %v3818 = vrot.slane %v3810, 6
    %v3819 = vrot.slane %v3811, 6
    %v3820 = vsel %vm1230, %v3818, %v3819
    %v3821 = vrot.slane %v3812, 6
    %v3822 = vrot.slane %v3813, 6
    %v3823 = vsel %vm1230, %v3821, %v3822
    %3824 = vrot.lane.b32.xlu0 %v3820, 126
    %v3825 = vpop.permute.xlu0 %3824
    %3826 = vrot.lane.b32.xlu0 %v3823, 126
    %v3827 = vpop.permute.xlu0 %3826
    %v3830 = vadd.f32 %v3734, %v3825
    %v3831 = vadd.f32 %v3735, %v3827
    %s3832 = sld [smem:[#allocation7 + $0x68]]
    %v3833 = vstv %s3832
    %v3834 = vmul.f32 %v1479, %v3833
    %v3835 = vmul.f32 %v1484, %v3833
    %v3836 = vmul.f32 %v1576, %v3833
    %v3837 = vmul.f32 %v1581, %v3833
    %v3842 = vrot.slane %v3834, 6
    %v3843 = vrot.slane %v3835, 6
    %v3844 = vsel %vm1230, %v3842, %v3843
    %v3845 = vrot.slane %v3836, 6
    %v3846 = vrot.slane %v3837, 6
    %v3847 = vsel %vm1230, %v3845, %v3846
    %3848 = vrot.lane.b32.xlu0 %v3844, 126
    %v3849 = vpop.permute.xlu0 %3848
    %3850 = vrot.lane.b32.xlu0 %v3847, 126
    %v3851 = vpop.permute.xlu0 %3850
    %v3854 = vadd.f32 %v3758, %v3849
    %v3855 = vadd.f32 %v3759, %v3851
    %s3856 = sld [smem:[#allocation7 + $0x8c]]
    %v3857 = vstv %s3856
    %v3858 = vmul.f32 %v1479, %v3857
    %v3859 = vmul.f32 %v1484, %v3857
    %v3860 = vmul.f32 %v1576, %v3857
    %v3861 = vmul.f32 %v1581, %v3857
    %v3866 = vrot.slane %v3858, 6
    %v3867 = vrot.slane %v3859, 6
    %v3868 = vsel %vm1230, %v3866, %v3867
    %v3869 = vrot.slane %v3860, 6
    %v3870 = vrot.slane %v3861, 6
    %v3871 = vsel %vm1230, %v3869, %v3870
    %3872 = vrot.lane.b32.xlu0 %v3868, 126
    %v3873 = vpop.permute.xlu0 %3872
    %3874 = vrot.lane.b32.xlu0 %v3871, 126
    %v3875 = vpop.permute.xlu0 %3874
    %v3878 = vadd.f32 %v3782, %v3873
    %v3879 = vadd.f32 %v3783, %v3875
    %s3880 = sld [smem:[#allocation7 + $0x21]]
    %v3881 = vstv %s3880
    %v3882 = vmul.f32 %v1479, %v3881
    %v3883 = vmul.f32 %v1484, %v3881
    %v3884 = vmul.f32 %v1576, %v3881
    %v3885 = vmul.f32 %v1581, %v3881
    %v3890 = vrot.slane %v3882, 7
    %v3891 = vrot.slane %v3883, 7
    %v3892 = vsel %vm1227, %v3890, %v3891
    %v3893 = vrot.slane %v3884, 7
    %v3894 = vrot.slane %v3885, 7
    %v3895 = vsel %vm1227, %v3893, %v3894
    %v3898 = vadd.f32 %v3806, %v3892
    %v3899 = vadd.f32 %v3807, %v3895
    %s3900 = sld [smem:[#allocation7 + $0x45]]
    %v3901 = vstv %s3900
    %v3902 = vmul.f32 %v1479, %v3901
    %v3903 = vmul.f32 %v1484, %v3901
    %v3904 = vmul.f32 %v1576, %v3901
    %v3905 = vmul.f32 %v1581, %v3901
    %v3910 = vrot.slane %v3902, 7
    %v3911 = vrot.slane %v3903, 7
    %v3912 = vsel %vm1227, %v3910, %v3911
    %v3913 = vrot.slane %v3904, 7
    %v3914 = vrot.slane %v3905, 7
    %v3915 = vsel %vm1227, %v3913, %v3914
    %v3918 = vadd.f32 %v3830, %v3912
    %v3919 = vadd.f32 %v3831, %v3915
    %s3920 = sld [smem:[#allocation7 + $0x69]]
    %v3921 = vstv %s3920
    %v3922 = vmul.f32 %v1479, %v3921
    %v3923 = vmul.f32 %v1484, %v3921
    %v3924 = vmul.f32 %v1576, %v3921
    %v3925 = vmul.f32 %v1581, %v3921
    %v3930 = vrot.slane %v3922, 7
    %v3931 = vrot.slane %v3923, 7
    %v3932 = vsel %vm1227, %v3930, %v3931
    %v3933 = vrot.slane %v3924, 7
    %v3934 = vrot.slane %v3925, 7
    %v3935 = vsel %vm1227, %v3933, %v3934
    %v3938 = vadd.f32 %v3854, %v3932
    %v3939 = vadd.f32 %v3855, %v3935
    %s3940 = sld [smem:[#allocation7 + $0x8d]]
    %v3941 = vstv %s3940
    %v3942 = vmul.f32 %v1479, %v3941
    %v3943 = vmul.f32 %v1484, %v3941
    %v3944 = vmul.f32 %v1576, %v3941
    %v3945 = vmul.f32 %v1581, %v3941
    %v3950 = vrot.slane %v3942, 7
    %v3951 = vrot.slane %v3943, 7
    %v3952 = vsel %vm1227, %v3950, %v3951
    %v3953 = vrot.slane %v3944, 7
    %v3954 = vrot.slane %v3945, 7
    %v3955 = vsel %vm1227, %v3953, %v3954
    %v3958 = vadd.f32 %v3878, %v3952
    %v3959 = vadd.f32 %v3879, %v3955
    %s3960 = sld [smem:[#allocation7 + $0x22]]
    %v3961 = vstv %s3960
    %v3962 = vmul.f32 %v1479, %v3961
    %v3963 = vmul.f32 %v1484, %v3961
    %v3964 = vmul.f32 %v1576, %v3961
    %v3965 = vmul.f32 %v1581, %v3961
    %v3970 = vrot.slane %v3962, 7
    %v3971 = vrot.slane %v3963, 7
    %v3972 = vsel %vm1227, %v3970, %v3971
    %v3973 = vrot.slane %v3964, 7
    %v3974 = vrot.slane %v3965, 7
    %v3975 = vsel %vm1227, %v3973, %v3974
    %3976 = vrot.lane.b32.xlu0 %v3972, 127
    %v3977 = vpop.permute.xlu0 %3976
    %3978 = vrot.lane.b32.xlu0 %v3975, 127
    %v3979 = vpop.permute.xlu0 %3978
    %v3982 = vadd.f32 %v3898, %v3977
    %v3983 = vadd.f32 %v3899, %v3979
    %s3984 = sld [smem:[#allocation7 + $0x46]]
    %v3985 = vstv %s3984
    %v3986 = vmul.f32 %v1479, %v3985
    %v3987 = vmul.f32 %v1484, %v3985
    %v3988 = vmul.f32 %v1576, %v3985
    %v3989 = vmul.f32 %v1581, %v3985
    %v3994 = vrot.slane %v3986, 7
    %v3995 = vrot.slane %v3987, 7
    %v3996 = vsel %vm1227, %v3994, %v3995
    %v3997 = vrot.slane %v3988, 7
    %v3998 = vrot.slane %v3989, 7
    %v3999 = vsel %vm1227, %v3997, %v3998
    %4000 = vrot.lane.b32.xlu0 %v3996, 127
    %v4001 = vpop.permute.xlu0 %4000
    %4002 = vrot.lane.b32.xlu0 %v3999, 127
    %v4003 = vpop.permute.xlu0 %4002
    %v4006 = vadd.f32 %v3918, %v4001
    %v4007 = vadd.f32 %v3919, %v4003
    %s4008 = sld [smem:[#allocation7 + $0x6a]]
    %v4009 = vstv %s4008
    %v4010 = vmul.f32 %v1479, %v4009
    %v4011 = vmul.f32 %v1484, %v4009
    %v4012 = vmul.f32 %v1576, %v4009
    %v4013 = vmul.f32 %v1581, %v4009
    %v4018 = vrot.slane %v4010, 7
    %v4019 = vrot.slane %v4011, 7
    %v4020 = vsel %vm1227, %v4018, %v4019
    %v4021 = vrot.slane %v4012, 7
    %v4022 = vrot.slane %v4013, 7
    %v4023 = vsel %vm1227, %v4021, %v4022
    %4024 = vrot.lane.b32.xlu0 %v4020, 127
    %v4025 = vpop.permute.xlu0 %4024
    %4026 = vrot.lane.b32.xlu0 %v4023, 127
    %v4027 = vpop.permute.xlu0 %4026
    %v4030 = vadd.f32 %v3938, %v4025
    %v4031 = vadd.f32 %v3939, %v4027
    %s4032 = sld [smem:[#allocation7 + $0x8e]]
    %v4033 = vstv %s4032
    %v4034 = vmul.f32 %v1479, %v4033
    %v4035 = vmul.f32 %v1484, %v4033
    %v4036 = vmul.f32 %v1576, %v4033
    %v4037 = vmul.f32 %v1581, %v4033
    %v4042 = vrot.slane %v4034, 7
    %v4043 = vrot.slane %v4035, 7
    %v4044 = vsel %vm1227, %v4042, %v4043
    %v4045 = vrot.slane %v4036, 7
    %v4046 = vrot.slane %v4037, 7
    %v4047 = vsel %vm1227, %v4045, %v4046
    %4048 = vrot.lane.b32.xlu0 %v4044, 127
    %v4049 = vpop.permute.xlu0 %4048
    %4050 = vrot.lane.b32.xlu0 %v4047, 127
    %v4051 = vpop.permute.xlu0 %4050
    %v4054 = vadd.f32 %v3958, %v4049
    %v4055 = vadd.f32 %v3959, %v4051
    %s4056 = sld [smem:[#allocation7 + $0x23]]
    %v4057 = vstv %s4056
    %v4058 = vmul.f32 %v1479, %v4057
    %v4059 = vmul.f32 %v1484, %v4057
    %v4060 = vmul.f32 %v1576, %v4057
    %v4061 = vmul.f32 %v1581, %v4057
    %v4066 = vrot.slane %v4058, 7
    %v4067 = vrot.slane %v4059, 7
    %v4068 = vsel %vm1227, %v4066, %v4067
    %v4069 = vrot.slane %v4060, 7
    %v4070 = vrot.slane %v4061, 7
    %v4071 = vsel %vm1227, %v4069, %v4070
    %4072 = vrot.lane.b32.xlu0 %v4068, 126
    %v4073 = vpop.permute.xlu0 %4072
    %4074 = vrot.lane.b32.xlu0 %v4071, 126
    %v4075 = vpop.permute.xlu0 %4074
    %v4078 = vadd.f32 %v3982, %v4073
    %v4079 = vadd.f32 %v3983, %v4075
    %s4080 = sld [smem:[#allocation7 + $0x47]]
    %v4081 = vstv %s4080
    %v4082 = vmul.f32 %v1479, %v4081
    %v4083 = vmul.f32 %v1484, %v4081
    %v4084 = vmul.f32 %v1576, %v4081
    %v4085 = vmul.f32 %v1581, %v4081
    %v4090 = vrot.slane %v4082, 7
    %v4091 = vrot.slane %v4083, 7
    %v4092 = vsel %vm1227, %v4090, %v4091
    %v4093 = vrot.slane %v4084, 7
    %v4094 = vrot.slane %v4085, 7
    %v4095 = vsel %vm1227, %v4093, %v4094
    %4096 = vrot.lane.b32.xlu0 %v4092, 126
    %v4097 = vpop.permute.xlu0 %4096
    %4098 = vrot.lane.b32.xlu0 %v4095, 126
    %v4099 = vpop.permute.xlu0 %4098
    %v4102 = vadd.f32 %v4006, %v4097
    %v4103 = vadd.f32 %v4007, %v4099
    %s4104 = sld [smem:[#allocation7 + $0x6b]]
    %v4105 = vstv %s4104
    %v4106 = vmul.f32 %v1479, %v4105
    %v4107 = vmul.f32 %v1484, %v4105
    %v4108 = vmul.f32 %v1576, %v4105
    %v4109 = vmul.f32 %v1581, %v4105
    %v4114 = vrot.slane %v4106, 7
    %v4115 = vrot.slane %v4107, 7
    %v4116 = vsel %vm1227, %v4114, %v4115
    %v4117 = vrot.slane %v4108, 7
    %v4118 = vrot.slane %v4109, 7
    %v4119 = vsel %vm1227, %v4117, %v4118
    %4120 = vrot.lane.b32.xlu0 %v4116, 126
    %v4121 = vpop.permute.xlu0 %4120
    %4122 = vrot.lane.b32.xlu0 %v4119, 126
    %v4123 = vpop.permute.xlu0 %4122
    %v4126 = vadd.f32 %v4030, %v4121
    %v4127 = vadd.f32 %v4031, %v4123
    %s4128 = sld [smem:[#allocation7 + $0x8f]]
    %v4129 = vstv %s4128
    %v4130 = vmul.f32 %v1479, %v4129
    %v4131 = vmul.f32 %v1484, %v4129
    %v4132 = vmul.f32 %v1576, %v4129
    %v4133 = vmul.f32 %v1581, %v4129
    %v4138 = vrot.slane %v4130, 7
    %v4139 = vrot.slane %v4131, 7
    %v4140 = vsel %vm1227, %v4138, %v4139
    %v4141 = vrot.slane %v4132, 7
    %v4142 = vrot.slane %v4133, 7
    %v4143 = vsel %vm1227, %v4141, %v4142
    %4144 = vrot.lane.b32.xlu0 %v4140, 126
    %v4145 = vpop.permute.xlu0 %4144
    %4146 = vrot.lane.b32.xlu0 %v4143, 126
    %v4147 = vpop.permute.xlu0 %4146
    %v4150 = vadd.f32 %v4054, %v4145
    %v4151 = vadd.f32 %v4055, %v4147
    %s4152 = sld [smem:[#allocation8]]
    %v4153 = vstv %s4152
    %v4154 = vadd.f32 %v4078, %v4153
    %v4155 = vadd.f32 %v4079, %v4153
    %v4156 = vmax.f32 %v4154, 0.0
    %v4157 = vmax.f32 %v4155, 0.0
    %v4160 = vrot.slane %v4156, 1
    %v4161 = vrot.slane %v4157, 1
    %v4164 = vmax.f32 %v4156, %v4160
    %v4165 = vmax.f32 %v4157, %v4161
    %s4166 = sld [smem:[#allocation8 + $0x1]]
    %v4167 = vstv %s4166
    %v4168 = vadd.f32 %v4102, %v4167
    %v4169 = vadd.f32 %v4103, %v4167
    %v4170 = vmax.f32 %v4168, 0.0
    %v4171 = vmax.f32 %v4169, 0.0
    %v4174 = vrot.slane %v4170, 1
    %v4175 = vrot.slane %v4171, 1
    %v4178 = vmax.f32 %v4170, %v4174
    %v4179 = vmax.f32 %v4171, %v4175
    %s4180 = sld [smem:[#allocation8 + $0x2]]
    %v4181 = vstv %s4180
    %v4182 = vadd.f32 %v4126, %v4181
    %v4183 = vadd.f32 %v4127, %v4181
    %v4184 = vmax.f32 %v4182, 0.0
    %v4185 = vmax.f32 %v4183, 0.0
    %v4188 = vrot.slane %v4184, 1
    %v4189 = vrot.slane %v4185, 1
    %v4192 = vmax.f32 %v4184, %v4188
    %v4193 = vmax.f32 %v4185, %v4189
    %s4194 = sld [smem:[#allocation8 + $0x3]]
    %v4195 = vstv %s4194
    %v4196 = vadd.f32 %v4150, %v4195
    %v4197 = vadd.f32 %v4151, %v4195
    %v4198 = vmax.f32 %v4196, 0.0
    %v4199 = vmax.f32 %v4197, 0.0
    %v4202 = vrot.slane %v4198, 1
    %v4203 = vrot.slane %v4199, 1
    %v4206 = vmax.f32 %v4198, %v4202
    %v4207 = vmax.f32 %v4199, %v4203
    %v4210 = vrot.slane %v4164, 1
    %v4211 = vrot.slane %v4165, 1
    %v4216 = vrot.slane %v4178, 6
    %v4217 = vrot.slane %v4179, 6
    %v4220 = vrot.slane %v4178, 7
    %v4221 = vrot.slane %v4179, 7
    %v4226 = vrot.slane %v4192, 4
    %v4227 = vrot.slane %v4193, 4
    %v4230 = vrot.slane %v4192, 5
    %v4231 = vrot.slane %v4193, 5
    %v4236 = vrot.slane %v4206, 2
    %v4237 = vrot.slane %v4207, 2
    %v4240 = vrot.slane %v4206, 3
    %v4241 = vrot.slane %v4207, 3
    %v4244 = vsel %vm1227, %v4164, %v4210
    %v4245 = vsel %vm1227, %v4165, %v4211
    %v4246 = vsel %vm1230, %v4244, %v4216
    %v4247 = vsel %vm1230, %v4245, %v4217
    %v4248 = vsel %vm1233, %v4246, %v4220
    %v4249 = vsel %vm1233, %v4247, %v4221
    %v4250 = vsel %vm1236, %v4248, %v4226
    %v4251 = vsel %vm1236, %v4249, %v4227
    %v4252 = vsel %vm1239, %v4250, %v4230
    %v4253 = vsel %vm1239, %v4251, %v4231
    %v4254 = vsel %vm702, %v4252, %v4236
    %v4255 = vsel %vm702, %v4253, %v4237
    %v4256 = vsel %vm349, %v4254, %v4240
    %v4257 = vsel %vm349, %v4255, %v4241
    %4260 = vrot.lane.b32.xlu0 %v4256, 127
    %v4261 = vpop.permute.xlu0 %4260
    %4262 = vrot.lane.b32.xlu0 %v4257, 127
    %v4263 = vpop.permute.xlu0 %4262
    %v4266 = vmax.f32 %v4256, %v4261
    %v4267 = vmax.f32 %v4257, %v4263
    %vm4268 = vcmask 97280
    %v4270 = vsel %vm4268, %v4266, 0
    %v4273 = vsel %vm1236, %v1383, 0
    %4275 = vmatprep.subr.mxu0 0.0
    %4276 = vmatpush1.msra.mxu0 %v1382
    %4277 = vmatprep.subr.mxu0 0.0
    %4278 = vmatpush1.msra.mxu0 %v4273
    %4279 = vmatprep.subr.mxu0 0.0
    %4280 = vmatpush1.msra.mxu0 0.0
    %4281 = vmatprep.subr.mxu0 0.0
    %4282 = vmatpush1.msra.mxu0 0.0
    %4283 = vmatprep.subr.mxu0 0.0
    %4284 = vmatpush1.msra.mxu0 0.0
    %4285 = vmatprep.subr.mxu0 0.0
    %4286 = vmatpush1.msra.mxu0 0.0
    %4287 = vmatprep.subr.mxu0 0.0
    %4288 = vmatpush1.msra.mxu0 0.0
    %4289 = vmatprep.subr.mxu0 0.0
    %4290 = vmatpush1.msra.mxu0 0.0
    %4291 = vmatprep.subr.mxu0 0.0
    %4292 = vmatpush1.msra.mxu0 0.0
    %4293 = vmatprep.subr.mxu0 0.0
    %4294 = vmatpush1.msra.mxu0 0.0
    %4295 = vmatprep.subr.mxu0 0.0
    %4296 = vmatpush1.msra.mxu0 0.0
    %4297 = vmatprep.subr.mxu0 0.0
    %4298 = vmatpush1.msra.mxu0 0.0
    %4299 = vmatprep.subr.mxu0 0.0
    %4300 = vmatpush1.msra.mxu0 0.0
    %4301 = vmatprep.subr.mxu0 0.0
    %4302 = vmatpush1.msra.mxu0 0.0
    %4303 = vmatprep.subr.mxu0 0.0
    %4304 = vmatpush1.msra.mxu0 0.0
    %4305 = vmatprep.subr.mxu0 0.0
    %4306 = vmatpush1.msra.mxu0 0.0
    %4307 = vmatprep.subr.mxu0 0.0
    %4308 = vmatpush1.msra.mxu0 0.0
    %4309 = vmatprep.subr.mxu0 0.0
    %4310 = vmatpush1.msra.mxu0 0.0
    %4311 = vmatprep.subr.mxu0 0.0
    %4312 = vmatpush1.msra.mxu0 0.0
    %4313 = vmatprep.subr.mxu0 0.0
    %4314 = vmatpush1.msra.mxu0 0.0
    %4315 = vmatprep.subr.mxu0 0.0
    %4316 = vmatpush1.msra.mxu0 0.0
    %4317 = vmatprep.subr.mxu0 0.0
    %4318 = vmatpush1.msra.mxu0 0.0
    %4319 = vmatprep.subr.mxu0 0.0
    %4320 = vmatpush1.msra.mxu0 0.0
    %4321 = vmatprep.subr.mxu0 0.0
    %4322 = vmatpush1.msra.mxu0 0.0
    %4323 = vmatprep.subr.mxu0 0.0
    %4324 = vmatpush1.msra.mxu0 0.0
    %4325 = vmatprep.subr.mxu0 0.0
    %4326 = vmatpush1.msra.mxu0 0.0
    %4327 = vmatprep.subr.mxu0 0.0
    %4328 = vmatpush1.msra.mxu0 0.0
    %4329 = vmatprep.subr.mxu0 0.0
    %4330 = vmatpush1.msra.mxu0 0.0
    %4331 = vmatprep.subr.mxu0 0.0
    %4332 = vmatpush1.msra.mxu0 0.0
    %4333 = vmatprep.subr.mxu0 0.0
    %4334 = vmatpush1.msra.mxu0 0.0
    %4335 = vmatprep.subr.mxu0 0.0
    %4336 = vmatpush1.msra.mxu0 0.0
    %4337 = vmatprep.subr.mxu0 0.0
    %4338 = vmatpush1.msra.mxu0 0.0
    %4339 = vmatprep.mubr.f32.mxu0 0.0
    %4340 = vmatmul.mubr.f32.gmra.mrb[0].mxu0 %v4270
    %v4341 = vpop.f32.mrb[0].mxu0
    %v4342 = vadd.f32 0.0, %v4341
    %v4343 = vpop.f32.mrb[0].mxu0
    %4344 = vdwg.mxu0
    %v4346 = vsel %vm4268, %v4267, 0
    %4348 = vmatprep.subr.mxu0 0.0
    %4349 = vmatpush1.msra.mxu0 %v1382
    %4350 = vmatprep.subr.mxu0 0.0
    %4351 = vmatpush1.msra.mxu0 %v4273
    %4352 = vmatprep.subr.mxu0 0.0
    %4353 = vmatpush1.msra.mxu0 0.0
    %4354 = vmatprep.subr.mxu0 0.0
    %4355 = vmatpush1.msra.mxu0 0.0
    %4356 = vmatprep.subr.mxu0 0.0
    %4357 = vmatpush1.msra.mxu0 0.0
    %4358 = vmatprep.subr.mxu0 0.0
    %4359 = vmatpush1.msra.mxu0 0.0
    %4360 = vmatprep.subr.mxu0 0.0
    %4361 = vmatpush1.msra.mxu0 0.0
    %4362 = vmatprep.subr.mxu0 0.0
    %4363 = vmatpush1.msra.mxu0 0.0
    %4364 = vmatprep.subr.mxu0 0.0
    %4365 = vmatpush1.msra.mxu0 0.0
    %4366 = vmatprep.subr.mxu0 0.0
    %4367 = vmatpush1.msra.mxu0 0.0
    %4368 = vmatprep.subr.mxu0 0.0
    %4369 = vmatpush1.msra.mxu0 0.0
    %4370 = vmatprep.subr.mxu0 0.0
    %4371 = vmatpush1.msra.mxu0 0.0
    %4372 = vmatprep.subr.mxu0 0.0
    %4373 = vmatpush1.msra.mxu0 0.0
    %4374 = vmatprep.subr.mxu0 0.0
    %4375 = vmatpush1.msra.mxu0 0.0
    %4376 = vmatprep.subr.mxu0 0.0
    %4377 = vmatpush1.msra.mxu0 0.0
    %4378 = vmatprep.subr.mxu0 0.0
    %4379 = vmatpush1.msra.mxu0 0.0
    %4380 = vmatprep.subr.mxu0 0.0
    %4381 = vmatpush1.msra.mxu0 0.0
    %4382 = vmatprep.subr.mxu0 0.0
    %4383 = vmatpush1.msra.mxu0 0.0
    %4384 = vmatprep.subr.mxu0 0.0
    %4385 = vmatpush1.msra.mxu0 0.0
    %4386 = vmatprep.subr.mxu0 0.0
    %4387 = vmatpush1.msra.mxu0 0.0
    %4388 = vmatprep.subr.mxu0 0.0
    %4389 = vmatpush1.msra.mxu0 0.0
    %4390 = vmatprep.subr.mxu0 0.0
    %4391 = vmatpush1.msra.mxu0 0.0
    %4392 = vmatprep.subr.mxu0 0.0
    %4393 = vmatpush1.msra.mxu0 0.0
    %4394 = vmatprep.subr.mxu0 0.0
    %4395 = vmatpush1.msra.mxu0 0.0
    %4396 = vmatprep.subr.mxu0 0.0
    %4397 = vmatpush1.msra.mxu0 0.0
    %4398 = vmatprep.subr.mxu0 0.0
    %4399 = vmatpush1.msra.mxu0 0.0
    %4400 = vmatprep.subr.mxu0 0.0
    %4401 = vmatpush1.msra.mxu0 0.0
    %4402 = vmatprep.subr.mxu0 0.0
    %4403 = vmatpush1.msra.mxu0 0.0
    %4404 = vmatprep.subr.mxu0 0.0
    %4405 = vmatpush1.msra.mxu0 0.0
    %4406 = vmatprep.subr.mxu0 0.0
    %4407 = vmatpush1.msra.mxu0 0.0
    %4408 = vmatprep.subr.mxu0 0.0
    %4409 = vmatpush1.msra.mxu0 0.0
    %4410 = vmatprep.subr.mxu0 0.0
    %4411 = vmatpush1.msra.mxu0 0.0
    %4412 = vmatprep.mubr.f32.mxu0 0.0
    %4413 = vmatmul.mubr.f32.gmra.mrb[0].mxu0 %v4346
    %v4414 = vpop.f32.mrb[0].mxu0
    %v4415 = vadd.f32 0.0, %v4414
    %v4416 = vpop.f32.mrb[0].mxu0
    %4417 = vdwg.mxu0
    %v4420 = vrot.slane %v4415, 7
    %vm4421 = vcmask 1041409
    %v4422 = vsel %vm4421, %v4420, %v4342
    %v4424 = vrot.slane %v4342, 1
    %v4425 = vsel %vm4421, %v4415, %v4424
    %4426 = vrot.lane.b32.xlu0 %v4425, 6
    %v4427 = vpop.permute.xlu0 %4426
    %v4429 = vrot.slane %v4342, 2
    %v4430 = vrot.slane %v4415, 1
    %v4431 = vsel %vm4421, %v4430, %v4429
    %4432 = vrot.lane.b32.xlu0 %v4431, 12
    %v4433 = vpop.permute.xlu0 %4432
    %v4435 = vrot.slane %v4342, 3
    %v4436 = vrot.slane %v4415, 2
    %v4437 = vsel %vm4421, %v4436, %v4435
    %4438 = vrot.lane.b32.xlu0 %v4437, 18
    %v4439 = vpop.permute.xlu0 %4438
    %v4441 = vrot.slane %v4342, 4
    %v4442 = vrot.slane %v4415, 3
    %v4443 = vsel %vm4421, %v4442, %v4441
    %4444 = vrot.lane.b32.xlu0 %v4443, 24
    %v4445 = vpop.permute.xlu0 %4444
    %v4447 = vrot.slane %v4342, 5
    %v4448 = vrot.slane %v4415, 4
    %v4449 = vsel %vm4421, %v4448, %v4447
    %4450 = vrot.lane.b32.xlu0 %v4449, 30
    %v4451 = vpop.permute.xlu0 %4450
    %v4453 = vrot.slane %v4342, 6
    %v4454 = vrot.slane %v4415, 5
    %v4455 = vsel %vm4421, %v4454, %v4453
    %4456 = vrot.lane.b32.xlu0 %v4455, 36
    %v4457 = vpop.permute.xlu0 %4456
    %v4459 = vrot.slane %v4342, 7
    %v4460 = vrot.slane %v4415, 6
    %v4461 = vsel %vm4421, %v4460, %v4459
    %4462 = vrot.lane.b32.xlu0 %v4461, 42
    %v4463 = vpop.permute.xlu0 %4462
    %vm4465 = vcmask 48128
    %v4466 = vsel %vm4465, %v4422, %v4427
    %v4467 = vsel %vm4268, %v4466, %v4433
    %vm4468 = vcmask 146432
    %v4469 = vsel %vm4468, %v4467, %v4439
    %vm4470 = vcmask 195584
    %v4471 = vsel %vm4470, %v4469, %v4445
    %vm4472 = vcmask 244736
    %v4473 = vsel %vm4472, %v4471, %v4451
    %vm4474 = vcmask 293888
    %v4475 = vsel %vm4474, %v4473, %v4457
    %vm4476 = vcmask 343040
    %v4477 = vsel %vm4476, %v4475, %v4463
    %v4478 = vld [vmem:[%s5] sm:$0xff]
    %v4479 = vld [vmem:[%s5 + $0x8] sm:$0xff]
    %v4480 = vld [vmem:[%s5 + $0x10] sm:$0xff]
    %v4481 = vld [vmem:[%s5 + $0x18] sm:$0xff]
    %v4482 = vld [vmem:[%s5 + $0x20] sm:$0xff]
    %v4483 = vld [vmem:[%s5 + $0x28] sm:$0xff]
    %v4484 = vld [vmem:[%s6] sm:$0x1]
    %v4486 = vlaneseq
    %v4487 = vshrl.u32 %v4486, 7
    %v4488 = vsub.s32 0, %v4487
    %v4489 = vrot.slane %v4484, %v4488
    %vm4491 = vcmask 392192
    %v4493 = vsel %vm4491, %v4477, 0
    %4495 = vmatprep.subr.mxu0 0.0
    %4496 = vmatpush1.msra.mxu0 %v4478
    %4497 = vmatprep.subr.mxu0 0.0
    %4498 = vmatpush1.msra.mxu0 %v4479
    %4499 = vmatprep.subr.mxu0 0.0
    %4500 = vmatpush1.msra.mxu0 %v4480
    %4501 = vmatprep.subr.mxu0 0.0
    %4502 = vmatpush1.msra.mxu0 %v4481
    %4503 = vmatprep.subr.mxu0 0.0
    %4504 = vmatpush1.msra.mxu0 %v4482
    %4505 = vmatprep.subr.mxu0 0.0
    %4506 = vmatpush1.msra.mxu0 %v4483
    %4507 = vmatprep.subr.mxu0 0.0
    %4508 = vmatpush1.msra.mxu0 0.0
    %4509 = vmatprep.subr.mxu0 0.0
    %4510 = vmatpush1.msra.mxu0 0.0
    %4511 = vmatprep.subr.mxu0 0.0
    %4512 = vmatpush1.msra.mxu0 0.0
    %4513 = vmatprep.subr.mxu0 0.0
    %4514 = vmatpush1.msra.mxu0 0.0
    %4515 = vmatprep.subr.mxu0 0.0
    %4516 = vmatpush1.msra.mxu0 0.0
    %4517 = vmatprep.subr.mxu0 0.0
    %4518 = vmatpush1.msra.mxu0 0.0
    %4519 = vmatprep.subr.mxu0 0.0
    %4520 = vmatpush1.msra.mxu0 0.0
    %4521 = vmatprep.subr.mxu0 0.0
    %4522 = vmatpush1.msra.mxu0 0.0
    %4523 = vmatprep.subr.mxu0 0.0
    %4524 = vmatpush1.msra.mxu0 0.0
    %4525 = vmatprep.subr.mxu0 0.0
    %4526 = vmatpush1.msra.mxu0 0.0
    %4527 = vmatprep.subr.mxu0 0.0
    %4528 = vmatpush1.msra.mxu0 0.0
    %4529 = vmatprep.subr.mxu0 0.0
    %4530 = vmatpush1.msra.mxu0 0.0
    %4531 = vmatprep.subr.mxu0 0.0
    %4532 = vmatpush1.msra.mxu0 0.0
    %4533 = vmatprep.subr.mxu0 0.0
    %4534 = vmatpush1.msra.mxu0 0.0
    %4535 = vmatprep.subr.mxu0 0.0
    %4536 = vmatpush1.msra.mxu0 0.0
    %4537 = vmatprep.subr.mxu0 0.0
    %4538 = vmatpush1.msra.mxu0 0.0
    %4539 = vmatprep.subr.mxu0 0.0
    %4540 = vmatpush1.msra.mxu0 0.0
    %4541 = vmatprep.subr.mxu0 0.0
    %4542 = vmatpush1.msra.mxu0 0.0
    %4543 = vmatprep.subr.mxu0 0.0
    %4544 = vmatpush1.msra.mxu0 0.0
    %4545 = vmatprep.subr.mxu0 0.0
    %4546 = vmatpush1.msra.mxu0 0.0
    %4547 = vmatprep.subr.mxu0 0.0
    %4548 = vmatpush1.msra.mxu0 0.0
    %4549 = vmatprep.subr.mxu0 0.0
    %4550 = vmatpush1.msra.mxu0 0.0
    %4551 = vmatprep.subr.mxu0 0.0
    %4552 = vmatpush1.msra.mxu0 0.0
    %4553 = vmatprep.subr.mxu0 0.0
    %4554 = vmatpush1.msra.mxu0 0.0
    %4555 = vmatprep.subr.mxu0 0.0
    %4556 = vmatpush1.msra.mxu0 0.0
    %4557 = vmatprep.subr.mxu0 0.0
    %4558 = vmatpush1.msra.mxu0 0.0
    %4559 = vmatprep.mubr.f32.mxu0 0.0
    %4560 = vmatmul.mubr.f32.gmra.mrb[0].mxu0 %v4493
    %v4561 = vpop.f32.mrb[0].mxu0
    %v4562 = vadd.f32 %v4489, %v4561
    %v4563 = vpop.f32.mrb[0].mxu0
    %4564 = vdwg.mxu0
    %v4565 = vmax.f32 %v4562, 0.0
    %v4566 = vld [vmem:[%s7] sm:$0xff]
    %v4567 = vld [vmem:[%s7 + $0x8] sm:$0xff]
    %v4568 = vld [vmem:[%s7 + $0x10] sm:$0xff]
    %v4569 = vld [vmem:[%s7 + $0x18] sm:$0xff]
    %v4570 = vld [vmem:[%s8] sm:$0x1]
    %v4572 = vlaneseq
    %v4573 = vshrl.u32 %v4572, 7
    %v4574 = vsub.s32 0, %v4573
    %v4575 = vrot.slane %v4570, %v4574
    %vm4577 = vcmask 261120
    %v4579 = vsel %vm4577, %v4565, 0
    %4581 = vmatprep.subr.mxu0 0.0
    %4582 = vmatpush1.msra.mxu0 %v4566
    %4583 = vmatprep.subr.mxu0 0.0
    %4584 = vmatpush1.msra.mxu0 %v4567
    %4585 = vmatprep.subr.mxu0 0.0
    %4586 = vmatpush1.msra.mxu0 %v4568
    %4587 = vmatprep.subr.mxu0 0.0
    %4588 = vmatpush1.msra.mxu0 %v4569
    %4589 = vmatprep.subr.mxu0 0.0
    %4590 = vmatpush1.msra.mxu0 0.0
    %4591 = vmatprep.subr.mxu0 0.0
    %4592 = vmatpush1.msra.mxu0 0.0
    %4593 = vmatprep.subr.mxu0 0.0
    %4594 = vmatpush1.msra.mxu0 0.0
    %4595 = vmatprep.subr.mxu0 0.0
    %4596 = vmatpush1.msra.mxu0 0.0
    %4597 = vmatprep.subr.mxu0 0.0
    %4598 = vmatpush1.msra.mxu0 0.0
    %4599 = vmatprep.subr.mxu0 0.0
    %4600 = vmatpush1.msra.mxu0 0.0
    %4601 = vmatprep.subr.mxu0 0.0
    %4602 = vmatpush1.msra.mxu0 0.0
    %4603 = vmatprep.subr.mxu0 0.0
    %4604 = vmatpush1.msra.mxu0 0.0
    %4605 = vmatprep.subr.mxu0 0.0
    %4606 = vmatpush1.msra.mxu0 0.0
    %4607 = vmatprep.subr.mxu0 0.0
    %4608 = vmatpush1.msra.mxu0 0.0
    %4609 = vmatprep.subr.mxu0 0.0
    %4610 = vmatpush1.msra.mxu0 0.0
    %4611 = vmatprep.subr.mxu0 0.0
    %4612 = vmatpush1.msra.mxu0 0.0
    %4613 = vmatprep.subr.mxu0 0.0
    %4614 = vmatpush1.msra.mxu0 0.0
    %4615 = vmatprep.subr.mxu0 0.0
    %4616 = vmatpush1.msra.mxu0 0.0
    %4617 = vmatprep.subr.mxu0 0.0
    %4618 = vmatpush1.msra.mxu0 0.0
    %4619 = vmatprep.subr.mxu0 0.0
    %4620 = vmatpush1.msra.mxu0 0.0
    %4621 = vmatprep.subr.mxu0 0.0
    %4622 = vmatpush1.msra.mxu0 0.0
    %4623 = vmatprep.subr.mxu0 0.0
    %4624 = vmatpush1.msra.mxu0 0.0
    %4625 = vmatprep.subr.mxu0 0.0
    %4626 = vmatpush1.msra.mxu0 0.0
    %4627 = vmatprep.subr.mxu0 0.0
    %4628 = vmatpush1.msra.mxu0 0.0
    %4629 = vmatprep.subr.mxu0 0.0
    %4630 = vmatpush1.msra.mxu0 0.0
    %4631 = vmatprep.subr.mxu0 0.0
    %4632 = vmatpush1.msra.mxu0 0.0
    %4633 = vmatprep.subr.mxu0 0.0
    %4634 = vmatpush1.msra.mxu0 0.0
    %4635 = vmatprep.subr.mxu0 0.0
    %4636 = vmatpush1.msra.mxu0 0.0
    %4637 = vmatprep.subr.mxu0 0.0
    %4638 = vmatpush1.msra.mxu0 0.0
    %4639 = vmatprep.subr.mxu0 0.0
    %4640 = vmatpush1.msra.mxu0 0.0
    %4641 = vmatprep.subr.mxu0 0.0
    %4642 = vmatpush1.msra.mxu0 0.0
    %4643 = vmatprep.subr.mxu0 0.0
    %4644 = vmatpush1.msra.mxu0 0.0
    %4645 = vmatprep.mubr.f32.mxu0 0.0
    %4646 = vmatmul.mubr.f32.gmra.mrb[0].mxu0 %v4579
    %v4647 = vpop.f32.mrb[0].mxu0
    %v4648 = vadd.f32 %v4575, %v4647
    %v4649 = vpop.f32.mrb[0].mxu0
    %4650 = vdwg.mxu0
    %v4651 = vmax.f32 %v4648, 0.0
    %v4652 = vld [vmem:[%s9] sm:$0xff]
    %v4653 = vld [vmem:[%s9 + $0x8] sm:$0xff]
    %v4654 = vld [vmem:[%s9 + $0x10] sm:$0xff]
    %v4655 = vld [vmem:[%s9 + $0x18] sm:$0xff]
    %v4656 = vld [vmem:[%s10] sm:$0x1]
    %v4658 = vlaneseq
    %v4659 = vshrl.u32 %v4658, 7
    %v4660 = vsub.s32 0, %v4659
    %v4661 = vrot.slane %v4656, %v4660
    %v4664 = vsel %vm4577, %v4651, 0
    %4666 = vmatprep.subr.mxu0 0.0
    %4667 = vmatpush1.msra.mxu0 %v4652
    %4668 = vmatprep.subr.mxu0 0.0
    %4669 = vmatpush1.msra.mxu0 %v4653
    %4670 = vmatprep.subr.mxu0 0.0
    %4671 = vmatpush1.msra.mxu0 %v4654
    %4672 = vmatprep.subr.mxu0 0.0
    %4673 = vmatpush1.msra.mxu0 %v4655
    %4674 = vmatprep.subr.mxu0 0.0
    %4675 = vmatpush1.msra.mxu0 0.0
    %4676 = vmatprep.subr.mxu0 0.0
    %4677 = vmatpush1.msra.mxu0 0.0
    %4678 = vmatprep.subr.mxu0 0.0
    %4679 = vmatpush1.msra.mxu0 0.0
    %4680 = vmatprep.subr.mxu0 0.0
    %4681 = vmatpush1.msra.mxu0 0.0
    %4682 = vmatprep.subr.mxu0 0.0
    %4683 = vmatpush1.msra.mxu0 0.0
    %4684 = vmatprep.subr.mxu0 0.0
    %4685 = vmatpush1.msra.mxu0 0.0
    %4686 = vmatprep.subr.mxu0 0.0
    %4687 = vmatpush1.msra.mxu0 0.0
    %4688 = vmatprep.subr.mxu0 0.0
    %4689 = vmatpush1.msra.mxu0 0.0
    %4690 = vmatprep.subr.mxu0 0.0
    %4691 = vmatpush1.msra.mxu0 0.0
    %4692 = vmatprep.subr.mxu0 0.0
    %4693 = vmatpush1.msra.mxu0 0.0
    %4694 = vmatprep.subr.mxu0 0.0
    %4695 = vmatpush1.msra.mxu0 0.0
    %4696 = vmatprep.subr.mxu0 0.0
    %4697 = vmatpush1.msra.mxu0 0.0
    %4698 = vmatprep.subr.mxu0 0.0
    %4699 = vmatpush1.msra.mxu0 0.0
    %4700 = vmatprep.subr.mxu0 0.0
    %4701 = vmatpush1.msra.mxu0 0.0
    %4702 = vmatprep.subr.mxu0 0.0
    %4703 = vmatpush1.msra.mxu0 0.0
    %4704 = vmatprep.subr.mxu0 0.0
    %4705 = vmatpush1.msra.mxu0 0.0
    %4706 = vmatprep.subr.mxu0 0.0
    %4707 = vmatpush1.msra.mxu0 0.0
    %4708 = vmatprep.subr.mxu0 0.0
    %4709 = vmatpush1.msra.mxu0 0.0
    %4710 = vmatprep.subr.mxu0 0.0
    %4711 = vmatpush1.msra.mxu0 0.0
    %4712 = vmatprep.subr.mxu0 0.0
    %4713 = vmatpush1.msra.mxu0 0.0
    %4714 = vmatprep.subr.mxu0 0.0
    %4715 = vmatpush1.msra.mxu0 0.0
    %4716 = vmatprep.subr.mxu0 0.0
    %4717 = vmatpush1.msra.mxu0 0.0
    %4718 = vmatprep.subr.mxu0 0.0
    %4719 = vmatpush1.msra.mxu0 0.0
    %4720 = vmatprep.subr.mxu0 0.0
    %4721 = vmatpush1.msra.mxu0 0.0
    %4722 = vmatprep.subr.mxu0 0.0
    %4723 = vmatpush1.msra.mxu0 0.0
    %4724 = vmatprep.subr.mxu0 0.0
    %4725 = vmatpush1.msra.mxu0 0.0
    %4726 = vmatprep.subr.mxu0 0.0
    %4727 = vmatpush1.msra.mxu0 0.0
    %4728 = vmatprep.subr.mxu0 0.0
    %4729 = vmatpush1.msra.mxu0 0.0
    %4730 = vmatprep.mubr.f32.mxu0 0.0
    %4731 = vmatmul.mubr.f32.gmra.mrb[0].mxu0 %v4664
    %v4732 = vpop.f32.mrb[0].mxu0
    %v4733 = vadd.f32 %v4661, %v4732
    %v4734 = vpop.f32.mrb[0].mxu0
    %4735 = vdwg.mxu0
    %vm4736 = vcmask 17408
    %4737 = vst.msk [vmem:[#allocation10] sm:$0x3] %vm4736, %v4733
    // Predicated region
    $region62: #{popphy_cnn_forward.1} parent=1 // pred_check
      _
    $region63: #{popphy_cnn_forward.1} parent=1 // pred_check_branch
      %4739 = sbr.rel (0) target = $region65
    $region64: #{popphy_cnn_forward.1} parent=1 // pred_region
      %s4741 = ssub.s32 32, 32
      %4742 = vsyncadd [#allocation3], %s4741
      %s4744 = sshll.u32 [#allocation10], 4
      %s4745 = int_to_ptr.vmem [resolvable:$true] %s4744
      %4747 = dma.vmem_to_hbm [thread:$0]  %s4745, 32, %s11, [#allocation3]
    $region65: #{popphy_cnn_forward.1} parent=1 // pred_fallthru
      _
    // Predicated region
    $region66: #{popphy_cnn_forward.1} parent=1 // pred_check
      _
    $region67: #{popphy_cnn_forward.1} parent=1 // pred_check_branch
      %4749 = sbr.rel (0) target = $region69
    $region68: #{popphy_cnn_forward.1} parent=1 // pred_region
      %4750 = dma.done [#allocation3], 32
    $region69: #{popphy_cnn_forward.1} parent=1 // pred_fallthru
      _
    %4751 = vsyncpa [#allocation3], 1
    %4752 = vsyncpa [#allocation4], 1
    %4753 = vsyncpa [#allocation6], 1
    %4754 = vsyncpa [#allocation9], 1

</llo_original>
